<compile_context>
chip_gen: v7x
topology: tpu7x:2x2x1
jax: 0.10.0
libtpu: 0.0.40
codegen_flags: <defaults>
</compile_context>

<pallas_src>
import functools

import jax
import jax.numpy as jnp
from jax.experimental import pallas as pl
from jax.experimental.pallas import tpu as pltpu

# ----------------------------- scaled-down BERT config -----------------------------
HIDDEN = 128              # stand-in for BERT_HIDDEN_SIZE = 768
N_HEADS = 4
HEAD_DIM = HIDDEN // N_HEADS
INTERMEDIATE = 512
N_LAYERS = 2
VOCAB = 64
MAX_POS = 64
N_SENTIMENT_CLASSES = 5
SEP_TOKEN_ID = 3          # synthetic tokenizer SEP id

HEAD_PAD = 128            # padded lane width for the fused task-head output
SENT_OFF = 0
PARA_OFF = N_SENTIMENT_CLASSES
SIM_OFF = N_SENTIMENT_CLASSES + 1

# TODO(synk): real BertModel.from_pretrained('bert-base-uncased') weights / tokenizer
# cannot be loaded here; a deterministically-initialized scaled-down BERT is used.


# ----------------------------------- kernels ---------------------------------------
def _ln(x, g, b):
    # LayerNorm over the hidden (lane) axis, all f32 (v5e-safe VPU/EUP math).
    mu = jnp.mean(x, axis=-1, keepdims=True)
    var = jnp.mean((x - mu) * (x - mu), axis=-1, keepdims=True)
    return (x - mu) * jax.lax.rsqrt(var + 1e-12) * g + b


def _encoder_kernel(emb_ref, bias_ref, eg_ref, eb_ref,
                    wqkv_ref, bqkv_ref, wo_ref, bo_ref,
                    ln1g_ref, ln1b_ref,
                    w1_ref, b1_ref, w2_ref, b2_ref,
                    ln2g_ref, ln2b_ref,
                    o_ref, *, batch, seq, n_heads, head_dim):
    """One grid step == one full transformer layer; activation lives in o_ref (VMEM)."""
    hidden = n_heads * head_dim

    # Layer 0: fused embedding LayerNorm seeds the resident activation (no zero residual).
    @pl.when(pl.program_id(0) == 0)
    def _():
        o_ref[...] = _ln(emb_ref[...], eg_ref[...], eb_ref[...])

    x = o_ref[...]                                     # (B*S, H) f32, VMEM resident
    xb = x.astype(jnp.bfloat16)

    # Fused QKV projection: single (B*S, H) x (H, 3H) matmul, lane-dense 384-wide output.
    qkv = jnp.dot(xb, wqkv_ref[0], preferred_element_type=jnp.float32) + bqkv_ref[0]
    q = qkv[:, :hidden].reshape(batch, seq, hidden)
    k = qkv[:, hidden:2 * hidden].reshape(batch, seq, hidden)
    v = qkv[:, 2 * hidden:].reshape(batch, seq, hidden)

    bias = bias_ref[...]                               # (B, 1, S) additive mask, f32
    scale = 1.0 / jnp.sqrt(jnp.float32(head_dim))
    wo = wo_ref[0]                                     # (H, H) bf16

    # Per-head attention fused with the output projection:
    #   attn += softmax(q_h k_h^T / sqrt(d) + bias) v_h @ Wo[h]
    # (avoids the lane concatenate of per-head contexts entirely).
    attn = jnp.zeros_like(x)
    for h in range(n_heads):
        sl = slice(h * head_dim, (h + 1) * head_dim)
        qh = q[:, :, sl].astype(jnp.bfloat16)
        kh = k[:, :, sl].astype(jnp.bfloat16)
        vh = v[:, :, sl].astype(jnp.bfloat16)
        s = jnp.einsum('bqd,bkd->bqk', qh, kh,
                       preferred_element_type=jnp.float32) * scale + bias
        s = s - jnp.max(s, axis=-1, keepdims=True)     # f32 softmax
        p = jnp.exp(s)
        p = p * pl.reciprocal(jnp.sum(p, axis=-1, keepdims=True), approx=False)
        ctx = jnp.einsum('bqk,bkd->bqd', p.astype(jnp.bfloat16), vh,
                         preferred_element_type=jnp.float32)       # (B, S, hd)
        ctx2 = ctx.reshape(batch * seq, head_dim).astype(jnp.bfloat16)
        attn = attn + jnp.dot(ctx2, wo[sl, :], preferred_element_type=jnp.float32)
    attn = attn + bo_ref[0]

    # Residual + LN1 (fused in the same kernel).
    x = _ln(attn + x, ln1g_ref[0], ln1b_ref[0])

    # FFN (gelu) + residual + LN2 (fused).
    h1 = jnp.dot(x.astype(jnp.bfloat16), w1_ref[0],
                 preferred_element_type=jnp.float32) + b1_ref[0]
    h1 = jax.nn.gelu(h1, approximate=True)
    h2 = jnp.dot(h1.astype(jnp.bfloat16), w2_ref[0],
                 preferred_element_type=jnp.float32) + b2_ref[0]

    o_ref[...] = _ln(h2 + x, ln2g_ref[0], ln2b_ref[0])


def _encoder_forward(p, emb, bias):
    """emb: (B*S, H) f32, bias: (B, 1, S) f32 additive attention bias."""
    BS, H = emb.shape
    B, _, S = bias.shape
    kernel = functools.partial(_encoder_kernel, batch=B, seq=S,
                               n_heads=N_HEADS, head_dim=HEAD_DIM)
    return pl.pallas_call(
        kernel,
        out_shape=jax.ShapeDtypeStruct((BS, H), jnp.float32),
        grid=(N_LAYERS,),
        in_specs=[
            pl.BlockSpec((BS, H), lambda l: (0, 0)),                    # embeddings
            pl.BlockSpec((B, 1, S), lambda l: (0, 0, 0)),               # mask bias
            pl.BlockSpec((1, H), lambda l: (0, 0)),                     # emb LN gamma
            pl.BlockSpec((1, H), lambda l: (0, 0)),                     # emb LN beta
            pl.BlockSpec((1, H, 3 * H), lambda l: (l, 0, 0)),           # wqkv
            pl.BlockSpec((1, 1, 3 * H), lambda l: (l, 0, 0)),           # bqkv
            pl.BlockSpec((1, H, H), lambda l: (l, 0, 0)),               # wo
            pl.BlockSpec((1, 1, H), lambda l: (l, 0, 0)),               # bo
            pl.BlockSpec((1, 1, H), lambda l: (l, 0, 0)),               # ln1 gamma
            pl.BlockSpec((1, 1, H), lambda l: (l, 0, 0)),               # ln1 beta
            pl.BlockSpec((1, H, INTERMEDIATE), lambda l: (l, 0, 0)),    # w1
            pl.BlockSpec((1, 1, INTERMEDIATE), lambda l: (l, 0, 0)),    # b1
            pl.BlockSpec((1, INTERMEDIATE, H), lambda l: (l, 0, 0)),    # w2
            pl.BlockSpec((1, 1, H), lambda l: (l, 0, 0)),               # b2
            pl.BlockSpec((1, 1, H), lambda l: (l, 0, 0)),               # ln2 gamma
            pl.BlockSpec((1, 1, H), lambda l: (l, 0, 0)),               # ln2 beta
        ],
        out_specs=pl.BlockSpec((BS, H), lambda l: (0, 0)),
        compiler_params=pltpu.CompilerParams(
            dimension_semantics=("arbitrary",)),      # layer axis is a sequential carry
    )(emb, bias,
      p["emb_ln_g"], p["emb_ln_b"],
      p["wqkv"], p["bqkv"], p["wo"], p["bo"],
      p["ln1_g"], p["ln1_b"],
      p["w1"], p["b1"], p["w2"], p["b2"],
      p["ln2_g"], p["ln2_b"])


def _heads_kernel(cls_ref, pw_ref, pb_ref, hw_ref, hb_ref, pooled_ref, logits_ref):
    # Fused pooler (tanh) + all three task heads; padded lane-dense (128-wide) store.
    pooled = jnp.tanh(
        jnp.dot(cls_ref[...].astype(jnp.bfloat16), pw_ref[...],
                preferred_element_type=jnp.float32) + pb_ref[...])
    pooled_ref[...] = pooled
    logits_ref[...] = jnp.dot(pooled.astype(jnp.bfloat16), hw_ref[...],
                              preferred_element_type=jnp.float32) + hb_ref[...]


def _heads_forward(p, cls):
    B, H = cls.shape
    return pl.pallas_call(
        _heads_kernel,
        out_shape=(jax.ShapeDtypeStruct((B, H), jnp.float32),
                   jax.ShapeDtypeStruct((B, HEAD_PAD), jnp.float32)),
        grid=(1,),
        in_specs=[
            pl.BlockSpec((B, H), lambda i: (0, 0)),
            pl.BlockSpec((H, H), lambda i: (0, 0)),
            pl.BlockSpec((1, H), lambda i: (0, 0)),
            pl.BlockSpec((H, HEAD_PAD), lambda i: (0, 0)),
            pl.BlockSpec((1, HEAD_PAD), lambda i: (0, 0)),
        ],
        out_specs=(pl.BlockSpec((B, H), lambda i: (0, 0)),
                   pl.BlockSpec((B, HEAD_PAD), lambda i: (0, 0))),
    )(cls, p["pool_w"], p["pool_b"], p["heads_w"], p["heads_b"])


# ------------------------------ parameter construction ------------------------------
def init_params(seed=0):
    key = jax.random.PRNGKey(seed)

    def nxt():
        nonlocal key
        key, sub = jax.random.split(key)
        return sub

    def w(shape, scale=0.02):
        return (scale * jax.random.normal(nxt(), shape)).astype(jnp.float32)

    params = {
        "word_emb": w((VOCAB, HIDDEN)),
        "pos_emb": w((MAX_POS, HIDDEN)),
        "type_emb": w((2, HIDDEN)),
        "emb_ln_g": jnp.ones((HIDDEN,), jnp.float32),
        "emb_ln_b": jnp.zeros((HIDDEN,), jnp.float32),
        "layers": [],
        "pool_w": w((HIDDEN, HIDDEN)),
        "pool_b": jnp.zeros((HIDDEN,), jnp.float32),
        "sent_w": w((HIDDEN, N_SENTIMENT_CLASSES)),
        "sent_b": jnp.zeros((N_SENTIMENT_CLASSES,), jnp.float32),
        "para_w": w((HIDDEN, 1)),
        "para_b": jnp.zeros((1,), jnp.float32),
        "sim_w": w((HIDDEN, 1)),
        "sim_b": jnp.zeros((1,), jnp.float32),
    }
    for _ in range(N_LAYERS):
        params["layers"].append({
            "wq": w((HIDDEN, HIDDEN)), "bq": jnp.zeros((HIDDEN,), jnp.float32),
            "wk": w((HIDDEN, HIDDEN)), "bk": jnp.zeros((HIDDEN,), jnp.float32),
            "wv": w((HIDDEN, HIDDEN)), "bv": jnp.zeros((HIDDEN,), jnp.float32),
            "wo": w((HIDDEN, HIDDEN)), "bo": jnp.zeros((HIDDEN,), jnp.float32),
            "ln1_g": jnp.ones((HIDDEN,), jnp.float32),
            "ln1_b": jnp.zeros((HIDDEN,), jnp.float32),
            "w1": w((HIDDEN, INTERMEDIATE)), "b1": jnp.zeros((INTERMEDIATE,), jnp.float32),
            "w2": w((INTERMEDIATE, HIDDEN)), "b2": jnp.zeros((HIDDEN,), jnp.float32),
            "ln2_g": jnp.ones((HIDDEN,), jnp.float32),
            "ln2_b": jnp.zeros((HIDDEN,), jnp.float32),
        })
    return params


def prepare_params(params):
    """Stack per-layer weights, fuse QKV / task heads, cast MXU operands to bf16."""
    layers = params["layers"]
    bf16 = jnp.bfloat16

    def stack(fn, dtype=jnp.float32):
        return jnp.stack([fn(lp) for lp in layers]).astype(dtype)

    p = {
        "word_emb": params["word_emb"],
        "pos_emb": params["pos_emb"],
        "type_emb": params["type_emb"],
        "emb_ln_g": params["emb_ln_g"].reshape(1, HIDDEN),
        "emb_ln_b": params["emb_ln_b"].reshape(1, HIDDEN),
        "wqkv": stack(lambda lp: jnp.concatenate([lp["wq"], lp["wk"], lp["wv"]], axis=1), bf16),
        "bqkv": stack(lambda lp: jnp.concatenate([lp["bq"], lp["bk"], lp["bv"]]).reshape(1, -1)),
        "wo": stack(lambda lp: lp["wo"], bf16),
        "bo": stack(lambda lp: lp["bo"].reshape(1, -1)),
        "ln1_g": stack(lambda lp: lp["ln1_g"].reshape(1, -1)),
        "ln1_b": stack(lambda lp: lp["ln1_b"].reshape(1, -1)),
        "w1": stack(lambda lp: lp["w1"], bf16),
        "b1": stack(lambda lp: lp["b1"].reshape(1, -1)),
        "w2": stack(lambda lp: lp["w2"], bf16),
        "b2": stack(lambda lp: lp["b2"].reshape(1, -1)),
        "ln2_g": stack(lambda lp: lp["ln2_g"].reshape(1, -1)),
        "ln2_b": stack(lambda lp: lp["ln2_b"].reshape(1, -1)),
        "pool_w": params["pool_w"].astype(bf16),
        "pool_b": params["pool_b"].reshape(1, HIDDEN),
    }
    # Fuse the three task heads into one lane-dense padded (H, 128) weight.
    hw = jnp.zeros((HIDDEN, HEAD_PAD), jnp.float32)
    hw = hw.at[:, SENT_OFF:SENT_OFF + N_SENTIMENT_CLASSES].set(params["sent_w"])
    hw = hw.at[:, PARA_OFF:PARA_OFF + 1].set(params["para_w"])
    hw = hw.at[:, SIM_OFF:SIM_OFF + 1].set(params["sim_w"])
    hb = jnp.zeros((1, HEAD_PAD), jnp.float32)
    hb = hb.at[0, SENT_OFF:SENT_OFF + N_SENTIMENT_CLASSES].set(params["sent_b"])
    hb = hb.at[0, PARA_OFF].set(params["para_b"][0])
    hb = hb.at[0, SIM_OFF].set(params["sim_b"][0])
    p["heads_w"] = hw.astype(bf16)
    p["heads_b"] = hb
    return p


# --------------------------------- model forward ------------------------------------
def bert_forward(p, input_ids, attention_mask):
    """Returns (pooler_output, fused task-head logits (B, HEAD_PAD))."""
    B, S0 = input_ids.shape
    S = ((S0 + 7) // 8) * 8            # pad seq to a sublane multiple (masked pad tokens)
    if S != S0:
        input_ids = jnp.pad(input_ids, ((0, 0), (0, S - S0)))
        attention_mask = jnp.pad(attention_mask, ((0, 0), (0, S - S0)))

    # Embedding lookup (plain-JAX glue).
    we = p["word_emb"][input_ids]                         # (B, S, H)
    pe = p["pos_emb"][:S]                                 # (S, H)
    te = p["type_emb"][0]                                 # (H,)  token_type_ids = 0
    emb = (we + pe[None, :, :] + te[None, None, :]).reshape(B * S, HIDDEN)
    bias = ((1.0 - attention_mask.astype(jnp.float32)) * (-10000.0)).reshape(B, 1, S)

    hidden = _encoder_forward(p, emb, bias)               # (B*S, H), one fused kernel
    cls = hidden.reshape(B, S, HIDDEN)[:, 0, :]           # CLS / position-0 token
    pooled, logits = _heads_forward(p, cls)               # fused pooler + heads kernel
    return pooled, logits


def combine_sentences(ids1, m1, ids2, m2):
    B = ids1.shape[0]
    sep = jnp.full((B, 1), SEP_TOKEN_ID, dtype=ids1.dtype)
    sep_mask = jnp.ones((B, 1), dtype=m1.dtype)
    ids = jnp.concatenate([ids1, sep, ids2, sep], axis=1)
    mask = jnp.concatenate([m1, sep_mask, m2, sep_mask], axis=1)
    return ids, mask


@jax.jit
def predict_sentiment(p, input_ids, attention_mask):
    _, logits = bert_forward(p, input_ids, attention_mask)
    # dropout_sentiment: eval-mode identity
    return logits[:, SENT_OFF:SENT_OFF + N_SENTIMENT_CLASSES]


@jax.jit
def predict_paraphrase(p, ids1, m1, ids2, m2):
    ids, mask = combine_sentences(ids1, m1, ids2, m2)
    _, logits = bert_forward(p, ids, mask)
    return logits[:, PARA_OFF:PARA_OFF + 1]


@jax.jit
def predict_similarity(p, ids1, m1, ids2, m2):
    ids, mask = combine_sentences(ids1, m1, ids2, m2)
    _, logits = bert_forward(p, ids, mask)
    return logits[:, SIM_OFF:SIM_OFF + 1]


# -------------------------------------- main ----------------------------------------
if __name__ == "__main__":
    BATCH, SEQ = 4, 8
    raw_params = init_params(seed=0)
    params = prepare_params(raw_params)

    key = jax.random.PRNGKey(0)
    k1, k2 = jax.random.split(key, 2)
    input_ids_1 = jax.random.randint(k1, (BATCH, SEQ), 4, VOCAB, dtype=jnp.int32)
    input_ids_2 = jax.random.randint(k2, (BATCH, SEQ), 4, VOCAB, dtype=jnp.int32)
    # simple attention masks: last two tokens of sentence 2 are padding
    attn_mask_1 = jnp.ones((BATCH, SEQ), dtype=jnp.int32)
    attn_mask_2 = jnp.concatenate(
        [jnp.ones((BATCH, SEQ - 2), jnp.int32), jnp.zeros((BATCH, 2), jnp.int32)], axis=1)

    sentiment_logits = predict_sentiment(params, input_ids_1, attn_mask_1)
    paraphrase_logits = predict_paraphrase(params, input_ids_1, attn_mask_1,
                                           input_ids_2, attn_mask_2)
    similarity_logits = predict_similarity(params, input_ids_1, attn_mask_1,
                                           input_ids_2, attn_mask_2)

    jax.block_until_ready((sentiment_logits, paraphrase_logits, similarity_logits))

    assert sentiment_logits.shape == (BATCH, N_SENTIMENT_CLASSES)
    assert paraphrase_logits.shape == (BATCH, 1)
    assert similarity_logits.shape == (BATCH, 1)
    assert bool(jnp.all(jnp.isfinite(sentiment_logits)))
    assert bool(jnp.all(jnp.isfinite(paraphrase_logits)))
    assert bool(jnp.all(jnp.isfinite(similarity_logits)))
    print("KERNEL_OK")
</pallas_src>

<mosaic_0001>
module attributes {stable_mosaic.version = 11 : i64} {
  func.func @_encoder_kernel(%arg0: i32, %arg1: memref<32x128xf32, #tpu.memory_space<vmem>>, %arg2: memref<4x1x8xf32, #tpu.memory_space<vmem>>, %arg3: memref<1x128xf32, #tpu.memory_space<vmem>>, %arg4: memref<1x128xf32, #tpu.memory_space<vmem>>, %arg5: memref<1x128x384xbf16, #tpu.memory_space<vmem>>, %arg6: memref<1x1x384xf32, #tpu.memory_space<vmem>>, %arg7: memref<1x128x128xbf16, #tpu.memory_space<vmem>>, %arg8: memref<1x1x128xf32, #tpu.memory_space<vmem>>, %arg9: memref<1x1x128xf32, #tpu.memory_space<vmem>>, %arg10: memref<1x1x128xf32, #tpu.memory_space<vmem>>, %arg11: memref<1x128x512xbf16, #tpu.memory_space<vmem>>, %arg12: memref<1x1x512xf32, #tpu.memory_space<vmem>>, %arg13: memref<1x512x128xbf16, #tpu.memory_space<vmem>>, %arg14: memref<1x1x128xf32, #tpu.memory_space<vmem>>, %arg15: memref<1x1x128xf32, #tpu.memory_space<vmem>>, %arg16: memref<1x1x128xf32, #tpu.memory_space<vmem>>, %arg17: memref<32x128xf32, #tpu.memory_space<vmem>>) attributes {dimension_semantics = [#tpu.dimension_semantics<arbitrary>], iteration_bounds = array<i64: 2>, scalar_prefetch = 0 : i64, scratch_operands = 0 : i64, tpu.core_type = #tpu.core_type<tc>, window_params = [{pipeline_mode = #tpu.pipeline_mode<synchronous>, transform_indices = @transform_0, window_bounds = array<i64: 32, 128>}, {pipeline_mode = #tpu.pipeline_mode<synchronous>, transform_indices = @transform_1, window_bounds = array<i64: 4, 1, 8>}, {pipeline_mode = #tpu.pipeline_mode<synchronous>, transform_indices = @transform_2, window_bounds = array<i64: 1, 128>}, {pipeline_mode = #tpu.pipeline_mode<synchronous>, transform_indices = @transform_3, window_bounds = array<i64: 1, 128>}, {transform_indices = @transform_4, window_bounds = array<i64: 1, 128, 384>}, {transform_indices = @transform_5, window_bounds = array<i64: 1, 1, 384>}, {transform_indices = @transform_6, window_bounds = array<i64: 1, 128, 128>}, {transform_indices = @transform_7, window_bounds = array<i64: 1, 1, 128>}, {transform_indices = @transform_8, window_bounds = array<i64: 1, 1, 128>}, {transform_indices = @transform_9, window_bounds = array<i64: 1, 1, 128>}, {transform_indices = @transform_10, window_bounds = array<i64: 1, 128, 512>}, {transform_indices = @transform_11, window_bounds = array<i64: 1, 1, 512>}, {transform_indices = @transform_12, window_bounds = array<i64: 1, 512, 128>}, {transform_indices = @transform_13, window_bounds = array<i64: 1, 1, 128>}, {transform_indices = @transform_14, window_bounds = array<i64: 1, 1, 128>}, {transform_indices = @transform_15, window_bounds = array<i64: 1, 1, 128>}, {pipeline_mode = #tpu.pipeline_mode<synchronous>, transform_indices = @transform_16, window_bounds = array<i64: 32, 128>}]} {
    %c0_i32 = arith.constant 0 : i32
    %0 = arith.cmpi eq, %arg0, %c0_i32 : i32
    %1 = arith.extui %0 : i1 to i32
    %c0_i32_0 = arith.constant 0 : i32
    %2 = arith.cmpi ne, %1, %c0_i32_0 : i32
    scf.if %2 {
      %c0_82 = arith.constant 0 : index
      %c0_83 = arith.constant 0 : index
      %228 = vector.load %arg1[%c0_82, %c0_83] : memref<32x128xf32, #tpu.memory_space<vmem>>, vector<32x128xf32>
      %c0_84 = arith.constant 0 : index
      %c0_85 = arith.constant 0 : index
      %229 = vector.load %arg3[%c0_84, %c0_85] : memref<1x128xf32, #tpu.memory_space<vmem>>, vector<1x128xf32>
      %c0_86 = arith.constant 0 : index
      %c0_87 = arith.constant 0 : index
      %230 = vector.load %arg4[%c0_86, %c0_87] : memref<1x128xf32, #tpu.memory_space<vmem>>, vector<1x128xf32>
      %cst_88 = arith.constant dense<0.000000e+00> : vector<32xf32>
      %231 = vector.multi_reduction <add>, %228, %cst_88 [1] : vector<32x128xf32> to vector<32xf32>
      %232 = vector.shape_cast %231 : vector<32xf32> to vector<32x1xf32>
      %cst_89 = arith.constant 1.280000e+02 : f32
      %233 = vector.broadcast %cst_89 : f32 to vector<32x1xf32>
      %234 = arith.divf %232, %233 : vector<32x1xf32>
      %235 = vector.broadcast %234 : vector<32x1xf32> to vector<32x128xf32>
      %236 = arith.subf %228, %235 : vector<32x128xf32>
      %237 = vector.broadcast %234 : vector<32x1xf32> to vector<32x128xf32>
      %238 = arith.subf %228, %237 : vector<32x128xf32>
      %239 = arith.mulf %236, %238 : vector<32x128xf32>
      %cst_90 = arith.constant dense<0.000000e+00> : vector<32xf32>
      %240 = vector.multi_reduction <add>, %239, %cst_90 [1] : vector<32x128xf32> to vector<32xf32>
      %241 = vector.shape_cast %240 : vector<32xf32> to vector<32x1xf32>
      %cst_91 = arith.constant 1.280000e+02 : f32
      %242 = vector.broadcast %cst_91 : f32 to vector<32x1xf32>
      %243 = arith.divf %241, %242 : vector<32x1xf32>
      %244 = vector.broadcast %234 : vector<32x1xf32> to vector<32x128xf32>
      %245 = arith.subf %228, %244 : vector<32x128xf32>
      %cst_92 = arith.constant 9.99999996E-13 : f32
      %246 = vector.broadcast %cst_92 : f32 to vector<32x1xf32>
      %247 = arith.addf %243, %246 : vector<32x1xf32>
      %248 = math.rsqrt %247 : vector<32x1xf32>
      %249 = vector.broadcast %248 : vector<32x1xf32> to vector<32x128xf32>
      %250 = arith.mulf %245, %249 : vector<32x128xf32>
      %251 = vector.broadcast %229 : vector<1x128xf32> to vector<32x128xf32>
      %252 = arith.mulf %250, %251 : vector<32x128xf32>
      %253 = vector.broadcast %230 : vector<1x128xf32> to vector<32x128xf32>
      %254 = arith.addf %252, %253 : vector<32x128xf32>
      %c0_93 = arith.constant 0 : index
      %c0_94 = arith.constant 0 : index
      %255 = vector.load %arg17[%c0_93, %c0_94] : memref<32x128xf32, #tpu.memory_space<vmem>>, vector<32x128xf32>
      tpu.vector_store %arg17[%c0_93, %c0_94], %254 {strides = array<i32>} : memref<32x128xf32, #tpu.memory_space<vmem>>, vector<32x128xf32>,
    } else {
    }
    %c0 = arith.constant 0 : index
    %c0_1 = arith.constant 0 : index
    %3 = vector.load %arg17[%c0, %c0_1] : memref<32x128xf32, #tpu.memory_space<vmem>>, vector<32x128xf32>
    %4 = arith.truncf %3 : vector<32x128xf32> to vector<32x128xbf16>
    %c0_2 = arith.constant 0 : index
    %c0_3 = arith.constant 0 : index
    %c0_4 = arith.constant 0 : index
    %5 = vector.load %arg5[%c0_2, %c0_3, %c0_4] : memref<1x128x384xbf16, #tpu.memory_space<vmem>>, vector<1x128x384xbf16>
    %6 = vector.shape_cast %5 : vector<1x128x384xbf16> to vector<128x384xbf16>
    %cst = arith.constant dense<0.000000e+00> : vector<32x384xf32>
    %7 = tpu.matmul %4, %6, %cst {dimension_numbers = #tpu.dot_dimension_numbers<[1], [0], [0], [1], [0, 0, 1, 1], [], []>} : vector<32x128xbf16>, vector<128x384xbf16>, vector<32x384xf32> -> vector<32x384xf32>
    %c0_5 = arith.constant 0 : index
    %c0_6 = arith.constant 0 : index
    %c0_7 = arith.constant 0 : index
    %8 = vector.load %arg6[%c0_5, %c0_6, %c0_7] : memref<1x1x384xf32, #tpu.memory_space<vmem>>, vector<1x1x384xf32>
    %9 = vector.shape_cast %8 : vector<1x1x384xf32> to vector<1x384xf32>
    %10 = vector.broadcast %9 : vector<1x384xf32> to vector<32x384xf32>
    %11 = arith.addf %7, %10 : vector<32x384xf32>
    %12 = vector.extract_strided_slice %11 {offsets = [0, 0], sizes = [32, 128], strides = [1, 1]} : vector<32x384xf32> to vector<32x128xf32>
    %13 = vector.shape_cast %12 : vector<32x128xf32> to vector<4x8x128xf32>
    %14 = vector.extract_strided_slice %11 {offsets = [0, 128], sizes = [32, 128], strides = [1, 1]} : vector<32x384xf32> to vector<32x128xf32>
    %15 = vector.shape_cast %14 : vector<32x128xf32> to vector<4x8x128xf32>
    %16 = vector.extract_strided_slice %11 {offsets = [0, 256], sizes = [32, 128], strides = [1, 1]} : vector<32x384xf32> to vector<32x128xf32>
    %17 = vector.shape_cast %16 : vector<32x128xf32> to vector<4x8x128xf32>
    %c0_8 = arith.constant 0 : index
    %c0_9 = arith.constant 0 : index
    %c0_10 = arith.constant 0 : index
    %18 = vector.load %arg2[%c0_8, %c0_9, %c0_10] : memref<4x1x8xf32, #tpu.memory_space<vmem>>, vector<4x1x8xf32>
    %cst_11 = arith.constant 3.200000e+01 : f32
    %19 = math.sqrt %cst_11 : f32
    %cst_12 = arith.constant 1.000000e+00 : f32
    %20 = arith.divf %cst_12, %19 : f32
    %c0_13 = arith.constant 0 : index
    %c0_14 = arith.constant 0 : index
    %c0_15 = arith.constant 0 : index
    %21 = vector.load %arg7[%c0_13, %c0_14, %c0_15] : memref<1x128x128xbf16, #tpu.memory_space<vmem>>, vector<1x128x128xbf16>
    %22 = vector.shape_cast %21 : vector<1x128x128xbf16> to vector<128x128xbf16>
    %cst_16 = arith.constant 0.000000e+00 : f32
    %23 = vector.broadcast %cst_16 : f32 to vector<32x128xf32>
    %24 = vector.extract_strided_slice %13 {offsets = [0, 0, 0], sizes = [4, 8, 32], strides = [1, 1, 1]} : vector<4x8x128xf32> to vector<4x8x32xf32>
    %25 = arith.truncf %24 : vector<4x8x32xf32> to vector<4x8x32xbf16>
    %26 = vector.extract_strided_slice %15 {offsets = [0, 0, 0], sizes = [4, 8, 32], strides = [1, 1, 1]} : vector<4x8x128xf32> to vector<4x8x32xf32>
    %27 = arith.truncf %26 : vector<4x8x32xf32> to vector<4x8x32xbf16>
    %28 = vector.extract_strided_slice %17 {offsets = [0, 0, 0], sizes = [4, 8, 32], strides = [1, 1, 1]} : vector<4x8x128xf32> to vector<4x8x32xf32>
    %29 = arith.truncf %28 : vector<4x8x32xf32> to vector<4x8x32xbf16>
    "tpu.trace_start"() <{level = 10 : i32, message = "bqd,bkd->bqk"}> : () -> ()
    %cst_17 = arith.constant dense<0.000000e+00> : vector<4x8x8xf32>
    %30 = tpu.matmul %25, %27, %cst_17 {dimension_numbers = #tpu.dot_dimension_numbers<[2], [2], [1], [1], [0, 0, 0, 1, 1, 1], [0], [0]>} : vector<4x8x32xbf16>, vector<4x8x32xbf16>, vector<4x8x8xf32> -> vector<4x8x8xf32>
    "tpu.trace_stop"() : () -> ()
    %31 = vector.broadcast %20 : f32 to vector<4x8x8xf32>
    %32 = arith.mulf %30, %31 : vector<4x8x8xf32>
    %33 = vector.broadcast %18 : vector<4x1x8xf32> to vector<4x8x8xf32>
    %34 = arith.addf %32, %33 : vector<4x8x8xf32>
    %cst_18 = arith.constant dense<0xFF800000> : vector<4x8xf32>
    %35 = vector.multi_reduction <maximumf>, %34, %cst_18 [2] : vector<4x8x8xf32> to vector<4x8xf32>
    %36 = vector.shape_cast %35 : vector<4x8xf32> to vector<4x8x1xf32>
    %37 = vector.broadcast %36 : vector<4x8x1xf32> to vector<4x8x8xf32>
    %38 = arith.subf %34, %37 : vector<4x8x8xf32>
    %39 = math.exp %38 : vector<4x8x8xf32>
    %cst_19 = arith.constant dense<0.000000e+00> : vector<4x8xf32>
    %40 = vector.multi_reduction <add>, %39, %cst_19 [2] : vector<4x8x8xf32> to vector<4x8xf32>
    %41 = vector.shape_cast %40 : vector<4x8xf32> to vector<4x8x1xf32>
    %42 = tpu.reciprocal %41 : vector<4x8x1xf32> -> vector<4x8x1xf32>
    %43 = vector.broadcast %42 : vector<4x8x1xf32> to vector<4x8x8xf32>
    %44 = arith.mulf %39, %43 : vector<4x8x8xf32>
    %45 = arith.truncf %44 : vector<4x8x8xf32> to vector<4x8x8xbf16>
    "tpu.trace_start"() <{level = 10 : i32, message = "bqk,bkd->bqd"}> : () -> ()
    %cst_20 = arith.constant dense<0.000000e+00> : vector<4x8x32xf32>
    %46 = tpu.matmul %45, %29, %cst_20 {dimension_numbers = #tpu.dot_dimension_numbers<[2], [1], [1], [2], [0, 0, 0, 1, 1, 2], [0], [0]>} : vector<4x8x8xbf16>, vector<4x8x32xbf16>, vector<4x8x32xf32> -> vector<4x8x32xf32>
    "tpu.trace_stop"() : () -> ()
    %47 = vector.shape_cast %46 : vector<4x8x32xf32> to vector<32x32xf32>
    %48 = arith.truncf %47 : vector<32x32xf32> to vector<32x32xbf16>
    %49 = vector.extract_strided_slice %22 {offsets = [0, 0], sizes = [32, 128], strides = [1, 1]} : vector<128x128xbf16> to vector<32x128xbf16>
    %cst_21 = arith.constant dense<0.000000e+00> : vector<32x128xf32>
    %50 = tpu.matmul %48, %49, %cst_21 {dimension_numbers = #tpu.dot_dimension_numbers<[1], [0], [0], [1], [0, 0, 1, 1], [], []>} : vector<32x32xbf16>, vector<32x128xbf16>, vector<32x128xf32> -> vector<32x128xf32>
    %51 = arith.addf %23, %50 : vector<32x128xf32>
    %52 = vector.extract_strided_slice %13 {offsets = [0, 0, 32], sizes = [4, 8, 32], strides = [1, 1, 1]} : vector<4x8x128xf32> to vector<4x8x32xf32>
    %53 = arith.truncf %52 : vector<4x8x32xf32> to vector<4x8x32xbf16>
    %54 = vector.extract_strided_slice %15 {offsets = [0, 0, 32], sizes = [4, 8, 32], strides = [1, 1, 1]} : vector<4x8x128xf32> to vector<4x8x32xf32>
    %55 = arith.truncf %54 : vector<4x8x32xf32> to vector<4x8x32xbf16>
    %56 = vector.extract_strided_slice %17 {offsets = [0, 0, 32], sizes = [4, 8, 32], strides = [1, 1, 1]} : vector<4x8x128xf32> to vector<4x8x32xf32>
    %57 = arith.truncf %56 : vector<4x8x32xf32> to vector<4x8x32xbf16>
    "tpu.trace_start"() <{level = 10 : i32, message = "bqd,bkd->bqk"}> : () -> ()
    %cst_22 = arith.constant dense<0.000000e+00> : vector<4x8x8xf32>
    %58 = tpu.matmul %53, %55, %cst_22 {dimension_numbers = #tpu.dot_dimension_numbers<[2], [2], [1], [1], [0, 0, 0, 1, 1, 1], [0], [0]>} : vector<4x8x32xbf16>, vector<4x8x32xbf16>, vector<4x8x8xf32> -> vector<4x8x8xf32>
    "tpu.trace_stop"() : () -> ()
    %59 = vector.broadcast %20 : f32 to vector<4x8x8xf32>
    %60 = arith.mulf %58, %59 : vector<4x8x8xf32>
    %61 = vector.broadcast %18 : vector<4x1x8xf32> to vector<4x8x8xf32>
    %62 = arith.addf %60, %61 : vector<4x8x8xf32>
    %cst_23 = arith.constant dense<0xFF800000> : vector<4x8xf32>
    %63 = vector.multi_reduction <maximumf>, %62, %cst_23 [2] : vector<4x8x8xf32> to vector<4x8xf32>
    %64 = vector.shape_cast %63 : vector<4x8xf32> to vector<4x8x1xf32>
    %65 = vector.broadcast %64 : vector<4x8x1xf32> to vector<4x8x8xf32>
    %66 = arith.subf %62, %65 : vector<4x8x8xf32>
    %67 = math.exp %66 : vector<4x8x8xf32>
    %cst_24 = arith.constant dense<0.000000e+00> : vector<4x8xf32>
    %68 = vector.multi_reduction <add>, %67, %cst_24 [2] : vector<4x8x8xf32> to vector<4x8xf32>
    %69 = vector.shape_cast %68 : vector<4x8xf32> to vector<4x8x1xf32>
    %70 = tpu.reciprocal %69 : vector<4x8x1xf32> -> vector<4x8x1xf32>
    %71 = vector.broadcast %70 : vector<4x8x1xf32> to vector<4x8x8xf32>
    %72 = arith.mulf %67, %71 : vector<4x8x8xf32>
    %73 = arith.truncf %72 : vector<4x8x8xf32> to vector<4x8x8xbf16>
    "tpu.trace_start"() <{level = 10 : i32, message = "bqk,bkd->bqd"}> : () -> ()
    %cst_25 = arith.constant dense<0.000000e+00> : vector<4x8x32xf32>
    %74 = tpu.matmul %73, %57, %cst_25 {dimension_numbers = #tpu.dot_dimension_numbers<[2], [1], [1], [2], [0, 0, 0, 1, 1, 2], [0], [0]>} : vector<4x8x8xbf16>, vector<4x8x32xbf16>, vector<4x8x32xf32> -> vector<4x8x32xf32>
    "tpu.trace_stop"() : () -> ()
    %75 = vector.shape_cast %74 : vector<4x8x32xf32> to vector<32x32xf32>
    %76 = arith.truncf %75 : vector<32x32xf32> to vector<32x32xbf16>
    %77 = vector.extract_strided_slice %22 {offsets = [32, 0], sizes = [32, 128], strides = [1, 1]} : vector<128x128xbf16> to vector<32x128xbf16>
    %cst_26 = arith.constant dense<0.000000e+00> : vector<32x128xf32>
    %78 = tpu.matmul %76, %77, %cst_26 {dimension_numbers = #tpu.dot_dimension_numbers<[1], [0], [0], [1], [0, 0, 1, 1], [], []>} : vector<32x32xbf16>, vector<32x128xbf16>, vector<32x128xf32> -> vector<32x128xf32>
    %79 = arith.addf %51, %78 : vector<32x128xf32>
    %80 = vector.extract_strided_slice %13 {offsets = [0, 0, 64], sizes = [4, 8, 32], strides = [1, 1, 1]} : vector<4x8x128xf32> to vector<4x8x32xf32>
    %81 = arith.truncf %80 : vector<4x8x32xf32> to vector<4x8x32xbf16>
    %82 = vector.extract_strided_slice %15 {offsets = [0, 0, 64], sizes = [4, 8, 32], strides = [1, 1, 1]} : vector<4x8x128xf32> to vector<4x8x32xf32>
    %83 = arith.truncf %82 : vector<4x8x32xf32> to vector<4x8x32xbf16>
    %84 = vector.extract_strided_slice %17 {offsets = [0, 0, 64], sizes = [4, 8, 32], strides = [1, 1, 1]} : vector<4x8x128xf32> to vector<4x8x32xf32>
    %85 = arith.truncf %84 : vector<4x8x32xf32> to vector<4x8x32xbf16>
    "tpu.trace_start"() <{level = 10 : i32, message = "bqd,bkd->bqk"}> : () -> ()
    %cst_27 = arith.constant dense<0.000000e+00> : vector<4x8x8xf32>
    %86 = tpu.matmul %81, %83, %cst_27 {dimension_numbers = #tpu.dot_dimension_numbers<[2], [2], [1], [1], [0, 0, 0, 1, 1, 1], [0], [0]>} : vector<4x8x32xbf16>, vector<4x8x32xbf16>, vector<4x8x8xf32> -> vector<4x8x8xf32>
    "tpu.trace_stop"() : () -> ()
    %87 = vector.broadcast %20 : f32 to vector<4x8x8xf32>
    %88 = arith.mulf %86, %87 : vector<4x8x8xf32>
    %89 = vector.broadcast %18 : vector<4x1x8xf32> to vector<4x8x8xf32>
    %90 = arith.addf %88, %89 : vector<4x8x8xf32>
    %cst_28 = arith.constant dense<0xFF800000> : vector<4x8xf32>
    %91 = vector.multi_reduction <maximumf>, %90, %cst_28 [2] : vector<4x8x8xf32> to vector<4x8xf32>
    %92 = vector.shape_cast %91 : vector<4x8xf32> to vector<4x8x1xf32>
    %93 = vector.broadcast %92 : vector<4x8x1xf32> to vector<4x8x8xf32>
    %94 = arith.subf %90, %93 : vector<4x8x8xf32>
    %95 = math.exp %94 : vector<4x8x8xf32>
    %cst_29 = arith.constant dense<0.000000e+00> : vector<4x8xf32>
    %96 = vector.multi_reduction <add>, %95, %cst_29 [2] : vector<4x8x8xf32> to vector<4x8xf32>
    %97 = vector.shape_cast %96 : vector<4x8xf32> to vector<4x8x1xf32>
    %98 = tpu.reciprocal %97 : vector<4x8x1xf32> -> vector<4x8x1xf32>
    %99 = vector.broadcast %98 : vector<4x8x1xf32> to vector<4x8x8xf32>
    %100 = arith.mulf %95, %99 : vector<4x8x8xf32>
    %101 = arith.truncf %100 : vector<4x8x8xf32> to vector<4x8x8xbf16>
    "tpu.trace_start"() <{level = 10 : i32, message = "bqk,bkd->bqd"}> : () -> ()
    %cst_30 = arith.constant dense<0.000000e+00> : vector<4x8x32xf32>
    %102 = tpu.matmul %101, %85, %cst_30 {dimension_numbers = #tpu.dot_dimension_numbers<[2], [1], [1], [2], [0, 0, 0, 1, 1, 2], [0], [0]>} : vector<4x8x8xbf16>, vector<4x8x32xbf16>, vector<4x8x32xf32> -> vector<4x8x32xf32>
    "tpu.trace_stop"() : () -> ()
    %103 = vector.shape_cast %102 : vector<4x8x32xf32> to vector<32x32xf32>
    %104 = arith.truncf %103 : vector<32x32xf32> to vector<32x32xbf16>
    %105 = vector.extract_strided_slice %22 {offsets = [64, 0], sizes = [32, 128], strides = [1, 1]} : vector<128x128xbf16> to vector<32x128xbf16>
    %cst_31 = arith.constant dense<0.000000e+00> : vector<32x128xf32>
    %106 = tpu.matmul %104, %105, %cst_31 {dimension_numbers = #tpu.dot_dimension_numbers<[1], [0], [0], [1], [0, 0, 1, 1], [], []>} : vector<32x32xbf16>, vector<32x128xbf16>, vector<32x128xf32> -> vector<32x128xf32>
    %107 = arith.addf %79, %106 : vector<32x128xf32>
    %108 = vector.extract_strided_slice %13 {offsets = [0, 0, 96], sizes = [4, 8, 32], strides = [1, 1, 1]} : vector<4x8x128xf32> to vector<4x8x32xf32>
    %109 = arith.truncf %108 : vector<4x8x32xf32> to vector<4x8x32xbf16>
    %110 = vector.extract_strided_slice %15 {offsets = [0, 0, 96], sizes = [4, 8, 32], strides = [1, 1, 1]} : vector<4x8x128xf32> to vector<4x8x32xf32>
    %111 = arith.truncf %110 : vector<4x8x32xf32> to vector<4x8x32xbf16>
    %112 = vector.extract_strided_slice %17 {offsets = [0, 0, 96], sizes = [4, 8, 32], strides = [1, 1, 1]} : vector<4x8x128xf32> to vector<4x8x32xf32>
    %113 = arith.truncf %112 : vector<4x8x32xf32> to vector<4x8x32xbf16>
    "tpu.trace_start"() <{level = 10 : i32, message = "bqd,bkd->bqk"}> : () -> ()
    %cst_32 = arith.constant dense<0.000000e+00> : vector<4x8x8xf32>
    %114 = tpu.matmul %109, %111, %cst_32 {dimension_numbers = #tpu.dot_dimension_numbers<[2], [2], [1], [1], [0, 0, 0, 1, 1, 1], [0], [0]>} : vector<4x8x32xbf16>, vector<4x8x32xbf16>, vector<4x8x8xf32> -> vector<4x8x8xf32>
    "tpu.trace_stop"() : () -> ()
    %115 = vector.broadcast %20 : f32 to vector<4x8x8xf32>
    %116 = arith.mulf %114, %115 : vector<4x8x8xf32>
    %117 = vector.broadcast %18 : vector<4x1x8xf32> to vector<4x8x8xf32>
    %118 = arith.addf %116, %117 : vector<4x8x8xf32>
    %cst_33 = arith.constant dense<0xFF800000> : vector<4x8xf32>
    %119 = vector.multi_reduction <maximumf>, %118, %cst_33 [2] : vector<4x8x8xf32> to vector<4x8xf32>
    %120 = vector.shape_cast %119 : vector<4x8xf32> to vector<4x8x1xf32>
    %121 = vector.broadcast %120 : vector<4x8x1xf32> to vector<4x8x8xf32>
    %122 = arith.subf %118, %121 : vector<4x8x8xf32>
    %123 = math.exp %122 : vector<4x8x8xf32>
    %cst_34 = arith.constant dense<0.000000e+00> : vector<4x8xf32>
    %124 = vector.multi_reduction <add>, %123, %cst_34 [2] : vector<4x8x8xf32> to vector<4x8xf32>
    %125 = vector.shape_cast %124 : vector<4x8xf32> to vector<4x8x1xf32>
    %126 = tpu.reciprocal %125 : vector<4x8x1xf32> -> vector<4x8x1xf32>
    %127 = vector.broadcast %126 : vector<4x8x1xf32> to vector<4x8x8xf32>
    %128 = arith.mulf %123, %127 : vector<4x8x8xf32>
    %129 = arith.truncf %128 : vector<4x8x8xf32> to vector<4x8x8xbf16>
    "tpu.trace_start"() <{level = 10 : i32, message = "bqk,bkd->bqd"}> : () -> ()
    %cst_35 = arith.constant dense<0.000000e+00> : vector<4x8x32xf32>
    %130 = tpu.matmul %129, %113, %cst_35 {dimension_numbers = #tpu.dot_dimension_numbers<[2], [1], [1], [2], [0, 0, 0, 1, 1, 2], [0], [0]>} : vector<4x8x8xbf16>, vector<4x8x32xbf16>, vector<4x8x32xf32> -> vector<4x8x32xf32>
    "tpu.trace_stop"() : () -> ()
    %131 = vector.shape_cast %130 : vector<4x8x32xf32> to vector<32x32xf32>
    %132 = arith.truncf %131 : vector<32x32xf32> to vector<32x32xbf16>
    %133 = vector.extract_strided_slice %22 {offsets = [96, 0], sizes = [32, 128], strides = [1, 1]} : vector<128x128xbf16> to vector<32x128xbf16>
    %cst_36 = arith.constant dense<0.000000e+00> : vector<32x128xf32>
    %134 = tpu.matmul %132, %133, %cst_36 {dimension_numbers = #tpu.dot_dimension_numbers<[1], [0], [0], [1], [0, 0, 1, 1], [], []>} : vector<32x32xbf16>, vector<32x128xbf16>, vector<32x128xf32> -> vector<32x128xf32>
    %135 = arith.addf %107, %134 : vector<32x128xf32>
    %c0_37 = arith.constant 0 : index
    %c0_38 = arith.constant 0 : index
    %c0_39 = arith.constant 0 : index
    %136 = vector.load %arg8[%c0_37, %c0_38, %c0_39] : memref<1x1x128xf32, #tpu.memory_space<vmem>>, vector<1x1x128xf32>
    %137 = vector.shape_cast %136 : vector<1x1x128xf32> to vector<1x128xf32>
    %138 = vector.broadcast %137 : vector<1x128xf32> to vector<32x128xf32>
    %139 = arith.addf %135, %138 : vector<32x128xf32>
    %140 = arith.addf %139, %3 : vector<32x128xf32>
    %c0_40 = arith.constant 0 : index
    %c0_41 = arith.constant 0 : index
    %c0_42 = arith.constant 0 : index
    %141 = vector.load %arg9[%c0_40, %c0_41, %c0_42] : memref<1x1x128xf32, #tpu.memory_space<vmem>>, vector<1x1x128xf32>
    %142 = vector.shape_cast %141 : vector<1x1x128xf32> to vector<1x128xf32>
    %c0_43 = arith.constant 0 : index
    %c0_44 = arith.constant 0 : index
    %c0_45 = arith.constant 0 : index
    %143 = vector.load %arg10[%c0_43, %c0_44, %c0_45] : memref<1x1x128xf32, #tpu.memory_space<vmem>>, vector<1x1x128xf32>
    %144 = vector.shape_cast %143 : vector<1x1x128xf32> to vector<1x128xf32>
    %cst_46 = arith.constant dense<0.000000e+00> : vector<32xf32>
    %145 = vector.multi_reduction <add>, %140, %cst_46 [1] : vector<32x128xf32> to vector<32xf32>
    %146 = vector.shape_cast %145 : vector<32xf32> to vector<32x1xf32>
    %cst_47 = arith.constant 1.280000e+02 : f32
    %147 = vector.broadcast %cst_47 : f32 to vector<32x1xf32>
    %148 = arith.divf %146, %147 : vector<32x1xf32>
    %149 = vector.broadcast %148 : vector<32x1xf32> to vector<32x128xf32>
    %150 = arith.subf %140, %149 : vector<32x128xf32>
    %151 = vector.broadcast %148 : vector<32x1xf32> to vector<32x128xf32>
    %152 = arith.subf %140, %151 : vector<32x128xf32>
    %153 = arith.mulf %150, %152 : vector<32x128xf32>
    %cst_48 = arith.constant dense<0.000000e+00> : vector<32xf32>
    %154 = vector.multi_reduction <add>, %153, %cst_48 [1] : vector<32x128xf32> to vector<32xf32>
    %155 = vector.shape_cast %154 : vector<32xf32> to vector<32x1xf32>
    %cst_49 = arith.constant 1.280000e+02 : f32
    %156 = vector.broadcast %cst_49 : f32 to vector<32x1xf32>
    %157 = arith.divf %155, %156 : vector<32x1xf32>
    %158 = vector.broadcast %148 : vector<32x1xf32> to vector<32x128xf32>
    %159 = arith.subf %140, %158 : vector<32x128xf32>
    %cst_50 = arith.constant 9.99999996E-13 : f32
    %160 = vector.broadcast %cst_50 : f32 to vector<32x1xf32>
    %161 = arith.addf %157, %160 : vector<32x1xf32>
    %162 = math.rsqrt %161 : vector<32x1xf32>
    %163 = vector.broadcast %162 : vector<32x1xf32> to vector<32x128xf32>
    %164 = arith.mulf %159, %163 : vector<32x128xf32>
    %165 = vector.broadcast %142 : vector<1x128xf32> to vector<32x128xf32>
    %166 = arith.mulf %164, %165 : vector<32x128xf32>
    %167 = vector.broadcast %144 : vector<1x128xf32> to vector<32x128xf32>
    %168 = arith.addf %166, %167 : vector<32x128xf32>
    %169 = arith.truncf %168 : vector<32x128xf32> to vector<32x128xbf16>
    %c0_51 = arith.constant 0 : index
    %c0_52 = arith.constant 0 : index
    %c0_53 = arith.constant 0 : index
    %170 = vector.load %arg11[%c0_51, %c0_52, %c0_53] : memref<1x128x512xbf16, #tpu.memory_space<vmem>>, vector<1x128x512xbf16>
    %171 = vector.shape_cast %170 : vector<1x128x512xbf16> to vector<128x512xbf16>
    %cst_54 = arith.constant dense<0.000000e+00> : vector<32x512xf32>
    %172 = tpu.matmul %169, %171, %cst_54 {dimension_numbers = #tpu.dot_dimension_numbers<[1], [0], [0], [1], [0, 0, 1, 1], [], []>} : vector<32x128xbf16>, vector<128x512xbf16>, vector<32x512xf32> -> vector<32x512xf32>
    %c0_55 = arith.constant 0 : index
    %c0_56 = arith.constant 0 : index
    %c0_57 = arith.constant 0 : index
    %173 = vector.load %arg12[%c0_55, %c0_56, %c0_57] : memref<1x1x512xf32, #tpu.memory_space<vmem>>, vector<1x1x512xf32>
    %174 = vector.shape_cast %173 : vector<1x1x512xf32> to vector<1x512xf32>
    %175 = vector.broadcast %174 : vector<1x512xf32> to vector<32x512xf32>
    %176 = arith.addf %172, %175 : vector<32x512xf32>
    %177 = arith.mulf %176, %176 : vector<32x512xf32>
    %178 = arith.mulf %176, %177 : vector<32x512xf32>
    %cst_58 = arith.constant 4.471500e-02 : f32
    %179 = vector.broadcast %cst_58 : f32 to vector<32x512xf32>
    %180 = arith.mulf %179, %178 : vector<32x512xf32>
    %181 = arith.addf %176, %180 : vector<32x512xf32>
    %cst_59 = arith.constant 0.797884583 : f32
    %182 = vector.broadcast %cst_59 : f32 to vector<32x512xf32>
    %183 = arith.mulf %182, %181 : vector<32x512xf32>
    %184 = math.tanh %183 : vector<32x512xf32>
    %cst_60 = arith.constant 1.000000e+00 : f32
    %185 = vector.broadcast %cst_60 : f32 to vector<32x512xf32>
    %186 = arith.addf %185, %184 : vector<32x512xf32>
    %cst_61 = arith.constant 5.000000e-01 : f32
    %187 = vector.broadcast %cst_61 : f32 to vector<32x512xf32>
    %188 = arith.mulf %187, %186 : vector<32x512xf32>
    %189 = arith.mulf %176, %188 : vector<32x512xf32>
    %190 = arith.truncf %189 : vector<32x512xf32> to vector<32x512xbf16>
    %c0_62 = arith.constant 0 : index
    %c0_63 = arith.constant 0 : index
    %c0_64 = arith.constant 0 : index
    %191 = vector.load %arg13[%c0_62, %c0_63, %c0_64] : memref<1x512x128xbf16, #tpu.memory_space<vmem>>, vector<1x512x128xbf16>
    %192 = vector.shape_cast %191 : vector<1x512x128xbf16> to vector<512x128xbf16>
    %cst_65 = arith.constant dense<0.000000e+00> : vector<32x128xf32>
    %193 = tpu.matmul %190, %192, %cst_65 {dimension_numbers = #tpu.dot_dimension_numbers<[1], [0], [0], [1], [0, 0, 1, 1], [], []>} : vector<32x512xbf16>, vector<512x128xbf16>, vector<32x128xf32> -> vector<32x128xf32>
    %c0_66 = arith.constant 0 : index
    %c0_67 = arith.constant 0 : index
    %c0_68 = arith.constant 0 : index
    %194 = vector.load %arg14[%c0_66, %c0_67, %c0_68] : memref<1x1x128xf32, #tpu.memory_space<vmem>>, vector<1x1x128xf32>
    %195 = vector.shape_cast %194 : vector<1x1x128xf32> to vector<1x128xf32>
    %196 = vector.broadcast %195 : vector<1x128xf32> to vector<32x128xf32>
    %197 = arith.addf %193, %196 : vector<32x128xf32>
    %198 = arith.addf %197, %168 : vector<32x128xf32>
    %c0_69 = arith.constant 0 : index
    %c0_70 = arith.constant 0 : index
    %c0_71 = arith.constant 0 : index
    %199 = vector.load %arg15[%c0_69, %c0_70, %c0_71] : memref<1x1x128xf32, #tpu.memory_space<vmem>>, vector<1x1x128xf32>
    %200 = vector.shape_cast %199 : vector<1x1x128xf32> to vector<1x128xf32>
    %c0_72 = arith.constant 0 : index
    %c0_73 = arith.constant 0 : index
    %c0_74 = arith.constant 0 : index
    %201 = vector.load %arg16[%c0_72, %c0_73, %c0_74] : memref<1x1x128xf32, #tpu.memory_space<vmem>>, vector<1x1x128xf32>
    %202 = vector.shape_cast %201 : vector<1x1x128xf32> to vector<1x128xf32>
    %cst_75 = arith.constant dense<0.000000e+00> : vector<32xf32>
    %203 = vector.multi_reduction <add>, %198, %cst_75 [1] : vector<32x128xf32> to vector<32xf32>
    %204 = vector.shape_cast %203 : vector<32xf32> to vector<32x1xf32>
    %cst_76 = arith.constant 1.280000e+02 : f32
    %205 = vector.broadcast %cst_76 : f32 to vector<32x1xf32>
    %206 = arith.divf %204, %205 : vector<32x1xf32>
    %207 = vector.broadcast %206 : vector<32x1xf32> to vector<32x128xf32>
    %208 = arith.subf %198, %207 : vector<32x128xf32>
    %209 = vector.broadcast %206 : vector<32x1xf32> to vector<32x128xf32>
    %210 = arith.subf %198, %209 : vector<32x128xf32>
    %211 = arith.mulf %208, %210 : vector<32x128xf32>
    %cst_77 = arith.constant dense<0.000000e+00> : vector<32xf32>
    %212 = vector.multi_reduction <add>, %211, %cst_77 [1] : vector<32x128xf32> to vector<32xf32>
    %213 = vector.shape_cast %212 : vector<32xf32> to vector<32x1xf32>
    %cst_78 = arith.constant 1.280000e+02 : f32
    %214 = vector.broadcast %cst_78 : f32 to vector<32x1xf32>
    %215 = arith.divf %213, %214 : vector<32x1xf32>
    %216 = vector.broadcast %206 : vector<32x1xf32> to vector<32x128xf32>
    %217 = arith.subf %198, %216 : vector<32x128xf32>
    %cst_79 = arith.constant 9.99999996E-13 : f32
    %218 = vector.broadcast %cst_79 : f32 to vector<32x1xf32>
    %219 = arith.addf %215, %218 : vector<32x1xf32>
    %220 = math.rsqrt %219 : vector<32x1xf32>
    %221 = vector.broadcast %220 : vector<32x1xf32> to vector<32x128xf32>
    %222 = arith.mulf %217, %221 : vector<32x128xf32>
    %223 = vector.broadcast %200 : vector<1x128xf32> to vector<32x128xf32>
    %224 = arith.mulf %222, %223 : vector<32x128xf32>
    %225 = vector.broadcast %202 : vector<1x128xf32> to vector<32x128xf32>
    %226 = arith.addf %224, %225 : vector<32x128xf32>
    %c0_80 = arith.constant 0 : index
    %c0_81 = arith.constant 0 : index
    %227 = vector.load %arg17[%c0_80, %c0_81] : memref<32x128xf32, #tpu.memory_space<vmem>>, vector<32x128xf32>
    tpu.vector_store %arg17[%c0_80, %c0_81], %226 {strides = array<i32>} : memref<32x128xf32, #tpu.memory_space<vmem>>, vector<32x128xf32>,
    return
  }
  func.func @transform_0(%arg0: i32) -> (i32, i32) {
    %c0_i32 = arith.constant 0 : i32
    %c0_i32_0 = arith.constant 0 : i32
    %c0_i32_1 = arith.constant 0 : i32
    return %c0_i32, %c0_i32_0 : i32, i32
  }
  func.func @transform_1(%arg0: i32) -> (i32, i32, i32) {
    %c0_i32 = arith.constant 0 : i32
    %c0_i32_0 = arith.constant 0 : i32
    %c0_i32_1 = arith.constant 0 : i32
    %c0_i32_2 = arith.constant 0 : i32
    return %c0_i32, %c0_i32_0, %c0_i32_1 : i32, i32, i32
  }
  func.func @transform_2(%arg0: i32) -> (i32, i32) {
    %c0_i32 = arith.constant 0 : i32
    %c0_i32_0 = arith.constant 0 : i32
    %c0_i32_1 = arith.constant 0 : i32
    return %c0_i32, %c0_i32_0 : i32, i32
  }
  func.func @transform_3(%arg0: i32) -> (i32, i32) {
    %c0_i32 = arith.constant 0 : i32
    %c0_i32_0 = arith.constant 0 : i32
    %c0_i32_1 = arith.constant 0 : i32
    return %c0_i32, %c0_i32_0 : i32, i32
  }
  func.func @transform_4(%arg0: i32) -> (i32, i32, i32) {
    %c0_i32 = arith.constant 0 : i32
    %c0_i32_0 = arith.constant 0 : i32
    %c0_i32_1 = arith.constant 0 : i32
    return %arg0, %c0_i32, %c0_i32_0 : i32, i32, i32
  }
  func.func @transform_5(%arg0: i32) -> (i32, i32, i32) {
    %c0_i32 = arith.constant 0 : i32
    %c0_i32_0 = arith.constant 0 : i32
    %c0_i32_1 = arith.constant 0 : i32
    return %arg0, %c0_i32, %c0_i32_0 : i32, i32, i32
  }
  func.func @transform_6(%arg0: i32) -> (i32, i32, i32) {
    %c0_i32 = arith.constant 0 : i32
    %c0_i32_0 = arith.constant 0 : i32
    %c0_i32_1 = arith.constant 0 : i32
    return %arg0, %c0_i32, %c0_i32_0 : i32, i32, i32
  }
  func.func @transform_7(%arg0: i32) -> (i32, i32, i32) {
    %c0_i32 = arith.constant 0 : i32
    %c0_i32_0 = arith.constant 0 : i32
    %c0_i32_1 = arith.constant 0 : i32
    return %arg0, %c0_i32, %c0_i32_0 : i32, i32, i32
  }
  func.func @transform_8(%arg0: i32) -> (i32, i32, i32) {
    %c0_i32 = arith.constant 0 : i32
    %c0_i32_0 = arith.constant 0 : i32
    %c0_i32_1 = arith.constant 0 : i32
    return %arg0, %c0_i32, %c0_i32_0 : i32, i32, i32
  }
  func.func @transform_9(%arg0: i32) -> (i32, i32, i32) {
    %c0_i32 = arith.constant 0 : i32
    %c0_i32_0 = arith.constant 0 : i32
    %c0_i32_1 = arith.constant 0 : i32
    return %arg0, %c0_i32, %c0_i32_0 : i32, i32, i32
  }
  func.func @transform_10(%arg0: i32) -> (i32, i32, i32) {
    %c0_i32 = arith.constant 0 : i32
    %c0_i32_0 = arith.constant 0 : i32
    %c0_i32_1 = arith.constant 0 : i32
    return %arg0, %c0_i32, %c0_i32_0 : i32, i32, i32
  }
  func.func @transform_11(%arg0: i32) -> (i32, i32, i32) {
    %c0_i32 = arith.constant 0 : i32
    %c0_i32_0 = arith.constant 0 : i32
    %c0_i32_1 = arith.constant 0 : i32
    return %arg0, %c0_i32, %c0_i32_0 : i32, i32, i32
  }
  func.func @transform_12(%arg0: i32) -> (i32, i32, i32) {
    %c0_i32 = arith.constant 0 : i32
    %c0_i32_0 = arith.constant 0 : i32
    %c0_i32_1 = arith.constant 0 : i32
    return %arg0, %c0_i32, %c0_i32_0 : i32, i32, i32
  }
  func.func @transform_13(%arg0: i32) -> (i32, i32, i32) {
    %c0_i32 = arith.constant 0 : i32
    %c0_i32_0 = arith.constant 0 : i32
    %c0_i32_1 = arith.constant 0 : i32
    return %arg0, %c0_i32, %c0_i32_0 : i32, i32, i32
  }
  func.func @transform_14(%arg0: i32) -> (i32, i32, i32) {
    %c0_i32 = arith.constant 0 : i32
    %c0_i32_0 = arith.constant 0 : i32
    %c0_i32_1 = arith.constant 0 : i32
    return %arg0, %c0_i32, %c0_i32_0 : i32, i32, i32
  }
  func.func @transform_15(%arg0: i32) -> (i32, i32, i32) {
    %c0_i32 = arith.constant 0 : i32
    %c0_i32_0 = arith.constant 0 : i32
    %c0_i32_1 = arith.constant 0 : i32
    return %arg0, %c0_i32, %c0_i32_0 : i32, i32, i32
  }
  func.func @transform_16(%arg0: i32) -> (i32, i32) {
    %c0_i32 = arith.constant 0 : i32
    %c0_i32_0 = arith.constant 0 : i32
    %c0_i32_1 = arith.constant 0 : i32
    return %c0_i32, %c0_i32_0 : i32, i32
  }
}

module attributes {stable_mosaic.version = 11 : i64} {
  func.func @_heads_kernel(%arg0: i32, %arg1: memref<4x128xf32, #tpu.memory_space<vmem>>, %arg2: memref<128x128xbf16, #tpu.memory_space<vmem>>, %arg3: memref<1x128xf32, #tpu.memory_space<vmem>>, %arg4: memref<128x128xbf16, #tpu.memory_space<vmem>>, %arg5: memref<1x128xf32, #tpu.memory_space<vmem>>, %arg6: memref<4x128xf32, #tpu.memory_space<vmem>>, %arg7: memref<4x128xf32, #tpu.memory_space<vmem>>) attributes {dimension_semantics = [#tpu.dimension_semantics<arbitrary>], iteration_bounds = array<i64: 1>, scalar_prefetch = 0 : i64, scratch_operands = 0 : i64, tpu.core_type = #tpu.core_type<tc>, window_params = [{pipeline_mode = #tpu.pipeline_mode<synchronous>, transform_indices = @transform_0, window_bounds = array<i64: 4, 128>}, {pipeline_mode = #tpu.pipeline_mode<synchronous>, transform_indices = @transform_1, window_bounds = array<i64: 128, 128>}, {pipeline_mode = #tpu.pipeline_mode<synchronous>, transform_indices = @transform_2, window_bounds = array<i64: 1, 128>}, {pipeline_mode = #tpu.pipeline_mode<synchronous>, transform_indices = @transform_3, window_bounds = array<i64: 128, 128>}, {pipeline_mode = #tpu.pipeline_mode<synchronous>, transform_indices = @transform_4, window_bounds = array<i64: 1, 128>}, {pipeline_mode = #tpu.pipeline_mode<synchronous>, transform_indices = @transform_5, window_bounds = array<i64: 4, 128>}, {pipeline_mode = #tpu.pipeline_mode<synchronous>, transform_indices = @transform_6, window_bounds = array<i64: 4, 128>}]} {
    %c0 = arith.constant 0 : index
    %c0_0 = arith.constant 0 : index
    %0 = vector.load %arg1[%c0, %c0_0] : memref<4x128xf32, #tpu.memory_space<vmem>>, vector<4x128xf32>
    %1 = arith.truncf %0 : vector<4x128xf32> to vector<4x128xbf16>
    %c0_1 = arith.constant 0 : index
    %c0_2 = arith.constant 0 : index
    %2 = vector.load %arg2[%c0_1, %c0_2] : memref<128x128xbf16, #tpu.memory_space<vmem>>, vector<128x128xbf16>
    %cst = arith.constant dense<0.000000e+00> : vector<4x128xf32>
    %3 = tpu.matmul %1, %2, %cst {dimension_numbers = #tpu.dot_dimension_numbers<[1], [0], [0], [1], [0, 0, 1, 1], [], []>} : vector<4x128xbf16>, vector<128x128xbf16>, vector<4x128xf32> -> vector<4x128xf32>
    %c0_3 = arith.constant 0 : index
    %c0_4 = arith.constant 0 : index
    %4 = vector.load %arg3[%c0_3, %c0_4] : memref<1x128xf32, #tpu.memory_space<vmem>>, vector<1x128xf32>
    %5 = vector.broadcast %4 : vector<1x128xf32> to vector<4x128xf32>
    %6 = arith.addf %3, %5 : vector<4x128xf32>
    %7 = math.tanh %6 : vector<4x128xf32>
    %c0_5 = arith.constant 0 : index
    %c0_6 = arith.constant 0 : index
    %8 = vector.load %arg6[%c0_5, %c0_6] : memref<4x128xf32, #tpu.memory_space<vmem>>, vector<4x128xf32>
    tpu.vector_store %arg6[%c0_5, %c0_6], %7 {strides = array<i32>} : memref<4x128xf32, #tpu.memory_space<vmem>>, vector<4x128xf32>,
    %9 = arith.truncf %7 : vector<4x128xf32> to vector<4x128xbf16>
    %c0_7 = arith.constant 0 : index
    %c0_8 = arith.constant 0 : index
    %10 = vector.load %arg4[%c0_7, %c0_8] : memref<128x128xbf16, #tpu.memory_space<vmem>>, vector<128x128xbf16>
    %cst_9 = arith.constant dense<0.000000e+00> : vector<4x128xf32>
    %11 = tpu.matmul %9, %10, %cst_9 {dimension_numbers = #tpu.dot_dimension_numbers<[1], [0], [0], [1], [0, 0, 1, 1], [], []>} : vector<4x128xbf16>, vector<128x128xbf16>, vector<4x128xf32> -> vector<4x128xf32>
    %c0_10 = arith.constant 0 : index
    %c0_11 = arith.constant 0 : index
    %12 = vector.load %arg5[%c0_10, %c0_11] : memref<1x128xf32, #tpu.memory_space<vmem>>, vector<1x128xf32>
    %13 = vector.broadcast %12 : vector<1x128xf32> to vector<4x128xf32>
    %14 = arith.addf %11, %13 : vector<4x128xf32>
    %c0_12 = arith.constant 0 : index
    %c0_13 = arith.constant 0 : index
    %15 = vector.load %arg7[%c0_12, %c0_13] : memref<4x128xf32, #tpu.memory_space<vmem>>, vector<4x128xf32>
    tpu.vector_store %arg7[%c0_12, %c0_13], %14 {strides = array<i32>} : memref<4x128xf32, #tpu.memory_space<vmem>>, vector<4x128xf32>,
    return
  }
  func.func @transform_0(%arg0: i32) -> (i32, i32) {
    %c0_i32 = arith.constant 0 : i32
    %c0_i32_0 = arith.constant 0 : i32
    %c0_i32_1 = arith.constant 0 : i32
    return %c0_i32, %c0_i32_0 : i32, i32
  }
  func.func @transform_1(%arg0: i32) -> (i32, i32) {
    %c0_i32 = arith.constant 0 : i32
    %c0_i32_0 = arith.constant 0 : i32
    %c0_i32_1 = arith.constant 0 : i32
    return %c0_i32, %c0_i32_0 : i32, i32
  }
  func.func @transform_2(%arg0: i32) -> (i32, i32) {
    %c0_i32 = arith.constant 0 : i32
    %c0_i32_0 = arith.constant 0 : i32
    %c0_i32_1 = arith.constant 0 : i32
    return %c0_i32, %c0_i32_0 : i32, i32
  }
  func.func @transform_3(%arg0: i32) -> (i32, i32) {
    %c0_i32 = arith.constant 0 : i32
    %c0_i32_0 = arith.constant 0 : i32
    %c0_i32_1 = arith.constant 0 : i32
    return %c0_i32, %c0_i32_0 : i32, i32
  }
  func.func @transform_4(%arg0: i32) -> (i32, i32) {
    %c0_i32 = arith.constant 0 : i32
    %c0_i32_0 = arith.constant 0 : i32
    %c0_i32_1 = arith.constant 0 : i32
    return %c0_i32, %c0_i32_0 : i32, i32
  }
  func.func @transform_5(%arg0: i32) -> (i32, i32) {
    %c0_i32 = arith.constant 0 : i32
    %c0_i32_0 = arith.constant 0 : i32
    %c0_i32_1 = arith.constant 0 : i32
    return %c0_i32, %c0_i32_0 : i32, i32
  }
  func.func @transform_6(%arg0: i32) -> (i32, i32) {
    %c0_i32 = arith.constant 0 : i32
    %c0_i32_0 = arith.constant 0 : i32
    %c0_i32_1 = arith.constant 0 : i32
    return %c0_i32, %c0_i32_0 : i32, i32
  }
}

</mosaic_0001>

<llo_original>
// kernel: predict_sentiment.3
$region0: #{predict_sentiment.3}
  #allocation0 [shape = 'u32[]', space=smem, size = 0x4, offset = 0x4, fixed_abs, tag = 'smem constant byte address 0x4 - core index']
  #allocation1 [shape = 'u32[144,128]{1,0:T(1,128)}', space=vmem, size = 0x12000, scoped, tag = 'internal scratch']
  %s0 = inlined_call_operand.vmem [shape: f32[4,128], index: 0, kind: input, shape index: {}]
  %s1 = inlined_call_operand.vmem [shape: bf16[128,128], index: 1, kind: input, shape index: {}]
  %s2 = inlined_call_operand.vmem [shape: f32[1,128], index: 2, kind: input, shape index: {}]
  %s3 = inlined_call_operand.vmem [shape: bf16[128,128], index: 3, kind: input, shape index: {}]
  %s4 = inlined_call_operand.vmem [shape: f32[1,128], index: 4, kind: input, shape index: {}]
  %s5 = inlined_call_operand.hbm [shape: f32[4,128], index: 5, kind: output, shape index: {0}]
  %s6 = inlined_call_operand.hbm [shape: f32[4,128], index: 6, kind: output, shape index: {1}]
  %7 = xla_tuple %s5, %s6
  %s8 = sld [smem:[#allocation0]]
  $region38: #{predict_sentiment.3} parent=0
    _
  %s10 = ssub.s32 1, %s8
  %s11 = scalar_select 0, %s10, %s8
  $region1: #{predict_sentiment.3} parent=0
    #allocation2 [shape = 'u8[2048]{0}', space=vmem, size = 0x800, scoped, tag = 'output window, operand 0, single buffered']
    #allocation3 [shape = 's32[1]{0}', space=sflag, size = 0x4, scoped, tag = 'scoped memory for predict_sentiment.3']
    #allocation4 [shape = 'u8[2048]{0}', space=vmem, size = 0x800, scoped, tag = 'output window, operand 1, single buffered']
    #allocation5 [shape = 's32[1]{0}', space=sflag, size = 0x4, scoped, tag = 'scoped memory for predict_sentiment.3']
    %12 = vsyncpa [#allocation3], 0
    %13 = vsyncpa [#allocation5], 0
    // Predicated region
    $region2: #{predict_sentiment.3} parent=1 // pred_check
      _
    $region3: #{predict_sentiment.3} parent=1 // pred_check_branch
      %15 = sbr.rel (0) target = $region5
    $region4: #{predict_sentiment.3} parent=1 // pred_region
      _
    $region5: #{predict_sentiment.3} parent=1 // pred_fallthru
      _
    // Predicated region
    $region6: #{predict_sentiment.3} parent=1 // pred_check
      _
    $region7: #{predict_sentiment.3} parent=1 // pred_check_branch
      %17 = sbr.rel (0) target = $region9
    $region8: #{predict_sentiment.3} parent=1 // pred_region
      _
    $region9: #{predict_sentiment.3} parent=1 // pred_fallthru
      _
    // Predicated region
    $region10: #{predict_sentiment.3} parent=1 // pred_check
      _
    $region11: #{predict_sentiment.3} parent=1 // pred_check_branch
      %19 = sbr.rel (0) target = $region13
    $region12: #{predict_sentiment.3} parent=1 // pred_region
      _
    $region13: #{predict_sentiment.3} parent=1 // pred_fallthru
      _
    // Predicated region
    $region14: #{predict_sentiment.3} parent=1 // pred_check
      _
    $region15: #{predict_sentiment.3} parent=1 // pred_check_branch
      %21 = sbr.rel (0) target = $region17
    $region16: #{predict_sentiment.3} parent=1 // pred_region
      _
    $region17: #{predict_sentiment.3} parent=1 // pred_fallthru
      _
    // Predicated region
    $region18: #{predict_sentiment.3} parent=1 // pred_check
      _
    $region19: #{predict_sentiment.3} parent=1 // pred_check_branch
      %23 = sbr.rel (0) target = $region21
    $region20: #{predict_sentiment.3} parent=1 // pred_region
      _
    $region21: #{predict_sentiment.3} parent=1 // pred_fallthru
      _
    %v25 = vld [vmem:[%s0] sm:$0xf]
    %v26 = vpack.c.bf16 %v25, %v25
    %v27 = vld [vmem:[%s1] sm:$0xf]
    %v28 = vld [vmem:[%s1 + $0x4] sm:$0xf]
    %v29 = vld [vmem:[%s1 + $0x8] sm:$0xf]
    %v30 = vld [vmem:[%s1 + $0xc] sm:$0xf]
    %v31 = vld [vmem:[%s1 + $0x10] sm:$0xf]
    %v32 = vld [vmem:[%s1 + $0x14] sm:$0xf]
    %v33 = vld [vmem:[%s1 + $0x18] sm:$0xf]
    %v34 = vld [vmem:[%s1 + $0x1c] sm:$0xf]
    %v35 = vld [vmem:[%s1 + $0x20] sm:$0xf]
    %v36 = vld [vmem:[%s1 + $0x24] sm:$0xf]
    %v37 = vld [vmem:[%s1 + $0x28] sm:$0xf]
    %v38 = vld [vmem:[%s1 + $0x2c] sm:$0xf]
    %v39 = vld [vmem:[%s1 + $0x30] sm:$0xf]
    %v40 = vld [vmem:[%s1 + $0x34] sm:$0xf]
    %v41 = vld [vmem:[%s1 + $0x38] sm:$0xf]
    %v42 = vld [vmem:[%s1 + $0x3c] sm:$0xf]
    %v43 = vld [vmem:[%s2] sm:$0x1]
    %v45 = vlaneseq
    %v46 = vshrl.u32 %v45, 7
    %v47 = vsub.s32 0, %v46
    %v48 = vrot.slane %v43, %v47
    %v66 = vunpack.c.l.b16 %v27
    %v67 = vunpack.c.l.b16 %v28
    %v68 = vunpack.c.l.b16 %v29
    %v69 = vunpack.c.l.b16 %v30
    %v70 = vunpack.c.l.b16 %v31
    %v71 = vunpack.c.l.b16 %v32
    %v72 = vunpack.c.l.b16 %v33
    %v73 = vunpack.c.l.b16 %v34
    %v74 = vunpack.c.l.b16 %v35
    %v75 = vunpack.c.l.b16 %v36
    %v76 = vunpack.c.l.b16 %v37
    %v77 = vunpack.c.l.b16 %v38
    %v78 = vunpack.c.l.b16 %v39
    %v79 = vunpack.c.l.b16 %v40
    %v80 = vunpack.c.l.b16 %v41
    %v81 = vunpack.c.l.b16 %v42
    %v82 = vpack.c.b16 %v67, %v66
    %v83 = vpack.c.b16 %v69, %v68
    %v84 = vpack.c.b16 %v71, %v70
    %v85 = vpack.c.b16 %v73, %v72
    %v86 = vpack.c.b16 %v75, %v74
    %v87 = vpack.c.b16 %v77, %v76
    %v88 = vpack.c.b16 %v79, %v78
    %v89 = vpack.c.b16 %v81, %v80
    %98 = vmatprep.subr.bf16.mxu0 0
    %99 = vmatpush1.bf16.msra.mxu0 %v82
    %100 = vmatprep.subr.bf16.mxu0 0
    %101 = vmatpush1.bf16.msra.mxu0 %v83
    %102 = vmatprep.subr.bf16.mxu0 0
    %103 = vmatpush1.bf16.msra.mxu0 %v84
    %104 = vmatprep.subr.bf16.mxu0 0
    %105 = vmatpush1.bf16.msra.mxu0 %v85
    %106 = vmatprep.subr.bf16.mxu0 0
    %107 = vmatpush1.bf16.msra.mxu0 %v86
    %108 = vmatprep.subr.bf16.mxu0 0
    %109 = vmatpush1.bf16.msra.mxu0 %v87
    %110 = vmatprep.subr.bf16.mxu0 0
    %111 = vmatpush1.bf16.msra.mxu0 %v88
    %112 = vmatprep.subr.bf16.mxu0 0
    %113 = vmatpush1.bf16.msra.mxu0 %v89
    %114 = vmatprep.subr.bf16.mxu0 0
    %115 = vmatpush1.bf16.msra.mxu0 0
    %116 = vmatprep.subr.bf16.mxu0 0
    %117 = vmatpush1.bf16.msra.mxu0 0
    %118 = vmatprep.subr.bf16.mxu0 0
    %119 = vmatpush1.bf16.msra.mxu0 0
    %120 = vmatprep.subr.bf16.mxu0 0
    %121 = vmatpush1.bf16.msra.mxu0 0
    %122 = vmatprep.subr.bf16.mxu0 0
    %123 = vmatpush1.bf16.msra.mxu0 0
    %124 = vmatprep.subr.bf16.mxu0 0
    %125 = vmatpush1.bf16.msra.mxu0 0
    %126 = vmatprep.subr.bf16.mxu0 0
    %127 = vmatpush1.bf16.msra.mxu0 0
    %128 = vmatprep.subr.bf16.mxu0 0
    %129 = vmatpush1.bf16.msra.mxu0 0
    %130 = vmatprep.mubr.bf16.mxu0 0
    %131 = vmatmul.mubr.bf16.gmra.mrb[0].mxu0 %v26
    %v132 = vpop.f32.mrb[0].mxu0
    %v133 = vadd.f32 %v48, %v132
    %v134 = vpop.f32.mrb[0].mxu0
    %v135 = vpop.f32.mrb[0].mxu0
    %v136 = vpop.f32.mrb[0].mxu0
    %137 = vdwg.mxu0
    %v138 = vtanh.pop %v133
    %139 = vst [vmem:[#allocation2] sm:$0xf] %v138
    %v140 = vpack.c.bf16 %v138, %v138
    %v141 = vld [vmem:[%s3] sm:$0xf]
    %v142 = vld [vmem:[%s3 + $0x4] sm:$0xf]
    %v143 = vld [vmem:[%s3 + $0x8] sm:$0xf]
    %v144 = vld [vmem:[%s3 + $0xc] sm:$0xf]
    %v145 = vld [vmem:[%s3 + $0x10] sm:$0xf]
    %v146 = vld [vmem:[%s3 + $0x14] sm:$0xf]
    %v147 = vld [vmem:[%s3 + $0x18] sm:$0xf]
    %v148 = vld [vmem:[%s3 + $0x1c] sm:$0xf]
    %v149 = vld [vmem:[%s3 + $0x20] sm:$0xf]
    %v150 = vld [vmem:[%s3 + $0x24] sm:$0xf]
    %v151 = vld [vmem:[%s3 + $0x28] sm:$0xf]
    %v152 = vld [vmem:[%s3 + $0x2c] sm:$0xf]
    %v153 = vld [vmem:[%s3 + $0x30] sm:$0xf]
    %v154 = vld [vmem:[%s3 + $0x34] sm:$0xf]
    %v155 = vld [vmem:[%s3 + $0x38] sm:$0xf]
    %v156 = vld [vmem:[%s3 + $0x3c] sm:$0xf]
    %v157 = vld [vmem:[%s4] sm:$0x1]
    %v159 = vlaneseq
    %v160 = vshrl.u32 %v159, 7
    %v161 = vsub.s32 0, %v160
    %v162 = vrot.slane %v157, %v161
    %v180 = vunpack.c.l.b16 %v141
    %v181 = vunpack.c.l.b16 %v142
    %v182 = vunpack.c.l.b16 %v143
    %v183 = vunpack.c.l.b16 %v144
    %v184 = vunpack.c.l.b16 %v145
    %v185 = vunpack.c.l.b16 %v146
    %v186 = vunpack.c.l.b16 %v147
    %v187 = vunpack.c.l.b16 %v148
    %v188 = vunpack.c.l.b16 %v149
    %v189 = vunpack.c.l.b16 %v150
    %v190 = vunpack.c.l.b16 %v151
    %v191 = vunpack.c.l.b16 %v152
    %v192 = vunpack.c.l.b16 %v153
    %v193 = vunpack.c.l.b16 %v154
    %v194 = vunpack.c.l.b16 %v155
    %v195 = vunpack.c.l.b16 %v156
    %v196 = vpack.c.b16 %v181, %v180
    %v197 = vpack.c.b16 %v183, %v182
    %v198 = vpack.c.b16 %v185, %v184
    %v199 = vpack.c.b16 %v187, %v186
    %v200 = vpack.c.b16 %v189, %v188
    %v201 = vpack.c.b16 %v191, %v190
    %v202 = vpack.c.b16 %v193, %v192
    %v203 = vpack.c.b16 %v195, %v194
    %212 = vmatprep.subr.bf16.mxu0 0
    %213 = vmatpush1.bf16.msra.mxu0 %v196
    %214 = vmatprep.subr.bf16.mxu0 0
    %215 = vmatpush1.bf16.msra.mxu0 %v197
    %216 = vmatprep.subr.bf16.mxu0 0
    %217 = vmatpush1.bf16.msra.mxu0 %v198
    %218 = vmatprep.subr.bf16.mxu0 0
    %219 = vmatpush1.bf16.msra.mxu0 %v199
    %220 = vmatprep.subr.bf16.mxu0 0
    %221 = vmatpush1.bf16.msra.mxu0 %v200
    %222 = vmatprep.subr.bf16.mxu0 0
    %223 = vmatpush1.bf16.msra.mxu0 %v201
    %224 = vmatprep.subr.bf16.mxu0 0
    %225 = vmatpush1.bf16.msra.mxu0 %v202
    %226 = vmatprep.subr.bf16.mxu0 0
    %227 = vmatpush1.bf16.msra.mxu0 %v203
    %228 = vmatprep.subr.bf16.mxu0 0
    %229 = vmatpush1.bf16.msra.mxu0 0
    %230 = vmatprep.subr.bf16.mxu0 0
    %231 = vmatpush1.bf16.msra.mxu0 0
    %232 = vmatprep.subr.bf16.mxu0 0
    %233 = vmatpush1.bf16.msra.mxu0 0
    %234 = vmatprep.subr.bf16.mxu0 0
    %235 = vmatpush1.bf16.msra.mxu0 0
    %236 = vmatprep.subr.bf16.mxu0 0
    %237 = vmatpush1.bf16.msra.mxu0 0
    %238 = vmatprep.subr.bf16.mxu0 0
    %239 = vmatpush1.bf16.msra.mxu0 0
    %240 = vmatprep.subr.bf16.mxu0 0
    %241 = vmatpush1.bf16.msra.mxu0 0
    %242 = vmatprep.subr.bf16.mxu0 0
    %243 = vmatpush1.bf16.msra.mxu0 0
    %244 = vmatprep.mubr.bf16.mxu0 0
    %245 = vmatmul.mubr.bf16.gmra.mrb[0].mxu0 %v140
    %v246 = vpop.f32.mrb[0].mxu0
    %v247 = vadd.f32 %v162, %v246
    %v248 = vpop.f32.mrb[0].mxu0
    %v249 = vpop.f32.mrb[0].mxu0
    %v250 = vpop.f32.mrb[0].mxu0
    %251 = vdwg.mxu0
    %252 = vst [vmem:[#allocation4] sm:$0xf] %v247
    // Predicated region
    $region22: #{predict_sentiment.3} parent=1 // pred_check
      _
    $region23: #{predict_sentiment.3} parent=1 // pred_check_branch
      %254 = sbr.rel (0) target = $region25
    $region24: #{predict_sentiment.3} parent=1 // pred_region
      %s256 = ssub.s32 64, 64
      %257 = vsyncadd [#allocation3], %s256
      %s259 = sshll.u32 [#allocation2], 4
      %s260 = int_to_ptr.vmem [resolvable:$true] %s259
      %262 = dma.vmem_to_hbm [thread:$0]  %s260, 64, %s5, [#allocation3]
    $region25: #{predict_sentiment.3} parent=1 // pred_fallthru
      _
    // Predicated region
    $region26: #{predict_sentiment.3} parent=1 // pred_check
      _
    $region27: #{predict_sentiment.3} parent=1 // pred_check_branch
      %264 = sbr.rel (0) target = $region29
    $region28: #{predict_sentiment.3} parent=1 // pred_region
      %s266 = ssub.s32 64, 64
      %267 = vsyncadd [#allocation5], %s266
      %s269 = sshll.u32 [#allocation4], 4
      %s270 = int_to_ptr.vmem [resolvable:$true] %s269
      %272 = dma.vmem_to_hbm [thread:$0]  %s270, 64, %s6, [#allocation5]
    $region29: #{predict_sentiment.3} parent=1 // pred_fallthru
      _
    // Predicated region
    $region30: #{predict_sentiment.3} parent=1 // pred_check
      _
    $region31: #{predict_sentiment.3} parent=1 // pred_check_branch
      %274 = sbr.rel (0) target = $region33
    $region32: #{predict_sentiment.3} parent=1 // pred_region
      %275 = dma.done [#allocation3], 64
    $region33: #{predict_sentiment.3} parent=1 // pred_fallthru
      _
    // Predicated region
    $region34: #{predict_sentiment.3} parent=1 // pred_check
      _
    $region35: #{predict_sentiment.3} parent=1 // pred_check_branch
      %277 = sbr.rel (0) target = $region37
    $region36: #{predict_sentiment.3} parent=1 // pred_region
      %278 = dma.done [#allocation5], 64
    $region37: #{predict_sentiment.3} parent=1 // pred_fallthru
      _
    %279 = vsyncpa [#allocation3], 1
    %280 = vsyncpa [#allocation5], 1

// kernel: predict_sentiment.2
$region0: #{predict_sentiment.2}
  #allocation0 [shape = 'u32[]', space=smem, size = 0x4, offset = 0x4, fixed_abs, tag = 'smem constant byte address 0x4 - core index']
  #allocation1 [shape = 'u32[144,128]{1,0:T(1,128)}', space=vmem, size = 0x12000, scoped, tag = 'internal scratch']
  %s0 = inlined_call_operand.vmem [shape: f32[32,128], index: 0, kind: input, shape index: {}]
  %s1 = inlined_call_operand.vmem [shape: f32[4,1,8], index: 1, kind: input, shape index: {}]
  %s2 = inlined_call_operand.vmem [shape: f32[1,128], index: 2, kind: input, shape index: {}]
  %s3 = inlined_call_operand.vmem [shape: f32[1,128], index: 3, kind: input, shape index: {}]
  %s4 = inlined_call_operand.vmem [shape: bf16[2,128,384], index: 4, kind: input, shape index: {}]
  %s5 = inlined_call_operand.vmem [shape: f32[2,1,384], index: 5, kind: input, shape index: {}]
  %s6 = inlined_call_operand.hbm [shape: bf16[2,128,128], index: 6, kind: input, shape index: {}]
  %s7 = inlined_call_operand.vmem [shape: f32[2,1,128], index: 7, kind: input, shape index: {}]
  %s8 = inlined_call_operand.vmem [shape: f32[2,1,128], index: 8, kind: input, shape index: {}]
  %s9 = inlined_call_operand.vmem [shape: f32[2,1,128], index: 9, kind: input, shape index: {}]
  %s10 = inlined_call_operand.hbm [shape: bf16[2,128,512], index: 10, kind: input, shape index: {}]
  %s11 = inlined_call_operand.vmem [shape: f32[2,1,512], index: 11, kind: input, shape index: {}]
  %s12 = inlined_call_operand.hbm [shape: bf16[2,512,128], index: 12, kind: input, shape index: {}]
  %s13 = inlined_call_operand.vmem [shape: f32[2,1,128], index: 13, kind: input, shape index: {}]
  %s14 = inlined_call_operand.vmem [shape: f32[2,1,128], index: 14, kind: input, shape index: {}]
  %s15 = inlined_call_operand.vmem [shape: f32[2,1,128], index: 15, kind: input, shape index: {}]
  %s16 = inlined_call_operand.vmem [shape: f32[32,128], index: 16, kind: output, shape index: {}]
  %s17 = sld [smem:[#allocation0]]
  $region113: #{predict_sentiment.2} parent=0
    _
  %s19 = ssub.s32 1, %s17
  %s20 = scalar_select 0, %s19, %s17
  $region1: #{predict_sentiment.2} parent=0
    #allocation2 [shape = 'u8[65536]{0}', space=vmem, size = 0x10000, scoped, tag = 'input window, operand 6']
    #allocation3 [shape = 's32[2]{0}', space=sflag, size = 0x8, scoped, tag = 'scoped memory for predict_sentiment.2']
    #allocation4 [shape = 'u8[262144]{0}', space=vmem, size = 0x40000, scoped, tag = 'input window, operand 10']
    #allocation5 [shape = 's32[2]{0}', space=sflag, size = 0x8, scoped, tag = 'scoped memory for predict_sentiment.2']
    #allocation6 [shape = 'u8[262144]{0}', space=vmem, size = 0x40000, scoped, tag = 'input window, operand 12']
    %21 = vsyncpa [#allocation3], 0
    %s22 = scalar_lea.sflag [#allocation3], 1
    %23 = vsyncpa %s22, 0
    %24 = vsyncpa [#allocation5], 0
    %s25 = scalar_lea.sflag [#allocation5], 1
    %26 = vsyncpa %s25, 0
    loop: start=0, step=1, limit=4
    $region2: #{predict_sentiment.2} parent=1 // loop_pre_header
      _
    $region3: #{predict_sentiment.2} parent=1 // loop_header
      %s28 = sphi 0, %s32
      %p29 = scmp.ge.s32.totalorder %s28, 4
      %s36 = sphi 0, %s36
      %s38 = sphi 0, %s36
      %s39 = sphi 0, %s38
      %s53 = sphi 0, %s39
      %s57 = sphi 0, %s57
      %s59 = sphi 0, %s57
      %s60 = sphi 0, %s59
      %s74 = sphi 0, %s60
      %s78 = sphi 0, %s78
      %s80 = sphi 0, %s78
      %s81 = sphi 0, %s80
      %s95 = sphi 0, %s81
      %s99 = sphi 0, %s99
      %s101 = sphi 0, %s99
      %s102 = sphi 0, %s101
      %s116 = sphi 0, %s102
      %s122 = sphi 0, %s124
      %s125 = sphi 0, %s122
      %s126 = sphi 0, %s125
      %s142 = sphi 0, %s126
      %s148 = sphi 0, %s150
      %s151 = sphi 0, %s148
      %s152 = sphi 0, %s151
      %s168 = sphi 0, %s152
      %s174 = sphi 0, %s176
      %s177 = sphi 0, %s174
      %s178 = sphi 0, %s177
      %s194 = sphi 0, %s178
      %s200 = sphi 0, %s202
      %s203 = sphi 0, %s200
      %s204 = sphi 0, %s203
      %s220 = sphi 0, %s204
      %s226 = sphi 0, %s228
      %s229 = sphi 0, %s226
      %s230 = sphi 0, %s229
      %s246 = sphi 0, %s230
      %s252 = sphi 0, %s254
      %s255 = sphi 0, %s252
      %s256 = sphi 0, %s255
      %s272 = sphi 0, %s256
      %s278 = sphi 0, %s280
      %s281 = sphi 0, %s278
      %s282 = sphi 0, %s281
      %s298 = sphi 0, %s282
      %s304 = sphi 0, %s306
      %s307 = sphi 0, %s304
      %s308 = sphi 0, %s307
      %s324 = sphi 0, %s308
      %s330 = sphi 0, %s332
      %s333 = sphi 0, %s330
      %s334 = sphi 0, %s333
      %s350 = sphi 0, %s334
      %s356 = sphi 0, %s358
      %s359 = sphi 0, %s356
      %s360 = sphi 0, %s359
      %s376 = sphi 0, %s360
      %s382 = sphi 0, %s384
      %s385 = sphi 0, %s382
      %s386 = sphi 0, %s385
      %s402 = sphi 0, %s386
      %s408 = sphi 0, %s410
      %s411 = sphi 0, %s408
      %s412 = sphi 0, %s411
      %s428 = sphi 0, %s412
      %s432 = sphi 0, %s432
      %s434 = sphi 0, %s432
      %s435 = sphi 0, %s434
      %s449 = sphi 0, %s435
    $region4: #{predict_sentiment.2} parent=1 // loop_header_branch
      %31 = sbr.rel (%p29) target = $region8
    $region5: #{predict_sentiment.2} parent=1 // loop_body
      %s33 = ssub.s32 %s28, 1
      %s34 = ssub.s32 %s28, 2
      %s35 = sadd.s32 %s28, 1
      %s37 = sadd.s32 %s36, 1
      %p40 = scmp.eq.s32.totalorder %s28, 1
      %p41 = scmp.ne.s32.totalorder %s36, %s38
      %p42 = scmp.eq.s32.totalorder %s28, 0
      %p43 = por %p41, %p42
      %p44 = scmp.ne.s32.totalorder %s36, %s38
      %p45 = scmp.eq.s32.totalorder %s33, 1
      %p46 = por %p44, %p45
      %p47 = scmp.ne.s32.totalorder %s38, %s39
      %p48 = scmp.eq.s32.totalorder %s33, 0
      %p49 = por %p47, %p48
      %p50 = scmp.ne.s32.totalorder %s38, %s39
      %p51 = scmp.eq.s32.totalorder %s34, 1
      %p52 = por %p50, %p51
      %p54 = scmp.ne.s32.totalorder %s39, %s53
      %p55 = scmp.eq.s32.totalorder %s34, 0
      %p56 = por %p54, %p55
      %s58 = sadd.s32 %s57, 1
      %p61 = scmp.eq.s32.totalorder %s28, 1
      %p62 = scmp.ne.s32.totalorder %s57, %s59
      %p63 = scmp.eq.s32.totalorder %s28, 0
      %p64 = por %p62, %p63
      %p65 = scmp.ne.s32.totalorder %s57, %s59
      %p66 = scmp.eq.s32.totalorder %s33, 1
      %p67 = por %p65, %p66
      %p68 = scmp.ne.s32.totalorder %s59, %s60
      %p69 = scmp.eq.s32.totalorder %s33, 0
      %p70 = por %p68, %p69
      %p71 = scmp.ne.s32.totalorder %s59, %s60
      %p72 = scmp.eq.s32.totalorder %s34, 1
      %p73 = por %p71, %p72
      %p75 = scmp.ne.s32.totalorder %s60, %s74
      %p76 = scmp.eq.s32.totalorder %s34, 0
      %p77 = por %p75, %p76
      %s79 = sadd.s32 %s78, 1
      %p82 = scmp.eq.s32.totalorder %s28, 1
      %p83 = scmp.ne.s32.totalorder %s78, %s80
      %p84 = scmp.eq.s32.totalorder %s28, 0
      %p85 = por %p83, %p84
      %p86 = scmp.ne.s32.totalorder %s78, %s80
      %p87 = scmp.eq.s32.totalorder %s33, 1
      %p88 = por %p86, %p87
      %p89 = scmp.ne.s32.totalorder %s80, %s81
      %p90 = scmp.eq.s32.totalorder %s33, 0
      %p91 = por %p89, %p90
      %p92 = scmp.ne.s32.totalorder %s80, %s81
      %p93 = scmp.eq.s32.totalorder %s34, 1
      %p94 = por %p92, %p93
      %p96 = scmp.ne.s32.totalorder %s81, %s95
      %p97 = scmp.eq.s32.totalorder %s34, 0
      %p98 = por %p96, %p97
      %s100 = sadd.s32 %s99, 1
      %p103 = scmp.eq.s32.totalorder %s28, 1
      %p104 = scmp.ne.s32.totalorder %s99, %s101
      %p105 = scmp.eq.s32.totalorder %s28, 0
      %p106 = por %p104, %p105
      %p107 = scmp.ne.s32.totalorder %s99, %s101
      %p108 = scmp.eq.s32.totalorder %s33, 1
      %p109 = por %p107, %p108
      %p110 = scmp.ne.s32.totalorder %s101, %s102
      %p111 = scmp.eq.s32.totalorder %s33, 0
      %p112 = por %p110, %p111
      %p113 = scmp.ne.s32.totalorder %s101, %s102
      %p114 = scmp.eq.s32.totalorder %s34, 1
      %p115 = por %p113, %p114
      %p117 = scmp.ne.s32.totalorder %s102, %s116
      %p118 = scmp.eq.s32.totalorder %s34, 0
      %p119 = por %p117, %p118
      %s120 = ssub.s32 %s28, %s35
      %p121 = scmp.eq.s32.totalorder %s120, 0
      %s123 = sadd.s32 %s122, 1
      %s124 = scalar_select %p121, %s122, %s123
      %p127 = pneg %p121
      %p128 = scmp.eq.s32.totalorder %s28, 1
      %p129 = por %p127, %p128
      %p130 = scmp.ne.s32.totalorder %s122, %s125
      %p131 = scmp.eq.s32.totalorder %s28, 0
      %p132 = por %p130, %p131
      %p133 = scmp.ne.s32.totalorder %s122, %s125
      %p134 = scmp.eq.s32.totalorder %s33, 1
      %p135 = por %p133, %p134
      %p136 = scmp.ne.s32.totalorder %s125, %s126
      %p137 = scmp.eq.s32.totalorder %s33, 0
      %p138 = por %p136, %p137
      %p139 = scmp.ne.s32.totalorder %s125, %s126
      %p140 = scmp.eq.s32.totalorder %s34, 1
      %p141 = por %p139, %p140
      %p143 = scmp.ne.s32.totalorder %s126, %s142
      %p144 = scmp.eq.s32.totalorder %s34, 0
      %p145 = por %p143, %p144
      %s146 = ssub.s32 %s28, %s35
      %p147 = scmp.eq.s32.totalorder %s146, 0
      %s149 = sadd.s32 %s148, 1
      %s150 = scalar_select %p147, %s148, %s149
      %p153 = pneg %p147
      %p154 = scmp.eq.s32.totalorder %s28, 1
      %p155 = por %p153, %p154
      %p156 = scmp.ne.s32.totalorder %s148, %s151
      %p157 = scmp.eq.s32.totalorder %s28, 0
      %p158 = por %p156, %p157
      %p159 = scmp.ne.s32.totalorder %s148, %s151
      %p160 = scmp.eq.s32.totalorder %s33, 1
      %p161 = por %p159, %p160
      %p162 = scmp.ne.s32.totalorder %s151, %s152
      %p163 = scmp.eq.s32.totalorder %s33, 0
      %p164 = por %p162, %p163
      %p165 = scmp.ne.s32.totalorder %s151, %s152
      %p166 = scmp.eq.s32.totalorder %s34, 1
      %p167 = por %p165, %p166
      %p169 = scmp.ne.s32.totalorder %s152, %s168
      %p170 = scmp.eq.s32.totalorder %s34, 0
      %p171 = por %p169, %p170
      %s172 = ssub.s32 %s28, %s35
      %p173 = scmp.eq.s32.totalorder %s172, 0
      %s175 = sadd.s32 %s174, 1
      %s176 = scalar_select %p173, %s174, %s175
      %p179 = pneg %p173
      %p180 = scmp.eq.s32.totalorder %s28, 1
      %p181 = por %p179, %p180
      %p182 = scmp.ne.s32.totalorder %s174, %s177
      %p183 = scmp.eq.s32.totalorder %s28, 0
      %p184 = por %p182, %p183
      %p185 = scmp.ne.s32.totalorder %s174, %s177
      %p186 = scmp.eq.s32.totalorder %s33, 1
      %p187 = por %p185, %p186
      %p188 = scmp.ne.s32.totalorder %s177, %s178
      %p189 = scmp.eq.s32.totalorder %s33, 0
      %p190 = por %p188, %p189
      %p191 = scmp.ne.s32.totalorder %s177, %s178
      %p192 = scmp.eq.s32.totalorder %s34, 1
      %p193 = por %p191, %p192
      %p195 = scmp.ne.s32.totalorder %s178, %s194
      %p196 = scmp.eq.s32.totalorder %s34, 0
      %p197 = por %p195, %p196
      %s198 = ssub.s32 %s28, %s35
      %p199 = scmp.eq.s32.totalorder %s198, 0
      %s201 = sadd.s32 %s200, 1
      %s202 = scalar_select %p199, %s200, %s201
      %p205 = pneg %p199
      %p206 = scmp.eq.s32.totalorder %s28, 1
      %p207 = por %p205, %p206
      %p208 = scmp.ne.s32.totalorder %s200, %s203
      %p209 = scmp.eq.s32.totalorder %s28, 0
      %p210 = por %p208, %p209
      %p211 = scmp.ne.s32.totalorder %s200, %s203
      %p212 = scmp.eq.s32.totalorder %s33, 1
      %p213 = por %p211, %p212
      %p214 = scmp.ne.s32.totalorder %s203, %s204
      %p215 = scmp.eq.s32.totalorder %s33, 0
      %p216 = por %p214, %p215
      %p217 = scmp.ne.s32.totalorder %s203, %s204
      %p218 = scmp.eq.s32.totalorder %s34, 1
      %p219 = por %p217, %p218
      %p221 = scmp.ne.s32.totalorder %s204, %s220
      %p222 = scmp.eq.s32.totalorder %s34, 0
      %p223 = por %p221, %p222
      %s224 = ssub.s32 %s28, %s35
      %p225 = scmp.eq.s32.totalorder %s224, 0
      %s227 = sadd.s32 %s226, 1
      %s228 = scalar_select %p225, %s226, %s227
      %p231 = pneg %p225
      %p232 = scmp.eq.s32.totalorder %s28, 1
      %p233 = por %p231, %p232
      %p234 = scmp.ne.s32.totalorder %s226, %s229
      %p235 = scmp.eq.s32.totalorder %s28, 0
      %p236 = por %p234, %p235
      %p237 = scmp.ne.s32.totalorder %s226, %s229
      %p238 = scmp.eq.s32.totalorder %s33, 1
      %p239 = por %p237, %p238
      %p240 = scmp.ne.s32.totalorder %s229, %s230
      %p241 = scmp.eq.s32.totalorder %s33, 0
      %p242 = por %p240, %p241
      %p243 = scmp.ne.s32.totalorder %s229, %s230
      %p244 = scmp.eq.s32.totalorder %s34, 1
      %p245 = por %p243, %p244
      %p247 = scmp.ne.s32.totalorder %s230, %s246
      %p248 = scmp.eq.s32.totalorder %s34, 0
      %p249 = por %p247, %p248
      %s250 = ssub.s32 %s28, %s35
      %p251 = scmp.eq.s32.totalorder %s250, 0
      %s253 = sadd.s32 %s252, 1
      %s254 = scalar_select %p251, %s252, %s253
      %p257 = pneg %p251
      %p258 = scmp.eq.s32.totalorder %s28, 1
      %p259 = por %p257, %p258
      %p260 = scmp.ne.s32.totalorder %s252, %s255
      %p261 = scmp.eq.s32.totalorder %s28, 0
      %p262 = por %p260, %p261
      %p263 = scmp.ne.s32.totalorder %s252, %s255
      %p264 = scmp.eq.s32.totalorder %s33, 1
      %p265 = por %p263, %p264
      %p266 = scmp.ne.s32.totalorder %s255, %s256
      %p267 = scmp.eq.s32.totalorder %s33, 0
      %p268 = por %p266, %p267
      %p269 = scmp.ne.s32.totalorder %s255, %s256
      %p270 = scmp.eq.s32.totalorder %s34, 1
      %p271 = por %p269, %p270
      %p273 = scmp.ne.s32.totalorder %s256, %s272
      %p274 = scmp.eq.s32.totalorder %s34, 0
      %p275 = por %p273, %p274
      %s276 = ssub.s32 %s28, %s35
      %p277 = scmp.eq.s32.totalorder %s276, 0
      %s279 = sadd.s32 %s278, 1
      %s280 = scalar_select %p277, %s278, %s279
      %p283 = pneg %p277
      %p284 = scmp.eq.s32.totalorder %s28, 1
      %p285 = por %p283, %p284
      %p286 = scmp.ne.s32.totalorder %s278, %s281
      %p287 = scmp.eq.s32.totalorder %s28, 0
      %p288 = por %p286, %p287
      %p289 = scmp.ne.s32.totalorder %s278, %s281
      %p290 = scmp.eq.s32.totalorder %s33, 1
      %p291 = por %p289, %p290
      %p292 = scmp.ne.s32.totalorder %s281, %s282
      %p293 = scmp.eq.s32.totalorder %s33, 0
      %p294 = por %p292, %p293
      %p295 = scmp.ne.s32.totalorder %s281, %s282
      %p296 = scmp.eq.s32.totalorder %s34, 1
      %p297 = por %p295, %p296
      %p299 = scmp.ne.s32.totalorder %s282, %s298
      %p300 = scmp.eq.s32.totalorder %s34, 0
      %p301 = por %p299, %p300
      %s302 = ssub.s32 %s28, %s35
      %p303 = scmp.eq.s32.totalorder %s302, 0
      %s305 = sadd.s32 %s304, 1
      %s306 = scalar_select %p303, %s304, %s305
      %p309 = pneg %p303
      %p310 = scmp.eq.s32.totalorder %s28, 1
      %p311 = por %p309, %p310
      %p312 = scmp.ne.s32.totalorder %s304, %s307
      %p313 = scmp.eq.s32.totalorder %s28, 0
      %p314 = por %p312, %p313
      %p315 = scmp.ne.s32.totalorder %s304, %s307
      %p316 = scmp.eq.s32.totalorder %s33, 1
      %p317 = por %p315, %p316
      %p318 = scmp.ne.s32.totalorder %s307, %s308
      %p319 = scmp.eq.s32.totalorder %s33, 0
      %p320 = por %p318, %p319
      %p321 = scmp.ne.s32.totalorder %s307, %s308
      %p322 = scmp.eq.s32.totalorder %s34, 1
      %p323 = por %p321, %p322
      %p325 = scmp.ne.s32.totalorder %s308, %s324
      %p326 = scmp.eq.s32.totalorder %s34, 0
      %p327 = por %p325, %p326
      %s328 = ssub.s32 %s28, %s35
      %p329 = scmp.eq.s32.totalorder %s328, 0
      %s331 = sadd.s32 %s330, 1
      %s332 = scalar_select %p329, %s330, %s331
      %p335 = pneg %p329
      %p336 = scmp.eq.s32.totalorder %s28, 1
      %p337 = por %p335, %p336
      %p338 = scmp.ne.s32.totalorder %s330, %s333
      %p339 = scmp.eq.s32.totalorder %s28, 0
      %p340 = por %p338, %p339
      %p341 = scmp.ne.s32.totalorder %s330, %s333
      %p342 = scmp.eq.s32.totalorder %s33, 1
      %p343 = por %p341, %p342
      %p344 = scmp.ne.s32.totalorder %s333, %s334
      %p345 = scmp.eq.s32.totalorder %s33, 0
      %p346 = por %p344, %p345
      %p347 = scmp.ne.s32.totalorder %s333, %s334
      %p348 = scmp.eq.s32.totalorder %s34, 1
      %p349 = por %p347, %p348
      %p351 = scmp.ne.s32.totalorder %s334, %s350
      %p352 = scmp.eq.s32.totalorder %s34, 0
      %p353 = por %p351, %p352
      %s354 = ssub.s32 %s28, %s35
      %p355 = scmp.eq.s32.totalorder %s354, 0
      %s357 = sadd.s32 %s356, 1
      %s358 = scalar_select %p355, %s356, %s357
      %p361 = pneg %p355
      %p362 = scmp.eq.s32.totalorder %s28, 1
      %p363 = por %p361, %p362
      %p364 = scmp.ne.s32.totalorder %s356, %s359
      %p365 = scmp.eq.s32.totalorder %s28, 0
      %p366 = por %p364, %p365
      %p367 = scmp.ne.s32.totalorder %s356, %s359
      %p368 = scmp.eq.s32.totalorder %s33, 1
      %p369 = por %p367, %p368
      %p370 = scmp.ne.s32.totalorder %s359, %s360
      %p371 = scmp.eq.s32.totalorder %s33, 0
      %p372 = por %p370, %p371
      %p373 = scmp.ne.s32.totalorder %s359, %s360
      %p374 = scmp.eq.s32.totalorder %s34, 1
      %p375 = por %p373, %p374
      %p377 = scmp.ne.s32.totalorder %s360, %s376
      %p378 = scmp.eq.s32.totalorder %s34, 0
      %p379 = por %p377, %p378
      %s380 = ssub.s32 %s28, %s35
      %p381 = scmp.eq.s32.totalorder %s380, 0
      %s383 = sadd.s32 %s382, 1
      %s384 = scalar_select %p381, %s382, %s383
      %p387 = pneg %p381
      %p388 = scmp.eq.s32.totalorder %s28, 1
      %p389 = por %p387, %p388
      %p390 = scmp.ne.s32.totalorder %s382, %s385
      %p391 = scmp.eq.s32.totalorder %s28, 0
      %p392 = por %p390, %p391
      %p393 = scmp.ne.s32.totalorder %s382, %s385
      %p394 = scmp.eq.s32.totalorder %s33, 1
      %p395 = por %p393, %p394
      %p396 = scmp.ne.s32.totalorder %s385, %s386
      %p397 = scmp.eq.s32.totalorder %s33, 0
      %p398 = por %p396, %p397
      %p399 = scmp.ne.s32.totalorder %s385, %s386
      %p400 = scmp.eq.s32.totalorder %s34, 1
      %p401 = por %p399, %p400
      %p403 = scmp.ne.s32.totalorder %s386, %s402
      %p404 = scmp.eq.s32.totalorder %s34, 0
      %p405 = por %p403, %p404
      %s406 = ssub.s32 %s28, %s35
      %p407 = scmp.eq.s32.totalorder %s406, 0
      %s409 = sadd.s32 %s408, 1
      %s410 = scalar_select %p407, %s408, %s409
      %p413 = pneg %p407
      %p414 = scmp.eq.s32.totalorder %s28, 1
      %p415 = por %p413, %p414
      %p416 = scmp.ne.s32.totalorder %s408, %s411
      %p417 = scmp.eq.s32.totalorder %s28, 0
      %p418 = por %p416, %p417
      %p419 = scmp.ne.s32.totalorder %s408, %s411
      %p420 = scmp.eq.s32.totalorder %s33, 1
      %p421 = por %p419, %p420
      %p422 = scmp.ne.s32.totalorder %s411, %s412
      %p423 = scmp.eq.s32.totalorder %s33, 0
      %p424 = por %p422, %p423
      %p425 = scmp.ne.s32.totalorder %s411, %s412
      %p426 = scmp.eq.s32.totalorder %s34, 1
      %p427 = por %p425, %p426
      %p429 = scmp.ne.s32.totalorder %s412, %s428
      %p430 = scmp.eq.s32.totalorder %s34, 0
      %p431 = por %p429, %p430
      %s433 = sadd.s32 %s432, 1
      %p436 = scmp.eq.s32.totalorder %s28, 1
      %p437 = scmp.ne.s32.totalorder %s432, %s434
      %p438 = scmp.eq.s32.totalorder %s28, 0
      %p439 = por %p437, %p438
      %p440 = scmp.ne.s32.totalorder %s432, %s434
      %p441 = scmp.eq.s32.totalorder %s33, 1
      %p442 = por %p440, %p441
      %p443 = scmp.ne.s32.totalorder %s434, %s435
      %p444 = scmp.eq.s32.totalorder %s33, 0
      %p445 = por %p443, %p444
      %p446 = scmp.ne.s32.totalorder %s434, %s435
      %p447 = scmp.eq.s32.totalorder %s34, 1
      %p448 = por %p446, %p447
      %p450 = scmp.ne.s32.totalorder %s435, %s449
      %p451 = scmp.eq.s32.totalorder %s34, 0
      %p452 = por %p450, %p451
      %p453 = scmp.le.s32.totalorder 1, %s28
      %p454 = scmp.lt.s32.totalorder %s28, 3
      %p455 = pnand %p453, %p454
      %p456 = pneg %p455
      // Predicated region
      $region9: #{predict_sentiment.2} parent=5 // pred_check
        _
      $region10: #{predict_sentiment.2} parent=5 // pred_check_branch
        %458 = sbr.rel (%p455) target = $region12
      $region11: #{predict_sentiment.2} parent=5 // pred_region
        %s459 = ssub.s32 %s28, 1
        // Predicated region
        $region13: #{predict_sentiment.2} parent=11 // pred_check
          %p460 = pneg %p49
        $region14: #{predict_sentiment.2} parent=11 // pred_check_branch
          %462 = sbr.rel (%p460) target = $region16
        $region15: #{predict_sentiment.2} parent=11 // pred_region
          _
        $region16: #{predict_sentiment.2} parent=11 // pred_fallthru
          _
        // Predicated region
        $region17: #{predict_sentiment.2} parent=11 // pred_check
          %p463 = pneg %p70
        $region18: #{predict_sentiment.2} parent=11 // pred_check_branch
          %465 = sbr.rel (%p463) target = $region20
        $region19: #{predict_sentiment.2} parent=11 // pred_region
          _
        $region20: #{predict_sentiment.2} parent=11 // pred_fallthru
          _
        // Predicated region
        $region21: #{predict_sentiment.2} parent=11 // pred_check
          %p466 = pneg %p91
        $region22: #{predict_sentiment.2} parent=11 // pred_check_branch
          %468 = sbr.rel (%p466) target = $region24
        $region23: #{predict_sentiment.2} parent=11 // pred_region
          _
        $region24: #{predict_sentiment.2} parent=11 // pred_fallthru
          _
        // Predicated region
        $region25: #{predict_sentiment.2} parent=11 // pred_check
          %p469 = pneg %p112
        $region26: #{predict_sentiment.2} parent=11 // pred_check_branch
          %471 = sbr.rel (%p469) target = $region28
        $region27: #{predict_sentiment.2} parent=11 // pred_region
          _
        $region28: #{predict_sentiment.2} parent=11 // pred_fallthru
          _
      $region12: #{predict_sentiment.2} parent=5 // pred_fallthru
        _
      %p472 = scmp.lt.s32.totalorder %s28, 2
      // Predicated region
      $region29: #{predict_sentiment.2} parent=5 // pred_check
        %p473 = pneg %p472
      $region30: #{predict_sentiment.2} parent=5 // pred_check_branch
        %475 = sbr.rel (%p473) target = $region32
      $region31: #{predict_sentiment.2} parent=5 // pred_region
        // Predicated region
        $region33: #{predict_sentiment.2} parent=31 // pred_check
          %p476 = pneg %p132
        $region34: #{predict_sentiment.2} parent=31 // pred_check_branch
          %478 = sbr.rel (%p476) target = $region36
        $region35: #{predict_sentiment.2} parent=31 // pred_region
          %p479 = scmp.lt.s32.totalorder %s28, 1
          %s480 = scalar_select %p479, %s28, 1
          %s481 = smul.addr %s480, 48
          %s482 = smul.addr %s481, 4
          %s483 = scalar_lea.vmem %s4, %s482
        $region36: #{predict_sentiment.2} parent=31 // pred_fallthru
          _
        // Predicated region
        $region37: #{predict_sentiment.2} parent=31 // pred_check
          %p484 = pneg %p158
        $region38: #{predict_sentiment.2} parent=31 // pred_check_branch
          %486 = sbr.rel (%p484) target = $region40
        $region39: #{predict_sentiment.2} parent=31 // pred_region
          %p487 = scmp.lt.s32.totalorder %s28, 1
          %s488 = scalar_select %p487, %s28, 1
          %s489 = smul.addr %s488, 3
          %s490 = scalar_lea.vmem %s5, %s489
        $region40: #{predict_sentiment.2} parent=31 // pred_fallthru
          _
        // Predicated region
        $region41: #{predict_sentiment.2} parent=31 // pred_check
          %p491 = pneg %p184
        $region42: #{predict_sentiment.2} parent=31 // pred_check_branch
          %493 = sbr.rel (%p491) target = $region44
        $region43: #{predict_sentiment.2} parent=31 // pred_region
          %s494 = sand.u32 %s174, 1
          %s495 = scalar_lea.sflag [#allocation3], %s494
          %s496 = sand.u32 %s174, 1
          %s497 = smul.addr %s496, 64
          %s498 = scalar_lea.vmem [#allocation2], %s497
          %s500 = ssub.s32 1024, 1024
          %501 = vsyncadd %s495, %s500
          %s502 = smul.addr %s28, 16
          %s503 = smul.addr %s502, 64
          %s504 = scalar_lea.hbm %s6, %s503
          %s505 = sshll.u32 %s498, 4
          %s506 = int_to_ptr.vmem [resolvable:$true] %s505
          %511 = dma.hbm_to_vmem [thread:$0]  %s504, 1024, %s506, %s495, 64, 64, 4
        $region44: #{predict_sentiment.2} parent=31 // pred_fallthru
          _
        // Predicated region
        $region45: #{predict_sentiment.2} parent=31 // pred_check
          %p512 = pneg %p210
        $region46: #{predict_sentiment.2} parent=31 // pred_check_branch
          %514 = sbr.rel (%p512) target = $region48
        $region47: #{predict_sentiment.2} parent=31 // pred_region
          %p515 = scmp.lt.s32.totalorder %s28, 1
          %s516 = scalar_select %p515, %s28, 1
          %s517 = scalar_lea.vmem %s7, %s516
        $region48: #{predict_sentiment.2} parent=31 // pred_fallthru
          _
        // Predicated region
        $region49: #{predict_sentiment.2} parent=31 // pred_check
          %p518 = pneg %p236
        $region50: #{predict_sentiment.2} parent=31 // pred_check_branch
          %520 = sbr.rel (%p518) target = $region52
        $region51: #{predict_sentiment.2} parent=31 // pred_region
          %p521 = scmp.lt.s32.totalorder %s28, 1
          %s522 = scalar_select %p521, %s28, 1
          %s523 = scalar_lea.vmem %s8, %s522
        $region52: #{predict_sentiment.2} parent=31 // pred_fallthru
          _
        // Predicated region
        $region53: #{predict_sentiment.2} parent=31 // pred_check
          %p524 = pneg %p262
        $region54: #{predict_sentiment.2} parent=31 // pred_check_branch
          %526 = sbr.rel (%p524) target = $region56
        $region55: #{predict_sentiment.2} parent=31 // pred_region
          %p527 = scmp.lt.s32.totalorder %s28, 1
          %s528 = scalar_select %p527, %s28, 1
          %s529 = scalar_lea.vmem %s9, %s528
        $region56: #{predict_sentiment.2} parent=31 // pred_fallthru
          _
        // Predicated region
        $region57: #{predict_sentiment.2} parent=31 // pred_check
          %p530 = pneg %p288
        $region58: #{predict_sentiment.2} parent=31 // pred_check_branch
          %532 = sbr.rel (%p530) target = $region60
        $region59: #{predict_sentiment.2} parent=31 // pred_region
          %s533 = sand.u32 %s28, 1
          %s534 = scalar_lea.sflag [#allocation5], %s533
          %s535 = sand.u32 %s278, 1
          %s536 = smul.addr %s535, 256
          %s537 = scalar_lea.vmem [#allocation4], %s536
          %s539 = ssub.s32 4096, 4096
          %540 = vsyncadd %s534, %s539
          %s541 = smul.addr %s28, 64
          %s542 = smul.addr %s541, 64
          %s543 = scalar_lea.hbm %s10, %s542
          %s544 = sshll.u32 %s537, 4
          %s545 = int_to_ptr.vmem [resolvable:$true] %s544
          %550 = dma.hbm_to_vmem [thread:$0]  %s543, 4096, %s545, %s534, 256, 256, 16
        $region60: #{predict_sentiment.2} parent=31 // pred_fallthru
          _
        // Predicated region
        $region61: #{predict_sentiment.2} parent=31 // pred_check
          %p551 = pneg %p314
        $region62: #{predict_sentiment.2} parent=31 // pred_check_branch
          %553 = sbr.rel (%p551) target = $region64
        $region63: #{predict_sentiment.2} parent=31 // pred_region
          %p554 = scmp.lt.s32.totalorder %s28, 1
          %s555 = scalar_select %p554, %s28, 1
          %s556 = smul.addr %s555, 4
          %s557 = scalar_lea.vmem %s11, %s556
        $region64: #{predict_sentiment.2} parent=31 // pred_fallthru
          _
        // Predicated region
        $region65: #{predict_sentiment.2} parent=31 // pred_check
          %p558 = pneg %p340
        $region66: #{predict_sentiment.2} parent=31 // pred_check_branch
          %560 = sbr.rel (%p558) target = $region68
        $region67: #{predict_sentiment.2} parent=31 // pred_region
          %s561 = sand.u32 %s28, 1
          %s562 = scalar_lea.sflag [#allocation5], %s561
          %s563 = sand.u32 %s330, 1
          %s564 = smul.addr %s563, 256
          %s565 = scalar_lea.vmem [#allocation6], %s564
          %s567 = ssub.s32 4096, 4096
          %568 = vsyncadd %s562, %s567
          %s569 = smul.addr %s28, 64
          %s570 = smul.addr %s569, 64
          %s571 = scalar_lea.hbm %s12, %s570
          %s572 = sshll.u32 %s565, 4
          %s573 = int_to_ptr.vmem [resolvable:$true] %s572
          %578 = dma.hbm_to_vmem [thread:$0]  %s571, 4096, %s573, %s562, 64, 64, 4
        $region68: #{predict_sentiment.2} parent=31 // pred_fallthru
          _
        // Predicated region
        $region69: #{predict_sentiment.2} parent=31 // pred_check
          %p579 = pneg %p366
        $region70: #{predict_sentiment.2} parent=31 // pred_check_branch
          %581 = sbr.rel (%p579) target = $region72
        $region71: #{predict_sentiment.2} parent=31 // pred_region
          %p582 = scmp.lt.s32.totalorder %s28, 1
          %s583 = scalar_select %p582, %s28, 1
          %s584 = scalar_lea.vmem %s13, %s583
        $region72: #{predict_sentiment.2} parent=31 // pred_fallthru
          _
        // Predicated region
        $region73: #{predict_sentiment.2} parent=31 // pred_check
          %p585 = pneg %p392
        $region74: #{predict_sentiment.2} parent=31 // pred_check_branch
          %587 = sbr.rel (%p585) target = $region76
        $region75: #{predict_sentiment.2} parent=31 // pred_region
          %p588 = scmp.lt.s32.totalorder %s28, 1
          %s589 = scalar_select %p588, %s28, 1
          %s590 = scalar_lea.vmem %s14, %s589
        $region76: #{predict_sentiment.2} parent=31 // pred_fallthru
          _
        // Predicated region
        $region77: #{predict_sentiment.2} parent=31 // pred_check
          %p591 = pneg %p418
        $region78: #{predict_sentiment.2} parent=31 // pred_check_branch
          %593 = sbr.rel (%p591) target = $region80
        $region79: #{predict_sentiment.2} parent=31 // pred_region
          %p594 = scmp.lt.s32.totalorder %s28, 1
          %s595 = scalar_select %p594, %s28, 1
          %s596 = scalar_lea.vmem %s15, %s595
        $region80: #{predict_sentiment.2} parent=31 // pred_fallthru
          _
      $region32: #{predict_sentiment.2} parent=5 // pred_fallthru
        _
      %p597 = scmp.le.s32.totalorder 1, %s28
      %p598 = scmp.lt.s32.totalorder %s28, 3
      %p599 = pnand %p597, %p598
      %p600 = pneg %p599
      // Predicated region
      $region81: #{predict_sentiment.2} parent=5 // pred_check
        _
      $region82: #{predict_sentiment.2} parent=5 // pred_check_branch
        %602 = sbr.rel (%p599) target = $region84
      $region83: #{predict_sentiment.2} parent=5 // pred_region
        %s603 = ssub.s32 %s28, 1
        %s604 = sand.u32 %s177, 1
        %s605 = scalar_lea.sflag [#allocation3], %s604
        %s606 = sand.u32 %s177, 1
        %s607 = smul.addr %s606, 64
        %s608 = scalar_lea.vmem [#allocation2], %s607
        // Predicated region
        $region85: #{predict_sentiment.2} parent=83 // pred_check
          %p609 = pneg %p190
        $region86: #{predict_sentiment.2} parent=83 // pred_check_branch
          %611 = sbr.rel (%p609) target = $region88
        $region87: #{predict_sentiment.2} parent=83 // pred_region
          %612 = dma.done %s605, 1024
        $region88: #{predict_sentiment.2} parent=83 // pred_fallthru
          _
        %s613 = sand.u32 %s33, 1
        %s614 = scalar_lea.sflag [#allocation5], %s613
        %s615 = sand.u32 %s281, 1
        %s616 = smul.addr %s615, 256
        %s617 = scalar_lea.vmem [#allocation4], %s616
        // Predicated region
        $region89: #{predict_sentiment.2} parent=83 // pred_check
          %p618 = pneg %p294
        $region90: #{predict_sentiment.2} parent=83 // pred_check_branch
          %620 = sbr.rel (%p618) target = $region92
        $region91: #{predict_sentiment.2} parent=83 // pred_region
          %621 = dma.done %s614, 4096
        $region92: #{predict_sentiment.2} parent=83 // pred_fallthru
          _
        %s622 = sand.u32 %s33, 1
        %s623 = scalar_lea.sflag [#allocation5], %s622
        %s624 = sand.u32 %s333, 1
        %s625 = smul.addr %s624, 256
        %s626 = scalar_lea.vmem [#allocation6], %s625
        // Predicated region
        $region93: #{predict_sentiment.2} parent=83 // pred_check
          %p627 = pneg %p346
        $region94: #{predict_sentiment.2} parent=83 // pred_check_branch
          %629 = sbr.rel (%p627) target = $region96
        $region95: #{predict_sentiment.2} parent=83 // pred_region
          %630 = dma.done %s623, 4096
        $region96: #{predict_sentiment.2} parent=83 // pred_fallthru
          _
        %p631 = pneg %p49
        %p632 = pneg %p46
        %p633 = pneg %p70
        %p634 = pneg %p67
        %p635 = pneg %p91
        %p636 = pneg %p88
        %p637 = pneg %p112
        %p638 = pneg %p109
        %p639 = scmp.lt.s32.totalorder %s33, 1
        %s640 = scalar_select %p639, %s33, 1
        %s641 = smul.addr %s640, 48
        %s642 = smul.addr %s641, 4
        %s643 = scalar_lea.vmem %s4, %s642
        %p644 = pneg %p138
        %p645 = pneg %p135
        %p646 = scmp.lt.s32.totalorder %s33, 1
        %s647 = scalar_select %p646, %s33, 1
        %s648 = smul.addr %s647, 3
        %s649 = scalar_lea.vmem %s5, %s648
        %p650 = pneg %p164
        %p651 = pneg %p161
        %s652 = sand.u32 %s177, 1
        %s653 = scalar_lea.sflag [#allocation3], %s652
        %s654 = sand.u32 %s177, 1
        %s655 = smul.addr %s654, 64
        %s656 = scalar_lea.vmem [#allocation2], %s655
        %p657 = pneg %p190
        %p658 = pneg %p187
        %p659 = scmp.lt.s32.totalorder %s33, 1
        %s660 = scalar_select %p659, %s33, 1
        %s661 = scalar_lea.vmem %s7, %s660
        %p662 = pneg %p216
        %p663 = pneg %p213
        %p664 = scmp.lt.s32.totalorder %s33, 1
        %s665 = scalar_select %p664, %s33, 1
        %s666 = scalar_lea.vmem %s8, %s665
        %p667 = pneg %p242
        %p668 = pneg %p239
        %p669 = scmp.lt.s32.totalorder %s33, 1
        %s670 = scalar_select %p669, %s33, 1
        %s671 = scalar_lea.vmem %s9, %s670
        %p672 = pneg %p268
        %p673 = pneg %p265
        %s674 = sand.u32 %s33, 1
        %s675 = scalar_lea.sflag [#allocation5], %s674
        %s676 = sand.u32 %s281, 1
        %s677 = smul.addr %s676, 256
        %s678 = scalar_lea.vmem [#allocation4], %s677
        %p679 = pneg %p294
        %p680 = pneg %p291
        %p681 = scmp.lt.s32.totalorder %s33, 1
        %s682 = scalar_select %p681, %s33, 1
        %s683 = smul.addr %s682, 4
        %s684 = scalar_lea.vmem %s11, %s683
        %p685 = pneg %p320
        %p686 = pneg %p317
        %s687 = sand.u32 %s33, 1
        %s688 = scalar_lea.sflag [#allocation5], %s687
        %s689 = sand.u32 %s333, 1
        %s690 = smul.addr %s689, 256
        %s691 = scalar_lea.vmem [#allocation6], %s690
        %p692 = pneg %p346
        %p693 = pneg %p343
        %p694 = scmp.lt.s32.totalorder %s33, 1
        %s695 = scalar_select %p694, %s33, 1
        %s696 = scalar_lea.vmem %s13, %s695
        %p697 = pneg %p372
        %p698 = pneg %p369
        %p699 = scmp.lt.s32.totalorder %s33, 1
        %s700 = scalar_select %p699, %s33, 1
        %s701 = scalar_lea.vmem %s14, %s700
        %p702 = pneg %p398
        %p703 = pneg %p395
        %p704 = scmp.lt.s32.totalorder %s33, 1
        %s705 = scalar_select %p704, %s33, 1
        %s706 = scalar_lea.vmem %s15, %s705
        %p707 = pneg %p424
        %p708 = pneg %p421
        %p709 = pneg %p445
        %p710 = pneg %p442
        %p711 = scmp.lt.s32.totalorder %s33, 1
        %s712 = scalar_select %p711, %s33, 1
        %s713 = smul.addr %s712, 48
        %s714 = smul.addr %s713, 4
        %s715 = scalar_lea.vmem %s4, %s714
        %p716 = scmp.lt.s32.totalorder %s33, 1
        %s717 = scalar_select %p716, %s33, 1
        %s718 = smul.addr %s717, 3
        %s719 = scalar_lea.vmem %s5, %s718
        %p720 = scmp.lt.s32.totalorder %s33, 1
        %s721 = scalar_select %p720, %s33, 1
        %s722 = scalar_lea.vmem %s7, %s721
        %p723 = scmp.lt.s32.totalorder %s33, 1
        %s724 = scalar_select %p723, %s33, 1
        %s725 = scalar_lea.vmem %s8, %s724
        %p726 = scmp.lt.s32.totalorder %s33, 1
        %s727 = scalar_select %p726, %s33, 1
        %s728 = scalar_lea.vmem %s9, %s727
        %p729 = scmp.lt.s32.totalorder %s33, 1
        %s730 = scalar_select %p729, %s33, 1
        %s731 = smul.addr %s730, 4
        %s732 = scalar_lea.vmem %s11, %s731
        %p733 = scmp.lt.s32.totalorder %s33, 1
        %s734 = scalar_select %p733, %s33, 1
        %s735 = scalar_lea.vmem %s13, %s734
        %p736 = scmp.lt.s32.totalorder %s33, 1
        %s737 = scalar_select %p736, %s33, 1
        %s738 = scalar_lea.vmem %s14, %s737
        %p739 = scmp.lt.s32.totalorder %s33, 1
        %s740 = scalar_select %p739, %s33, 1
        %s741 = scalar_lea.vmem %s15, %s740
        %p743 = scmp.eq.s32.totalorder %s33, 0
        // Predicated region
        $region97: #{predict_sentiment.2} parent=83 // pred_check
          %p744 = pneg %p743
        $region98: #{predict_sentiment.2} parent=83 // pred_check_branch
          %746 = sbr.rel (%p744) target = $region100
        $region99: #{predict_sentiment.2} parent=83 // pred_region
          %v747 = vld [vmem:[%s0] sm:$0xff]
          %v748 = vld [vmem:[%s0 + $0x8] sm:$0xff]
          %v749 = vld [vmem:[%s0 + $0x10] sm:$0xff]
          %v750 = vld [vmem:[%s0 + $0x18] sm:$0xff]
          %v751 = vld [vmem:[%s2] sm:$0x1]
          %v752 = vld [vmem:[%s3] sm:$0x1]
          %753 = vadd.xlane.f32.xlu0 %v747
          %v754 = vpop.xlane.xlu0 %753
          %755 = vadd.xlane.f32.xlu0 %v748
          %v756 = vpop.xlane.xlu0 %755
          %757 = vadd.xlane.f32.xlu0 %v749
          %v758 = vpop.xlane.xlu0 %757
          %759 = vadd.xlane.f32.xlu0 %v750
          %v760 = vpop.xlane.xlu0 %759
          %v761 = vrcp.pop 128.0
          %v762 = vmul.f32 %v754, %v761
          %v763 = vmul.f32 %v756, %v761
          %v764 = vmul.f32 %v758, %v761
          %v765 = vmul.f32 %v760, %v761
          %v766 = vsub.f32 %v747, %v762
          %v767 = vsub.f32 %v748, %v763
          %v768 = vsub.f32 %v749, %v764
          %v769 = vsub.f32 %v750, %v765
          %v770 = vmul.f32 %v766, %v766
          %v771 = vmul.f32 %v767, %v767
          %v772 = vmul.f32 %v768, %v768
          %v773 = vmul.f32 %v769, %v769
          %774 = vadd.xlane.f32.xlu0 %v770
          %v775 = vpop.xlane.xlu0 %774
          %776 = vadd.xlane.f32.xlu0 %v771
          %v777 = vpop.xlane.xlu0 %776
          %778 = vadd.xlane.f32.xlu0 %v772
          %v779 = vpop.xlane.xlu0 %778
          %780 = vadd.xlane.f32.xlu0 %v773
          %v781 = vpop.xlane.xlu0 %780
          %v782 = vmul.f32 %v775, %v761
          %v783 = vmul.f32 %v777, %v761
          %v784 = vmul.f32 %v779, %v761
          %v785 = vmul.f32 %v781, %v761
          %v786 = vadd.f32 %v782, 1e-12
          %v787 = vadd.f32 %v783, 1e-12
          %v788 = vadd.f32 %v784, 1e-12
          %v789 = vadd.f32 %v785, 1e-12
          %v790 = vrsqrt.pop %v786
          %v791 = vrsqrt.pop %v787
          %v792 = vrsqrt.pop %v788
          %v793 = vrsqrt.pop %v789
          %v794 = vmul.f32 %v766, %v790
          %v795 = vmul.f32 %v767, %v791
          %v796 = vmul.f32 %v768, %v792
          %v797 = vmul.f32 %v769, %v793
          %v799 = vlaneseq
          %v800 = vshrl.u32 %v799, 7
          %v801 = vsub.s32 0, %v800
          %v802 = vrot.slane %v751, %v801
          %v804 = vmul.f32 %v794, %v802
          %v805 = vmul.f32 %v795, %v802
          %v806 = vmul.f32 %v796, %v802
          %v807 = vmul.f32 %v797, %v802
          %v809 = vlaneseq
          %v810 = vshrl.u32 %v809, 7
          %v811 = vsub.s32 0, %v810
          %v812 = vrot.slane %v752, %v811
          %v814 = vadd.f32 %v804, %v812
          %v815 = vadd.f32 %v805, %v812
          %v816 = vadd.f32 %v806, %v812
          %v817 = vadd.f32 %v807, %v812
          %818 = vst [vmem:[%s16] sm:$0xff] %v814
          %819 = vst [vmem:[%s16 + $0x8] sm:$0xff] %v815
          %820 = vst [vmem:[%s16 + $0x10] sm:$0xff] %v816
          %821 = vst [vmem:[%s16 + $0x18] sm:$0xff] %v817
        $region100: #{predict_sentiment.2} parent=83 // pred_fallthru
          _
        %v822 = vld [vmem:[%s16] sm:$0xff]
        %v823 = vld [vmem:[%s16 + $0x8] sm:$0xff]
        %v824 = vld [vmem:[%s16 + $0x10] sm:$0xff]
        %v825 = vld [vmem:[%s16 + $0x18] sm:$0xff]
        %v826 = vpack.c.bf16 %v823, %v822
        %v827 = vpack.c.bf16 %v825, %v824
        %v828 = vld [vmem:[%s715] sm:$0xff]
        %v829 = vld [vmem:[%s715 + $0x8] sm:$0xf]
        %v830 = vld [vmem:[%s715 + $0xc] sm:$0xff]
        %v831 = vld [vmem:[%s715 + $0x14] sm:$0xf]
        %v832 = vld [vmem:[%s715 + $0x18] sm:$0xff]
        %v833 = vld [vmem:[%s715 + $0x20] sm:$0xf]
        %v834 = vld [vmem:[%s715 + $0x24] sm:$0xff]
        %v835 = vld [vmem:[%s715 + $0x2c] sm:$0xf]
        %v836 = vld [vmem:[%s715 + $0x30] sm:$0xff]
        %v837 = vld [vmem:[%s715 + $0x38] sm:$0xf]
        %v838 = vld [vmem:[%s715 + $0x3c] sm:$0xff]
        %v839 = vld [vmem:[%s715 + $0x44] sm:$0xf]
        %v840 = vld [vmem:[%s715 + $0x48] sm:$0xff]
        %v841 = vld [vmem:[%s715 + $0x50] sm:$0xf]
        %v842 = vld [vmem:[%s715 + $0x54] sm:$0xff]
        %v843 = vld [vmem:[%s715 + $0x5c] sm:$0xf]
        %v844 = vld [vmem:[%s715 + $0x60] sm:$0xff]
        %v845 = vld [vmem:[%s715 + $0x68] sm:$0xf]
        %v846 = vld [vmem:[%s715 + $0x6c] sm:$0xff]
        %v847 = vld [vmem:[%s715 + $0x74] sm:$0xf]
        %v848 = vld [vmem:[%s715 + $0x78] sm:$0xff]
        %v849 = vld [vmem:[%s715 + $0x80] sm:$0xf]
        %v850 = vld [vmem:[%s715 + $0x84] sm:$0xff]
        %v851 = vld [vmem:[%s715 + $0x8c] sm:$0xf]
        %v852 = vld [vmem:[%s715 + $0x90] sm:$0xff]
        %v853 = vld [vmem:[%s715 + $0x98] sm:$0xf]
        %v854 = vld [vmem:[%s715 + $0x9c] sm:$0xff]
        %v855 = vld [vmem:[%s715 + $0xa4] sm:$0xf]
        %v856 = vld [vmem:[%s715 + $0xa8] sm:$0xff]
        %v857 = vld [vmem:[%s715 + $0xb0] sm:$0xf]
        %v858 = vld [vmem:[%s715 + $0xb4] sm:$0xff]
        %v859 = vld [vmem:[%s715 + $0xbc] sm:$0xf]
        %v860 = vld [vmem:[%s719] sm:$0x7]
        %v862 = vlaneseq
        %v863 = vshrl.u32 %v862, 7
        %v864 = vsub.s32 0, %v863
        %v865 = vrot.slane %v860, %v864
        %v866 = vlaneseq
        %v867 = vshrl.u32 %v866, 7
        %v868 = vsub.s32 1, %v867
        %v869 = vrot.slane %v860, %v868
        %v870 = vlaneseq
        %v871 = vshrl.u32 %v870, 7
        %v872 = vsub.s32 2, %v871
        %v873 = vrot.slane %v860, %v872
        %v909 = vunpack.c.l.b16 %v828
        %v910 = vunpack.c.h.b16 %v828
        %v911 = vunpack.c.l.b16 %v829
        %v912 = vunpack.c.l.b16 %v830
        %v913 = vunpack.c.h.b16 %v830
        %v914 = vunpack.c.l.b16 %v831
        %v915 = vunpack.c.l.b16 %v832
        %v916 = vunpack.c.h.b16 %v832
        %v917 = vunpack.c.l.b16 %v833
        %v918 = vunpack.c.l.b16 %v834
        %v919 = vunpack.c.h.b16 %v834
        %v920 = vunpack.c.l.b16 %v835
        %v921 = vunpack.c.l.b16 %v836
        %v922 = vunpack.c.h.b16 %v836
        %v923 = vunpack.c.l.b16 %v837
        %v924 = vunpack.c.l.b16 %v838
        %v925 = vunpack.c.h.b16 %v838
        %v926 = vunpack.c.l.b16 %v839
        %v927 = vunpack.c.l.b16 %v840
        %v928 = vunpack.c.h.b16 %v840
        %v929 = vunpack.c.l.b16 %v841
        %v930 = vunpack.c.l.b16 %v842
        %v931 = vunpack.c.h.b16 %v842
        %v932 = vunpack.c.l.b16 %v843
        %v933 = vunpack.c.l.b16 %v844
        %v934 = vunpack.c.h.b16 %v844
        %v935 = vunpack.c.l.b16 %v845
        %v936 = vunpack.c.l.b16 %v846
        %v937 = vunpack.c.h.b16 %v846
        %v938 = vunpack.c.l.b16 %v847
        %v939 = vunpack.c.l.b16 %v848
        %v940 = vunpack.c.h.b16 %v848
        %v941 = vunpack.c.l.b16 %v849
        %v942 = vunpack.c.l.b16 %v850
        %v943 = vunpack.c.h.b16 %v850
        %v944 = vunpack.c.l.b16 %v851
        %v945 = vunpack.c.l.b16 %v852
        %v946 = vunpack.c.h.b16 %v852
        %v947 = vunpack.c.l.b16 %v853
        %v948 = vunpack.c.l.b16 %v854
        %v949 = vunpack.c.h.b16 %v854
        %v950 = vunpack.c.l.b16 %v855
        %v951 = vunpack.c.l.b16 %v856
        %v952 = vunpack.c.h.b16 %v856
        %v953 = vunpack.c.l.b16 %v857
        %v954 = vunpack.c.l.b16 %v858
        %v955 = vunpack.c.h.b16 %v858
        %v956 = vunpack.c.l.b16 %v859
        %v957 = vpack.c.b16 %v912, %v909
        %v958 = vpack.c.b16 %v913, %v910
        %v959 = vpack.c.b16 %v914, %v911
        %v960 = vpack.c.b16 %v918, %v915
        %v961 = vpack.c.b16 %v919, %v916
        %v962 = vpack.c.b16 %v920, %v917
        %v963 = vpack.c.b16 %v924, %v921
        %v964 = vpack.c.b16 %v925, %v922
        %v965 = vpack.c.b16 %v926, %v923
        %v966 = vpack.c.b16 %v930, %v927
        %v967 = vpack.c.b16 %v931, %v928
        %v968 = vpack.c.b16 %v932, %v929
        %v969 = vpack.c.b16 %v936, %v933
        %v970 = vpack.c.b16 %v937, %v934
        %v971 = vpack.c.b16 %v938, %v935
        %v972 = vpack.c.b16 %v942, %v939
        %v973 = vpack.c.b16 %v943, %v940
        %v974 = vpack.c.b16 %v944, %v941
        %v975 = vpack.c.b16 %v948, %v945
        %v976 = vpack.c.b16 %v949, %v946
        %v977 = vpack.c.b16 %v950, %v947
        %v978 = vpack.c.b16 %v954, %v951
        %v979 = vpack.c.b16 %v955, %v952
        %v980 = vpack.c.b16 %v956, %v953
        %1005 = vmatprep.subr.bf16.mxu0 %v958
        %1006 = vmatpush1.bf16.msra.mxu0 %v957
        %1007 = vmatprep.subr.bf16.mxu0 %v961
        %1008 = vmatpush1.bf16.msra.mxu0 %v960
        %1009 = vmatprep.subr.bf16.mxu0 %v964
        %1010 = vmatpush1.bf16.msra.mxu0 %v963
        %1011 = vmatprep.subr.bf16.mxu0 %v967
        %1012 = vmatpush1.bf16.msra.mxu0 %v966
        %1013 = vmatprep.subr.bf16.mxu0 %v970
        %1014 = vmatpush1.bf16.msra.mxu0 %v969
        %1015 = vmatprep.subr.bf16.mxu0 %v973
        %1016 = vmatpush1.bf16.msra.mxu0 %v972
        %1017 = vmatprep.subr.bf16.mxu0 %v976
        %1018 = vmatpush1.bf16.msra.mxu0 %v975
        %1019 = vmatprep.subr.bf16.mxu0 %v979
        %1020 = vmatpush1.bf16.msra.mxu0 %v978
        %1021 = vmatprep.subr.bf16.mxu0 0
        %1022 = vmatpush1.bf16.msra.mxu0 0
        %1023 = vmatprep.subr.bf16.mxu0 0
        %1024 = vmatpush1.bf16.msra.mxu0 0
        %1025 = vmatprep.subr.bf16.mxu0 0
        %1026 = vmatpush1.bf16.msra.mxu0 0
        %1027 = vmatprep.subr.bf16.mxu0 0
        %1028 = vmatpush1.bf16.msra.mxu0 0
        %1029 = vmatprep.subr.bf16.mxu0 0
        %1030 = vmatpush1.bf16.msra.mxu0 0
        %1031 = vmatprep.subr.bf16.mxu0 0
        %1032 = vmatpush1.bf16.msra.mxu0 0
        %1033 = vmatprep.subr.bf16.mxu0 0
        %1034 = vmatpush1.bf16.msra.mxu0 0
        %1035 = vmatprep.subr.bf16.mxu0 0
        %1036 = vmatpush1.bf16.msra.mxu0 0
        %1037 = vmatprep.mubr.bf16.mxu0 0
        %1038 = vmatmul.mubr.bf16.gmra.mrb[0].mxu0 %v826
        %v1039 = vpop.f32.mrb[0].mxu0
        %v1040 = vadd.f32 %v865, %v1039
        %v1041 = vpop.f32.mrb[0].mxu0
        %v1042 = vadd.f32 %v869, %v1041
        %v1043 = vpop.f32.mrb[0].mxu0
        %v1044 = vadd.f32 %v865, %v1043
        %v1045 = vpop.f32.mrb[0].mxu0
        %v1046 = vadd.f32 %v869, %v1045
        %1047 = vmatprep.mubr.bf16.mxu0 0
        %1048 = vmatmul.mubr.bf16.gmra.mrb[0].mxu0 %v827
        %v1049 = vpop.f32.mrb[0].mxu0
        %v1050 = vadd.f32 %v865, %v1049
        %v1051 = vpop.f32.mrb[0].mxu0
        %v1052 = vadd.f32 %v869, %v1051
        %v1053 = vpop.f32.mrb[0].mxu0
        %v1054 = vadd.f32 %v865, %v1053
        %v1055 = vpop.f32.mrb[0].mxu0
        %v1056 = vadd.f32 %v869, %v1055
        %1057 = vdwg.mxu0
        %1058 = vmatprep.subr.bf16.mxu0 0
        %1059 = vmatpush1.bf16.msra.mxu0 %v959
        %1060 = vmatprep.subr.bf16.mxu0 0
        %1061 = vmatpush1.bf16.msra.mxu0 %v962
        %1062 = vmatprep.subr.bf16.mxu0 0
        %1063 = vmatpush1.bf16.msra.mxu0 %v965
        %1064 = vmatprep.subr.bf16.mxu0 0
        %1065 = vmatpush1.bf16.msra.mxu0 %v968
        %1066 = vmatprep.subr.bf16.mxu0 0
        %1067 = vmatpush1.bf16.msra.mxu0 %v971
        %1068 = vmatprep.subr.bf16.mxu0 0
        %1069 = vmatpush1.bf16.msra.mxu0 %v974
        %1070 = vmatprep.subr.bf16.mxu0 0
        %1071 = vmatpush1.bf16.msra.mxu0 %v977
        %1072 = vmatprep.subr.bf16.mxu0 0
        %1073 = vmatpush1.bf16.msra.mxu0 %v980
        %1074 = vmatprep.subr.bf16.mxu0 0
        %1075 = vmatpush1.bf16.msra.mxu0 0
        %1076 = vmatprep.subr.bf16.mxu0 0
        %1077 = vmatpush1.bf16.msra.mxu0 0
        %1078 = vmatprep.subr.bf16.mxu0 0
        %1079 = vmatpush1.bf16.msra.mxu0 0
        %1080 = vmatprep.subr.bf16.mxu0 0
        %1081 = vmatpush1.bf16.msra.mxu0 0
        %1082 = vmatprep.subr.bf16.mxu0 0
        %1083 = vmatpush1.bf16.msra.mxu0 0
        %1084 = vmatprep.subr.bf16.mxu0 0
        %1085 = vmatpush1.bf16.msra.mxu0 0
        %1086 = vmatprep.subr.bf16.mxu0 0
        %1087 = vmatpush1.bf16.msra.mxu0 0
        %1088 = vmatprep.subr.bf16.mxu0 0
        %1089 = vmatpush1.bf16.msra.mxu0 0
        %1090 = vmatprep.mubr.bf16.mxu0 0
        %1091 = vmatmul.mubr.bf16.gmra.mrb[0].mxu0 %v826
        %v1092 = vpop.f32.mrb[0].mxu0
        %v1093 = vadd.f32 %v873, %v1092
        %v1094 = vpop.f32.mrb[0].mxu0
        %v1095 = vpop.f32.mrb[0].mxu0
        %v1096 = vadd.f32 %v873, %v1095
        %v1097 = vpop.f32.mrb[0].mxu0
        %1098 = vmatprep.mubr.bf16.mxu0 0
        %1099 = vmatmul.mubr.bf16.gmra.mrb[0].mxu0 %v827
        %v1100 = vpop.f32.mrb[0].mxu0
        %v1101 = vadd.f32 %v873, %v1100
        %v1102 = vpop.f32.mrb[0].mxu0
        %v1103 = vpop.f32.mrb[0].mxu0
        %v1104 = vadd.f32 %v873, %v1103
        %v1105 = vpop.f32.mrb[0].mxu0
        %1106 = vdwg.mxu0
        %v1107 = vld [vmem:[%s1] sm:$0x1]
        %v1108 = vld [vmem:[%s1 + $0x1] sm:$0x1]
        %v1109 = vld [vmem:[%s1 + $0x2] sm:$0x1]
        %v1110 = vld [vmem:[%s1 + $0x3] sm:$0x1]
        %v1111 = vld [vmem:[%s608] sm:$0xf]
        %v1112 = vld [vmem:[%s608 + $0x4] sm:$0xf]
        %v1113 = vld [vmem:[%s608 + $0x8] sm:$0xf]
        %v1114 = vld [vmem:[%s608 + $0xc] sm:$0xf]
        %v1115 = vld [vmem:[%s608 + $0x10] sm:$0xf]
        %v1116 = vld [vmem:[%s608 + $0x14] sm:$0xf]
        %v1117 = vld [vmem:[%s608 + $0x18] sm:$0xf]
        %v1118 = vld [vmem:[%s608 + $0x1c] sm:$0xf]
        %v1119 = vld [vmem:[%s608 + $0x20] sm:$0xf]
        %v1120 = vld [vmem:[%s608 + $0x24] sm:$0xf]
        %v1121 = vld [vmem:[%s608 + $0x28] sm:$0xf]
        %v1122 = vld [vmem:[%s608 + $0x2c] sm:$0xf]
        %v1123 = vld [vmem:[%s608 + $0x30] sm:$0xf]
        %v1124 = vld [vmem:[%s608 + $0x34] sm:$0xf]
        %v1125 = vld [vmem:[%s608 + $0x38] sm:$0xf]
        %v1126 = vld [vmem:[%s608 + $0x3c] sm:$0xf]
        %v1127 = vpack.c.bf16 %v1040, %v1040
        %v1128 = vpack.c.bf16 %v1044, %v1044
        %v1129 = vpack.c.bf16 %v1050, %v1050
        %v1130 = vpack.c.bf16 %v1054, %v1054
        %v1131 = vpack.c.bf16 %v1042, %v1042
        %v1132 = vpack.c.bf16 %v1046, %v1046
        %v1133 = vpack.c.bf16 %v1052, %v1052
        %v1134 = vpack.c.bf16 %v1056, %v1056
        %v1135 = vpack.c.bf16 %v1093, %v1093
        %v1136 = vpack.c.bf16 %v1096, %v1096
        %v1137 = vpack.c.bf16 %v1101, %v1101
        %v1138 = vpack.c.bf16 %v1104, %v1104
        %vm1139 = vcmask 261120
        %v1141 = vsel %vm1139, %v1127, 0
        %v1144 = vsel %vm1139, %v1131, 0
        %1146 = vmatprep.subr.bf16.mxu0 0
        %1147 = vmatpush1.bf16.xpose.msra.mxu0 %v1144
        %1148 = vmatprep.subr.bf16.mxu0 0
        %1149 = vmatpush1.bf16.xpose.msra.mxu0 0
        %1150 = vmatprep.subr.bf16.mxu0 0
        %1151 = vmatpush1.bf16.xpose.msra.mxu0 0
        %1152 = vmatprep.subr.bf16.mxu0 0
        %1153 = vmatpush1.bf16.xpose.msra.mxu0 0
        %1154 = vmatprep.subr.bf16.mxu0 0
        %1155 = vmatpush1.bf16.xpose.msra.mxu0 0
        %1156 = vmatprep.subr.bf16.mxu0 0
        %1157 = vmatpush1.bf16.xpose.msra.mxu0 0
        %1158 = vmatprep.subr.bf16.mxu0 0
        %1159 = vmatpush1.bf16.xpose.msra.mxu0 0
        %1160 = vmatprep.subr.bf16.mxu0 0
        %1161 = vmatpush1.bf16.xpose.msra.mxu0 0
        %1162 = vmatprep.subr.bf16.mxu0 0
        %1163 = vmatpush1.bf16.xpose.msra.mxu0 0
        %1164 = vmatprep.subr.bf16.mxu0 0
        %1165 = vmatpush1.bf16.xpose.msra.mxu0 0
        %1166 = vmatprep.subr.bf16.mxu0 0
        %1167 = vmatpush1.bf16.xpose.msra.mxu0 0
        %1168 = vmatprep.subr.bf16.mxu0 0
        %1169 = vmatpush1.bf16.xpose.msra.mxu0 0
        %1170 = vmatprep.subr.bf16.mxu0 0
        %1171 = vmatpush1.bf16.xpose.msra.mxu0 0
        %1172 = vmatprep.subr.bf16.mxu0 0
        %1173 = vmatpush1.bf16.xpose.msra.mxu0 0
        %1174 = vmatprep.subr.bf16.mxu0 0
        %1175 = vmatpush1.bf16.xpose.msra.mxu0 0
        %1176 = vmatprep.subr.bf16.mxu0 0
        %1177 = vmatpush1.bf16.xpose.msra.mxu0 0
        %1178 = vmatprep.mubr.bf16.mxu0 0
        %1179 = vmatmul.mubr.bf16.gmra.mrb[0].mxu0 %v1141
        %v1180 = vpop.f32.mrb[0].mxu0
        %v1181 = vadd.f32 0.0, %v1180
        %v1182 = vpop.f32.mrb[0].mxu0
        %v1183 = vpop.f32.mrb[0].mxu0
        %v1184 = vpop.f32.mrb[0].mxu0
        %1185 = vdwg.mxu0
        %v1187 = vsel %vm1139, %v1128, 0
        %v1190 = vsel %vm1139, %v1132, 0
        %1192 = vmatprep.subr.bf16.mxu0 0
        %1193 = vmatpush1.bf16.xpose.msra.mxu0 %v1190
        %1194 = vmatprep.subr.bf16.mxu0 0
        %1195 = vmatpush1.bf16.xpose.msra.mxu0 0
        %1196 = vmatprep.subr.bf16.mxu0 0
        %1197 = vmatpush1.bf16.xpose.msra.mxu0 0
        %1198 = vmatprep.subr.bf16.mxu0 0
        %1199 = vmatpush1.bf16.xpose.msra.mxu0 0
        %1200 = vmatprep.subr.bf16.mxu0 0
        %1201 = vmatpush1.bf16.xpose.msra.mxu0 0
        %1202 = vmatprep.subr.bf16.mxu0 0
        %1203 = vmatpush1.bf16.xpose.msra.mxu0 0
        %1204 = vmatprep.subr.bf16.mxu0 0
        %1205 = vmatpush1.bf16.xpose.msra.mxu0 0
        %1206 = vmatprep.subr.bf16.mxu0 0
        %1207 = vmatpush1.bf16.xpose.msra.mxu0 0
        %1208 = vmatprep.subr.bf16.mxu0 0
        %1209 = vmatpush1.bf16.xpose.msra.mxu0 0
        %1210 = vmatprep.subr.bf16.mxu0 0
        %1211 = vmatpush1.bf16.xpose.msra.mxu0 0
        %1212 = vmatprep.subr.bf16.mxu0 0
        %1213 = vmatpush1.bf16.xpose.msra.mxu0 0
        %1214 = vmatprep.subr.bf16.mxu0 0
        %1215 = vmatpush1.bf16.xpose.msra.mxu0 0
        %1216 = vmatprep.subr.bf16.mxu0 0
        %1217 = vmatpush1.bf16.xpose.msra.mxu0 0
        %1218 = vmatprep.subr.bf16.mxu0 0
        %1219 = vmatpush1.bf16.xpose.msra.mxu0 0
        %1220 = vmatprep.subr.bf16.mxu0 0
        %1221 = vmatpush1.bf16.xpose.msra.mxu0 0
        %1222 = vmatprep.subr.bf16.mxu0 0
        %1223 = vmatpush1.bf16.xpose.msra.mxu0 0
        %1224 = vmatprep.mubr.bf16.mxu0 0
        %1225 = vmatmul.mubr.bf16.gmra.mrb[0].mxu0 %v1187
        %v1226 = vpop.f32.mrb[0].mxu0
        %v1227 = vadd.f32 0.0, %v1226
        %v1228 = vpop.f32.mrb[0].mxu0
        %v1229 = vpop.f32.mrb[0].mxu0
        %v1230 = vpop.f32.mrb[0].mxu0
        %1231 = vdwg.mxu0
        %v1233 = vsel %vm1139, %v1129, 0
        %v1236 = vsel %vm1139, %v1133, 0
        %1238 = vmatprep.subr.bf16.mxu0 0
        %1239 = vmatpush1.bf16.xpose.msra.mxu0 %v1236
        %1240 = vmatprep.subr.bf16.mxu0 0
        %1241 = vmatpush1.bf16.xpose.msra.mxu0 0
        %1242 = vmatprep.subr.bf16.mxu0 0
        %1243 = vmatpush1.bf16.xpose.msra.mxu0 0
        %1244 = vmatprep.subr.bf16.mxu0 0
        %1245 = vmatpush1.bf16.xpose.msra.mxu0 0
        %1246 = vmatprep.subr.bf16.mxu0 0
        %1247 = vmatpush1.bf16.xpose.msra.mxu0 0
        %1248 = vmatprep.subr.bf16.mxu0 0
        %1249 = vmatpush1.bf16.xpose.msra.mxu0 0
        %1250 = vmatprep.subr.bf16.mxu0 0
        %1251 = vmatpush1.bf16.xpose.msra.mxu0 0
        %1252 = vmatprep.subr.bf16.mxu0 0
        %1253 = vmatpush1.bf16.xpose.msra.mxu0 0
        %1254 = vmatprep.subr.bf16.mxu0 0
        %1255 = vmatpush1.bf16.xpose.msra.mxu0 0
        %1256 = vmatprep.subr.bf16.mxu0 0
        %1257 = vmatpush1.bf16.xpose.msra.mxu0 0
        %1258 = vmatprep.subr.bf16.mxu0 0
        %1259 = vmatpush1.bf16.xpose.msra.mxu0 0
        %1260 = vmatprep.subr.bf16.mxu0 0
        %1261 = vmatpush1.bf16.xpose.msra.mxu0 0
        %1262 = vmatprep.subr.bf16.mxu0 0
        %1263 = vmatpush1.bf16.xpose.msra.mxu0 0
        %1264 = vmatprep.subr.bf16.mxu0 0
        %1265 = vmatpush1.bf16.xpose.msra.mxu0 0
        %1266 = vmatprep.subr.bf16.mxu0 0
        %1267 = vmatpush1.bf16.xpose.msra.mxu0 0
        %1268 = vmatprep.subr.bf16.mxu0 0
        %1269 = vmatpush1.bf16.xpose.msra.mxu0 0
        %1270 = vmatprep.mubr.bf16.mxu0 0
        %1271 = vmatmul.mubr.bf16.gmra.mrb[0].mxu0 %v1233
        %v1272 = vpop.f32.mrb[0].mxu0
        %v1273 = vadd.f32 0.0, %v1272
        %v1274 = vpop.f32.mrb[0].mxu0
        %v1275 = vpop.f32.mrb[0].mxu0
        %v1276 = vpop.f32.mrb[0].mxu0
        %1277 = vdwg.mxu0
        %v1279 = vsel %vm1139, %v1130, 0
        %v1282 = vsel %vm1139, %v1134, 0
        %1284 = vmatprep.subr.bf16.mxu0 0
        %1285 = vmatpush1.bf16.xpose.msra.mxu0 %v1282
        %1286 = vmatprep.subr.bf16.mxu0 0
        %1287 = vmatpush1.bf16.xpose.msra.mxu0 0
        %1288 = vmatprep.subr.bf16.mxu0 0
        %1289 = vmatpush1.bf16.xpose.msra.mxu0 0
        %1290 = vmatprep.subr.bf16.mxu0 0
        %1291 = vmatpush1.bf16.xpose.msra.mxu0 0
        %1292 = vmatprep.subr.bf16.mxu0 0
        %1293 = vmatpush1.bf16.xpose.msra.mxu0 0
        %1294 = vmatprep.subr.bf16.mxu0 0
        %1295 = vmatpush1.bf16.xpose.msra.mxu0 0
        %1296 = vmatprep.subr.bf16.mxu0 0
        %1297 = vmatpush1.bf16.xpose.msra.mxu0 0
        %1298 = vmatprep.subr.bf16.mxu0 0
        %1299 = vmatpush1.bf16.xpose.msra.mxu0 0
        %1300 = vmatprep.subr.bf16.mxu0 0
        %1301 = vmatpush1.bf16.xpose.msra.mxu0 0
        %1302 = vmatprep.subr.bf16.mxu0 0
        %1303 = vmatpush1.bf16.xpose.msra.mxu0 0
        %1304 = vmatprep.subr.bf16.mxu0 0
        %1305 = vmatpush1.bf16.xpose.msra.mxu0 0
        %1306 = vmatprep.subr.bf16.mxu0 0
        %1307 = vmatpush1.bf16.xpose.msra.mxu0 0
        %1308 = vmatprep.subr.bf16.mxu0 0
        %1309 = vmatpush1.bf16.xpose.msra.mxu0 0
        %1310 = vmatprep.subr.bf16.mxu0 0
        %1311 = vmatpush1.bf16.xpose.msra.mxu0 0
        %1312 = vmatprep.subr.bf16.mxu0 0
        %1313 = vmatpush1.bf16.xpose.msra.mxu0 0
        %1314 = vmatprep.subr.bf16.mxu0 0
        %1315 = vmatpush1.bf16.xpose.msra.mxu0 0
        %1316 = vmatprep.mubr.bf16.mxu0 0
        %1317 = vmatmul.mubr.bf16.gmra.mrb[0].mxu0 %v1279
        %v1318 = vpop.f32.mrb[0].mxu0
        %v1319 = vadd.f32 0.0, %v1318
        %v1320 = vpop.f32.mrb[0].mxu0
        %v1321 = vpop.f32.mrb[0].mxu0
        %v1322 = vpop.f32.mrb[0].mxu0
        %1323 = vdwg.mxu0
        %v1324 = vmul.f32 %v1181, 0.17677669
        %v1325 = vmul.f32 %v1227, 0.17677669
        %v1326 = vmul.f32 %v1273, 0.17677669
        %v1327 = vmul.f32 %v1319, 0.17677669
        %v1332 = vlaneseq
        %v1333 = vshrl.u32 %v1332, 7
        %v1334 = vsub.s32 0, %v1333
        %v1335 = vrot.slane %v1107, %v1334
        %v1336 = vlaneseq
        %v1337 = vshrl.u32 %v1336, 7
        %v1338 = vsub.s32 0, %v1337
        %v1339 = vrot.slane %v1108, %v1338
        %v1340 = vlaneseq
        %v1341 = vshrl.u32 %v1340, 7
        %v1342 = vsub.s32 0, %v1341
        %v1343 = vrot.slane %v1109, %v1342
        %v1344 = vlaneseq
        %v1345 = vshrl.u32 %v1344, 7
        %v1346 = vsub.s32 0, %v1345
        %v1347 = vrot.slane %v1110, %v1346
        %v1352 = vadd.f32 %v1324, %v1335
        %v1353 = vadd.f32 %v1325, %v1339
        %v1354 = vadd.f32 %v1326, %v1343
        %v1355 = vadd.f32 %v1327, %v1347
        %vm1356 = vcmask 64512
        %v1357 = vsel %vm1356, %v1352, -inf
        %1358 = vmax.xlane.f32.xlu0 %v1357
        %v1359 = vpop.xlane.xlu0 %1358
        %v1360 = vsel %vm1356, %v1353, -inf
        %1361 = vmax.xlane.f32.xlu0 %v1360
        %v1362 = vpop.xlane.xlu0 %1361
        %v1363 = vsel %vm1356, %v1354, -inf
        %1364 = vmax.xlane.f32.xlu0 %v1363
        %v1365 = vpop.xlane.xlu0 %1364
        %v1366 = vsel %vm1356, %v1355, -inf
        %1367 = vmax.xlane.f32.xlu0 %v1366
        %v1368 = vpop.xlane.xlu0 %1367
        %v1369 = vsub.f32 %v1352, %v1359
        %v1370 = vsub.f32 %v1353, %v1362
        %v1371 = vsub.f32 %v1354, %v1365
        %v1372 = vsub.f32 %v1355, %v1368
        %v1373 = vmul.f32 %v1369, 1.442695
        %v1374 = vpow.pop %v1373
        %v1375 = vmul.f32 %v1370, 1.442695
        %v1376 = vpow.pop %v1375
        %v1377 = vmul.f32 %v1371, 1.442695
        %v1378 = vpow.pop %v1377
        %v1379 = vmul.f32 %v1372, 1.442695
        %v1380 = vpow.pop %v1379
        %v1381 = vsel %vm1356, %v1374, 0.0
        %1382 = vadd.xlane.f32.xlu0 %v1381
        %v1383 = vpop.xlane.xlu0 %1382
        %v1384 = vsel %vm1356, %v1376, 0.0
        %1385 = vadd.xlane.f32.xlu0 %v1384
        %v1386 = vpop.xlane.xlu0 %1385
        %v1387 = vsel %vm1356, %v1378, 0.0
        %1388 = vadd.xlane.f32.xlu0 %v1387
        %v1389 = vpop.xlane.xlu0 %1388
        %v1390 = vsel %vm1356, %v1380, 0.0
        %1391 = vadd.xlane.f32.xlu0 %v1390
        %v1392 = vpop.xlane.xlu0 %1391
        %v1393 = vrcp.pop %v1383
        %v1394 = vrcp.pop %v1386
        %v1395 = vrcp.pop %v1389
        %v1396 = vrcp.pop %v1392
        %v1397 = vmul.f32 %v1374, %v1393
        %v1398 = vmul.f32 %v1376, %v1394
        %v1399 = vmul.f32 %v1378, %v1395
        %v1400 = vmul.f32 %v1380, %v1396
        %v1401 = vpack.c.bf16 %v1397, %v1397
        %v1402 = vpack.c.bf16 %v1398, %v1398
        %v1403 = vpack.c.bf16 %v1399, %v1399
        %v1404 = vpack.c.bf16 %v1400, %v1400
        %v1406 = vsel %vm1356, %v1401, 0
        %vm1408 = vcmask 1043456
        %v1410 = vsel %vm1408, %v1135, 0
        %1412 = vmatprep.subr.bf16.mxu0 0
        %1413 = vmatpush1.bf16.msra.mxu0 %v1410
        %1414 = vmatprep.subr.bf16.mxu0 0
        %1415 = vmatpush1.bf16.msra.mxu0 0
        %1416 = vmatprep.subr.bf16.mxu0 0
        %1417 = vmatpush1.bf16.msra.mxu0 0
        %1418 = vmatprep.subr.bf16.mxu0 0
        %1419 = vmatpush1.bf16.msra.mxu0 0
        %1420 = vmatprep.subr.bf16.mxu0 0
        %1421 = vmatpush1.bf16.msra.mxu0 0
        %1422 = vmatprep.subr.bf16.mxu0 0
        %1423 = vmatpush1.bf16.msra.mxu0 0
        %1424 = vmatprep.subr.bf16.mxu0 0
        %1425 = vmatpush1.bf16.msra.mxu0 0
        %1426 = vmatprep.subr.bf16.mxu0 0
        %1427 = vmatpush1.bf16.msra.mxu0 0
        %1428 = vmatprep.subr.bf16.mxu0 0
        %1429 = vmatpush1.bf16.msra.mxu0 0
        %1430 = vmatprep.subr.bf16.mxu0 0
        %1431 = vmatpush1.bf16.msra.mxu0 0
        %1432 = vmatprep.subr.bf16.mxu0 0
        %1433 = vmatpush1.bf16.msra.mxu0 0
        %1434 = vmatprep.subr.bf16.mxu0 0
        %1435 = vmatpush1.bf16.msra.mxu0 0
        %1436 = vmatprep.subr.bf16.mxu0 0
        %1437 = vmatpush1.bf16.msra.mxu0 0
        %1438 = vmatprep.subr.bf16.mxu0 0
        %1439 = vmatpush1.bf16.msra.mxu0 0
        %1440 = vmatprep.subr.bf16.mxu0 0
        %1441 = vmatpush1.bf16.msra.mxu0 0
        %1442 = vmatprep.subr.bf16.mxu0 0
        %1443 = vmatpush1.bf16.msra.mxu0 0
        %1444 = vmatprep.mubr.bf16.mxu0 0
        %1445 = vmatmul.mubr.bf16.gmra.mrb[0].mxu0 %v1406
        %v1446 = vpop.f32.mrb[0].mxu0
        %v1447 = vadd.f32 0.0, %v1446
        %v1448 = vpop.f32.mrb[0].mxu0
        %v1449 = vpop.f32.mrb[0].mxu0
        %v1450 = vpop.f32.mrb[0].mxu0
        %1451 = vdwg.mxu0
        %v1453 = vsel %vm1356, %v1402, 0
        %v1456 = vsel %vm1408, %v1136, 0
        %1458 = vmatprep.subr.bf16.mxu0 0
        %1459 = vmatpush1.bf16.msra.mxu0 %v1456
        %1460 = vmatprep.subr.bf16.mxu0 0
        %1461 = vmatpush1.bf16.msra.mxu0 0
        %1462 = vmatprep.subr.bf16.mxu0 0
        %1463 = vmatpush1.bf16.msra.mxu0 0
        %1464 = vmatprep.subr.bf16.mxu0 0
        %1465 = vmatpush1.bf16.msra.mxu0 0
        %1466 = vmatprep.subr.bf16.mxu0 0
        %1467 = vmatpush1.bf16.msra.mxu0 0
        %1468 = vmatprep.subr.bf16.mxu0 0
        %1469 = vmatpush1.bf16.msra.mxu0 0
        %1470 = vmatprep.subr.bf16.mxu0 0
        %1471 = vmatpush1.bf16.msra.mxu0 0
        %1472 = vmatprep.subr.bf16.mxu0 0
        %1473 = vmatpush1.bf16.msra.mxu0 0
        %1474 = vmatprep.subr.bf16.mxu0 0
        %1475 = vmatpush1.bf16.msra.mxu0 0
        %1476 = vmatprep.subr.bf16.mxu0 0
        %1477 = vmatpush1.bf16.msra.mxu0 0
        %1478 = vmatprep.subr.bf16.mxu0 0
        %1479 = vmatpush1.bf16.msra.mxu0 0
        %1480 = vmatprep.subr.bf16.mxu0 0
        %1481 = vmatpush1.bf16.msra.mxu0 0
        %1482 = vmatprep.subr.bf16.mxu0 0
        %1483 = vmatpush1.bf16.msra.mxu0 0
        %1484 = vmatprep.subr.bf16.mxu0 0
        %1485 = vmatpush1.bf16.msra.mxu0 0
        %1486 = vmatprep.subr.bf16.mxu0 0
        %1487 = vmatpush1.bf16.msra.mxu0 0
        %1488 = vmatprep.subr.bf16.mxu0 0
        %1489 = vmatpush1.bf16.msra.mxu0 0
        %1490 = vmatprep.mubr.bf16.mxu0 0
        %1491 = vmatmul.mubr.bf16.gmra.mrb[0].mxu0 %v1453
        %v1492 = vpop.f32.mrb[0].mxu0
        %v1493 = vadd.f32 0.0, %v1492
        %v1494 = vpop.f32.mrb[0].mxu0
        %v1495 = vpop.f32.mrb[0].mxu0
        %v1496 = vpop.f32.mrb[0].mxu0
        %1497 = vdwg.mxu0
        %v1499 = vsel %vm1356, %v1403, 0
        %v1502 = vsel %vm1408, %v1137, 0
        %1504 = vmatprep.subr.bf16.mxu0 0
        %1505 = vmatpush1.bf16.msra.mxu0 %v1502
        %1506 = vmatprep.subr.bf16.mxu0 0
        %1507 = vmatpush1.bf16.msra.mxu0 0
        %1508 = vmatprep.subr.bf16.mxu0 0
        %1509 = vmatpush1.bf16.msra.mxu0 0
        %1510 = vmatprep.subr.bf16.mxu0 0
        %1511 = vmatpush1.bf16.msra.mxu0 0
        %1512 = vmatprep.subr.bf16.mxu0 0
        %1513 = vmatpush1.bf16.msra.mxu0 0
        %1514 = vmatprep.subr.bf16.mxu0 0
        %1515 = vmatpush1.bf16.msra.mxu0 0
        %1516 = vmatprep.subr.bf16.mxu0 0
        %1517 = vmatpush1.bf16.msra.mxu0 0
        %1518 = vmatprep.subr.bf16.mxu0 0
        %1519 = vmatpush1.bf16.msra.mxu0 0
        %1520 = vmatprep.subr.bf16.mxu0 0
        %1521 = vmatpush1.bf16.msra.mxu0 0
        %1522 = vmatprep.subr.bf16.mxu0 0
        %1523 = vmatpush1.bf16.msra.mxu0 0
        %1524 = vmatprep.subr.bf16.mxu0 0
        %1525 = vmatpush1.bf16.msra.mxu0 0
        %1526 = vmatprep.subr.bf16.mxu0 0
        %1527 = vmatpush1.bf16.msra.mxu0 0
        %1528 = vmatprep.subr.bf16.mxu0 0
        %1529 = vmatpush1.bf16.msra.mxu0 0
        %1530 = vmatprep.subr.bf16.mxu0 0
        %1531 = vmatpush1.bf16.msra.mxu0 0
        %1532 = vmatprep.subr.bf16.mxu0 0
        %1533 = vmatpush1.bf16.msra.mxu0 0
        %1534 = vmatprep.subr.bf16.mxu0 0
        %1535 = vmatpush1.bf16.msra.mxu0 0
        %1536 = vmatprep.mubr.bf16.mxu0 0
        %1537 = vmatmul.mubr.bf16.gmra.mrb[0].mxu0 %v1499
        %v1538 = vpop.f32.mrb[0].mxu0
        %v1539 = vadd.f32 0.0, %v1538
        %v1540 = vpop.f32.mrb[0].mxu0
        %v1541 = vpop.f32.mrb[0].mxu0
        %v1542 = vpop.f32.mrb[0].mxu0
        %1543 = vdwg.mxu0
        %v1545 = vsel %vm1356, %v1404, 0
        %v1548 = vsel %vm1408, %v1138, 0
        %1550 = vmatprep.subr.bf16.mxu0 0
        %1551 = vmatpush1.bf16.msra.mxu0 %v1548
        %1552 = vmatprep.subr.bf16.mxu0 0
        %1553 = vmatpush1.bf16.msra.mxu0 0
        %1554 = vmatprep.subr.bf16.mxu0 0
        %1555 = vmatpush1.bf16.msra.mxu0 0
        %1556 = vmatprep.subr.bf16.mxu0 0
        %1557 = vmatpush1.bf16.msra.mxu0 0
        %1558 = vmatprep.subr.bf16.mxu0 0
        %1559 = vmatpush1.bf16.msra.mxu0 0
        %1560 = vmatprep.subr.bf16.mxu0 0
        %1561 = vmatpush1.bf16.msra.mxu0 0
        %1562 = vmatprep.subr.bf16.mxu0 0
        %1563 = vmatpush1.bf16.msra.mxu0 0
        %1564 = vmatprep.subr.bf16.mxu0 0
        %1565 = vmatpush1.bf16.msra.mxu0 0
        %1566 = vmatprep.subr.bf16.mxu0 0
        %1567 = vmatpush1.bf16.msra.mxu0 0
        %1568 = vmatprep.subr.bf16.mxu0 0
        %1569 = vmatpush1.bf16.msra.mxu0 0
        %1570 = vmatprep.subr.bf16.mxu0 0
        %1571 = vmatpush1.bf16.msra.mxu0 0
        %1572 = vmatprep.subr.bf16.mxu0 0
        %1573 = vmatpush1.bf16.msra.mxu0 0
        %1574 = vmatprep.subr.bf16.mxu0 0
        %1575 = vmatpush1.bf16.msra.mxu0 0
        %1576 = vmatprep.subr.bf16.mxu0 0
        %1577 = vmatpush1.bf16.msra.mxu0 0
        %1578 = vmatprep.subr.bf16.mxu0 0
        %1579 = vmatpush1.bf16.msra.mxu0 0
        %1580 = vmatprep.subr.bf16.mxu0 0
        %1581 = vmatpush1.bf16.msra.mxu0 0
        %1582 = vmatprep.mubr.bf16.mxu0 0
        %1583 = vmatmul.mubr.bf16.gmra.mrb[0].mxu0 %v1545
        %v1584 = vpop.f32.mrb[0].mxu0
        %v1585 = vadd.f32 0.0, %v1584
        %v1586 = vpop.f32.mrb[0].mxu0
        %v1587 = vpop.f32.mrb[0].mxu0
        %v1588 = vpop.f32.mrb[0].mxu0
        %1589 = vdwg.mxu0
        %v1590 = vpack.c.bf16 %v1493, %v1447
        %v1591 = vpack.c.bf16 %v1585, %v1539
        %1593 = vrot.lane.b32.xlu0 %v1127, 96
        %v1594 = vpop.permute.xlu0 %1593
        %1596 = vrot.lane.b32.xlu0 %v1131, 96
        %v1597 = vpop.permute.xlu0 %1596
        %v1599 = vsel %vm1139, %v1594, 0
        %v1602 = vsel %vm1139, %v1597, 0
        %1604 = vmatprep.subr.bf16.mxu0 0
        %1605 = vmatpush1.bf16.xpose.msra.mxu0 %v1602
        %1606 = vmatprep.subr.bf16.mxu0 0
        %1607 = vmatpush1.bf16.xpose.msra.mxu0 0
        %1608 = vmatprep.subr.bf16.mxu0 0
        %1609 = vmatpush1.bf16.xpose.msra.mxu0 0
        %1610 = vmatprep.subr.bf16.mxu0 0
        %1611 = vmatpush1.bf16.xpose.msra.mxu0 0
        %1612 = vmatprep.subr.bf16.mxu0 0
        %1613 = vmatpush1.bf16.xpose.msra.mxu0 0
        %1614 = vmatprep.subr.bf16.mxu0 0
        %1615 = vmatpush1.bf16.xpose.msra.mxu0 0
        %1616 = vmatprep.subr.bf16.mxu0 0
        %1617 = vmatpush1.bf16.xpose.msra.mxu0 0
        %1618 = vmatprep.subr.bf16.mxu0 0
        %1619 = vmatpush1.bf16.xpose.msra.mxu0 0
        %1620 = vmatprep.subr.bf16.mxu0 0
        %1621 = vmatpush1.bf16.xpose.msra.mxu0 0
        %1622 = vmatprep.subr.bf16.mxu0 0
        %1623 = vmatpush1.bf16.xpose.msra.mxu0 0
        %1624 = vmatprep.subr.bf16.mxu0 0
        %1625 = vmatpush1.bf16.xpose.msra.mxu0 0
        %1626 = vmatprep.subr.bf16.mxu0 0
        %1627 = vmatpush1.bf16.xpose.msra.mxu0 0
        %1628 = vmatprep.subr.bf16.mxu0 0
        %1629 = vmatpush1.bf16.xpose.msra.mxu0 0
        %1630 = vmatprep.subr.bf16.mxu0 0
        %1631 = vmatpush1.bf16.xpose.msra.mxu0 0
        %1632 = vmatprep.subr.bf16.mxu0 0
        %1633 = vmatpush1.bf16.xpose.msra.mxu0 0
        %1634 = vmatprep.subr.bf16.mxu0 0
        %1635 = vmatpush1.bf16.xpose.msra.mxu0 0
        %1636 = vmatprep.mubr.bf16.mxu0 0
        %1637 = vmatmul.mubr.bf16.gmra.mrb[0].mxu0 %v1599
        %v1638 = vpop.f32.mrb[0].mxu0
        %v1639 = vadd.f32 0.0, %v1638
        %v1640 = vpop.f32.mrb[0].mxu0
        %v1641 = vpop.f32.mrb[0].mxu0
        %v1642 = vpop.f32.mrb[0].mxu0
        %1643 = vdwg.mxu0
        %1645 = vrot.lane.b32.xlu0 %v1128, 96
        %v1646 = vpop.permute.xlu0 %1645
        %1648 = vrot.lane.b32.xlu0 %v1132, 96
        %v1649 = vpop.permute.xlu0 %1648
        %v1651 = vsel %vm1139, %v1646, 0
        %v1654 = vsel %vm1139, %v1649, 0
        %1656 = vmatprep.subr.bf16.mxu0 0
        %1657 = vmatpush1.bf16.xpose.msra.mxu0 %v1654
        %1658 = vmatprep.subr.bf16.mxu0 0
        %1659 = vmatpush1.bf16.xpose.msra.mxu0 0
        %1660 = vmatprep.subr.bf16.mxu0 0
        %1661 = vmatpush1.bf16.xpose.msra.mxu0 0
        %1662 = vmatprep.subr.bf16.mxu0 0
        %1663 = vmatpush1.bf16.xpose.msra.mxu0 0
        %1664 = vmatprep.subr.bf16.mxu0 0
        %1665 = vmatpush1.bf16.xpose.msra.mxu0 0
        %1666 = vmatprep.subr.bf16.mxu0 0
        %1667 = vmatpush1.bf16.xpose.msra.mxu0 0
        %1668 = vmatprep.subr.bf16.mxu0 0
        %1669 = vmatpush1.bf16.xpose.msra.mxu0 0
        %1670 = vmatprep.subr.bf16.mxu0 0
        %1671 = vmatpush1.bf16.xpose.msra.mxu0 0
        %1672 = vmatprep.subr.bf16.mxu0 0
        %1673 = vmatpush1.bf16.xpose.msra.mxu0 0
        %1674 = vmatprep.subr.bf16.mxu0 0
        %1675 = vmatpush1.bf16.xpose.msra.mxu0 0
        %1676 = vmatprep.subr.bf16.mxu0 0
        %1677 = vmatpush1.bf16.xpose.msra.mxu0 0
        %1678 = vmatprep.subr.bf16.mxu0 0
        %1679 = vmatpush1.bf16.xpose.msra.mxu0 0
        %1680 = vmatprep.subr.bf16.mxu0 0
        %1681 = vmatpush1.bf16.xpose.msra.mxu0 0
        %1682 = vmatprep.subr.bf16.mxu0 0
        %1683 = vmatpush1.bf16.xpose.msra.mxu0 0
        %1684 = vmatprep.subr.bf16.mxu0 0
        %1685 = vmatpush1.bf16.xpose.msra.mxu0 0
        %1686 = vmatprep.subr.bf16.mxu0 0
        %1687 = vmatpush1.bf16.xpose.msra.mxu0 0
        %1688 = vmatprep.mubr.bf16.mxu0 0
        %1689 = vmatmul.mubr.bf16.gmra.mrb[0].mxu0 %v1651
        %v1690 = vpop.f32.mrb[0].mxu0
        %v1691 = vadd.f32 0.0, %v1690
        %v1692 = vpop.f32.mrb[0].mxu0
        %v1693 = vpop.f32.mrb[0].mxu0
        %v1694 = vpop.f32.mrb[0].mxu0
        %1695 = vdwg.mxu0
        %1697 = vrot.lane.b32.xlu0 %v1129, 96
        %v1698 = vpop.permute.xlu0 %1697
        %1700 = vrot.lane.b32.xlu0 %v1133, 96
        %v1701 = vpop.permute.xlu0 %1700
        %v1703 = vsel %vm1139, %v1698, 0
        %v1706 = vsel %vm1139, %v1701, 0
        %1708 = vmatprep.subr.bf16.mxu0 0
        %1709 = vmatpush1.bf16.xpose.msra.mxu0 %v1706
        %1710 = vmatprep.subr.bf16.mxu0 0
        %1711 = vmatpush1.bf16.xpose.msra.mxu0 0
        %1712 = vmatprep.subr.bf16.mxu0 0
        %1713 = vmatpush1.bf16.xpose.msra.mxu0 0
        %1714 = vmatprep.subr.bf16.mxu0 0
        %1715 = vmatpush1.bf16.xpose.msra.mxu0 0
        %1716 = vmatprep.subr.bf16.mxu0 0
        %1717 = vmatpush1.bf16.xpose.msra.mxu0 0
        %1718 = vmatprep.subr.bf16.mxu0 0
        %1719 = vmatpush1.bf16.xpose.msra.mxu0 0
        %1720 = vmatprep.subr.bf16.mxu0 0
        %1721 = vmatpush1.bf16.xpose.msra.mxu0 0
        %1722 = vmatprep.subr.bf16.mxu0 0
        %1723 = vmatpush1.bf16.xpose.msra.mxu0 0
        %1724 = vmatprep.subr.bf16.mxu0 0
        %1725 = vmatpush1.bf16.xpose.msra.mxu0 0
        %1726 = vmatprep.subr.bf16.mxu0 0
        %1727 = vmatpush1.bf16.xpose.msra.mxu0 0
        %1728 = vmatprep.subr.bf16.mxu0 0
        %1729 = vmatpush1.bf16.xpose.msra.mxu0 0
        %1730 = vmatprep.subr.bf16.mxu0 0
        %1731 = vmatpush1.bf16.xpose.msra.mxu0 0
        %1732 = vmatprep.subr.bf16.mxu0 0
        %1733 = vmatpush1.bf16.xpose.msra.mxu0 0
        %1734 = vmatprep.subr.bf16.mxu0 0
        %1735 = vmatpush1.bf16.xpose.msra.mxu0 0
        %1736 = vmatprep.subr.bf16.mxu0 0
        %1737 = vmatpush1.bf16.xpose.msra.mxu0 0
        %1738 = vmatprep.subr.bf16.mxu0 0
        %1739 = vmatpush1.bf16.xpose.msra.mxu0 0
        %1740 = vmatprep.mubr.bf16.mxu0 0
        %1741 = vmatmul.mubr.bf16.gmra.mrb[0].mxu0 %v1703
        %v1742 = vpop.f32.mrb[0].mxu0
        %v1743 = vadd.f32 0.0, %v1742
        %v1744 = vpop.f32.mrb[0].mxu0
        %v1745 = vpop.f32.mrb[0].mxu0
        %v1746 = vpop.f32.mrb[0].mxu0
        %1747 = vdwg.mxu0
        %1749 = vrot.lane.b32.xlu0 %v1130, 96
        %v1750 = vpop.permute.xlu0 %1749
        %1752 = vrot.lane.b32.xlu0 %v1134, 96
        %v1753 = vpop.permute.xlu0 %1752
        %v1755 = vsel %vm1139, %v1750, 0
        %v1758 = vsel %vm1139, %v1753, 0
        %1760 = vmatprep.subr.bf16.mxu0 0
        %1761 = vmatpush1.bf16.xpose.msra.mxu0 %v1758
        %1762 = vmatprep.subr.bf16.mxu0 0
        %1763 = vmatpush1.bf16.xpose.msra.mxu0 0
        %1764 = vmatprep.subr.bf16.mxu0 0
        %1765 = vmatpush1.bf16.xpose.msra.mxu0 0
        %1766 = vmatprep.subr.bf16.mxu0 0
        %1767 = vmatpush1.bf16.xpose.msra.mxu0 0
        %1768 = vmatprep.subr.bf16.mxu0 0
        %1769 = vmatpush1.bf16.xpose.msra.mxu0 0
        %1770 = vmatprep.subr.bf16.mxu0 0
        %1771 = vmatpush1.bf16.xpose.msra.mxu0 0
        %1772 = vmatprep.subr.bf16.mxu0 0
        %1773 = vmatpush1.bf16.xpose.msra.mxu0 0
        %1774 = vmatprep.subr.bf16.mxu0 0
        %1775 = vmatpush1.bf16.xpose.msra.mxu0 0
        %1776 = vmatprep.subr.bf16.mxu0 0
        %1777 = vmatpush1.bf16.xpose.msra.mxu0 0
        %1778 = vmatprep.subr.bf16.mxu0 0
        %1779 = vmatpush1.bf16.xpose.msra.mxu0 0
        %1780 = vmatprep.subr.bf16.mxu0 0
        %1781 = vmatpush1.bf16.xpose.msra.mxu0 0
        %1782 = vmatprep.subr.bf16.mxu0 0
        %1783 = vmatpush1.bf16.xpose.msra.mxu0 0
        %1784 = vmatprep.subr.bf16.mxu0 0
        %1785 = vmatpush1.bf16.xpose.msra.mxu0 0
        %1786 = vmatprep.subr.bf16.mxu0 0
        %1787 = vmatpush1.bf16.xpose.msra.mxu0 0
        %1788 = vmatprep.subr.bf16.mxu0 0
        %1789 = vmatpush1.bf16.xpose.msra.mxu0 0
        %1790 = vmatprep.subr.bf16.mxu0 0
        %1791 = vmatpush1.bf16.xpose.msra.mxu0 0
        %1792 = vmatprep.mubr.bf16.mxu0 0
        %1793 = vmatmul.mubr.bf16.gmra.mrb[0].mxu0 %v1755
        %v1794 = vpop.f32.mrb[0].mxu0
        %v1795 = vadd.f32 0.0, %v1794
        %v1796 = vpop.f32.mrb[0].mxu0
        %v1797 = vpop.f32.mrb[0].mxu0
        %v1798 = vpop.f32.mrb[0].mxu0
        %1799 = vdwg.mxu0
        %v1800 = vmul.f32 %v1639, 0.17677669
        %v1801 = vmul.f32 %v1691, 0.17677669
        %v1802 = vmul.f32 %v1743, 0.17677669
        %v1803 = vmul.f32 %v1795, 0.17677669
        %v1804 = vadd.f32 %v1800, %v1335
        %v1805 = vadd.f32 %v1801, %v1339
        %v1806 = vadd.f32 %v1802, %v1343
        %v1807 = vadd.f32 %v1803, %v1347
        %v1808 = vsel %vm1356, %v1804, -inf
        %1809 = vmax.xlane.f32.xlu0 %v1808
        %v1810 = vpop.xlane.xlu0 %1809
        %v1811 = vsel %vm1356, %v1805, -inf
        %1812 = vmax.xlane.f32.xlu0 %v1811
        %v1813 = vpop.xlane.xlu0 %1812
        %v1814 = vsel %vm1356, %v1806, -inf
        %1815 = vmax.xlane.f32.xlu0 %v1814
        %v1816 = vpop.xlane.xlu0 %1815
        %v1817 = vsel %vm1356, %v1807, -inf
        %1818 = vmax.xlane.f32.xlu0 %v1817
        %v1819 = vpop.xlane.xlu0 %1818
        %v1820 = vsub.f32 %v1804, %v1810
        %v1821 = vsub.f32 %v1805, %v1813
        %v1822 = vsub.f32 %v1806, %v1816
        %v1823 = vsub.f32 %v1807, %v1819
        %v1824 = vmul.f32 %v1820, 1.442695
        %v1825 = vpow.pop %v1824
        %v1826 = vmul.f32 %v1821, 1.442695
        %v1827 = vpow.pop %v1826
        %v1828 = vmul.f32 %v1822, 1.442695
        %v1829 = vpow.pop %v1828
        %v1830 = vmul.f32 %v1823, 1.442695
        %v1831 = vpow.pop %v1830
        %v1832 = vsel %vm1356, %v1825, 0.0
        %1833 = vadd.xlane.f32.xlu0 %v1832
        %v1834 = vpop.xlane.xlu0 %1833
        %v1835 = vsel %vm1356, %v1827, 0.0
        %1836 = vadd.xlane.f32.xlu0 %v1835
        %v1837 = vpop.xlane.xlu0 %1836
        %v1838 = vsel %vm1356, %v1829, 0.0
        %1839 = vadd.xlane.f32.xlu0 %v1838
        %v1840 = vpop.xlane.xlu0 %1839
        %v1841 = vsel %vm1356, %v1831, 0.0
        %1842 = vadd.xlane.f32.xlu0 %v1841
        %v1843 = vpop.xlane.xlu0 %1842
        %v1844 = vrcp.pop %v1834
        %v1845 = vrcp.pop %v1837
        %v1846 = vrcp.pop %v1840
        %v1847 = vrcp.pop %v1843
        %v1848 = vmul.f32 %v1825, %v1844
        %v1849 = vmul.f32 %v1827, %v1845
        %v1850 = vmul.f32 %v1829, %v1846
        %v1851 = vmul.f32 %v1831, %v1847
        %v1852 = vpack.c.bf16 %v1848, %v1848
        %v1853 = vpack.c.bf16 %v1849, %v1849
        %v1854 = vpack.c.bf16 %v1850, %v1850
        %v1855 = vpack.c.bf16 %v1851, %v1851
        %1857 = vrot.lane.b32.xlu0 %v1135, 96
        %v1858 = vpop.permute.xlu0 %1857
        %v1860 = vsel %vm1356, %v1852, 0
        %v1863 = vsel %vm1408, %v1858, 0
        %1865 = vmatprep.subr.bf16.mxu0 0
        %1866 = vmatpush1.bf16.msra.mxu0 %v1863
        %1867 = vmatprep.subr.bf16.mxu0 0
        %1868 = vmatpush1.bf16.msra.mxu0 0
        %1869 = vmatprep.subr.bf16.mxu0 0
        %1870 = vmatpush1.bf16.msra.mxu0 0
        %1871 = vmatprep.subr.bf16.mxu0 0
        %1872 = vmatpush1.bf16.msra.mxu0 0
        %1873 = vmatprep.subr.bf16.mxu0 0
        %1874 = vmatpush1.bf16.msra.mxu0 0
        %1875 = vmatprep.subr.bf16.mxu0 0
        %1876 = vmatpush1.bf16.msra.mxu0 0
        %1877 = vmatprep.subr.bf16.mxu0 0
        %1878 = vmatpush1.bf16.msra.mxu0 0
        %1879 = vmatprep.subr.bf16.mxu0 0
        %1880 = vmatpush1.bf16.msra.mxu0 0
        %1881 = vmatprep.subr.bf16.mxu0 0
        %1882 = vmatpush1.bf16.msra.mxu0 0
        %1883 = vmatprep.subr.bf16.mxu0 0
        %1884 = vmatpush1.bf16.msra.mxu0 0
        %1885 = vmatprep.subr.bf16.mxu0 0
        %1886 = vmatpush1.bf16.msra.mxu0 0
        %1887 = vmatprep.subr.bf16.mxu0 0
        %1888 = vmatpush1.bf16.msra.mxu0 0
        %1889 = vmatprep.subr.bf16.mxu0 0
        %1890 = vmatpush1.bf16.msra.mxu0 0
        %1891 = vmatprep.subr.bf16.mxu0 0
        %1892 = vmatpush1.bf16.msra.mxu0 0
        %1893 = vmatprep.subr.bf16.mxu0 0
        %1894 = vmatpush1.bf16.msra.mxu0 0
        %1895 = vmatprep.subr.bf16.mxu0 0
        %1896 = vmatpush1.bf16.msra.mxu0 0
        %1897 = vmatprep.mubr.bf16.mxu0 0
        %1898 = vmatmul.mubr.bf16.gmra.mrb[0].mxu0 %v1860
        %v1899 = vpop.f32.mrb[0].mxu0
        %v1900 = vadd.f32 0.0, %v1899
        %v1901 = vpop.f32.mrb[0].mxu0
        %v1902 = vpop.f32.mrb[0].mxu0
        %v1903 = vpop.f32.mrb[0].mxu0
        %1904 = vdwg.mxu0
        %1906 = vrot.lane.b32.xlu0 %v1136, 96
        %v1907 = vpop.permute.xlu0 %1906
        %v1909 = vsel %vm1356, %v1853, 0
        %v1912 = vsel %vm1408, %v1907, 0
        %1914 = vmatprep.subr.bf16.mxu0 0
        %1915 = vmatpush1.bf16.msra.mxu0 %v1912
        %1916 = vmatprep.subr.bf16.mxu0 0
        %1917 = vmatpush1.bf16.msra.mxu0 0
        %1918 = vmatprep.subr.bf16.mxu0 0
        %1919 = vmatpush1.bf16.msra.mxu0 0
        %1920 = vmatprep.subr.bf16.mxu0 0
        %1921 = vmatpush1.bf16.msra.mxu0 0
        %1922 = vmatprep.subr.bf16.mxu0 0
        %1923 = vmatpush1.bf16.msra.mxu0 0
        %1924 = vmatprep.subr.bf16.mxu0 0
        %1925 = vmatpush1.bf16.msra.mxu0 0
        %1926 = vmatprep.subr.bf16.mxu0 0
        %1927 = vmatpush1.bf16.msra.mxu0 0
        %1928 = vmatprep.subr.bf16.mxu0 0
        %1929 = vmatpush1.bf16.msra.mxu0 0
        %1930 = vmatprep.subr.bf16.mxu0 0
        %1931 = vmatpush1.bf16.msra.mxu0 0
        %1932 = vmatprep.subr.bf16.mxu0 0
        %1933 = vmatpush1.bf16.msra.mxu0 0
        %1934 = vmatprep.subr.bf16.mxu0 0
        %1935 = vmatpush1.bf16.msra.mxu0 0
        %1936 = vmatprep.subr.bf16.mxu0 0
        %1937 = vmatpush1.bf16.msra.mxu0 0
        %1938 = vmatprep.subr.bf16.mxu0 0
        %1939 = vmatpush1.bf16.msra.mxu0 0
        %1940 = vmatprep.subr.bf16.mxu0 0
        %1941 = vmatpush1.bf16.msra.mxu0 0
        %1942 = vmatprep.subr.bf16.mxu0 0
        %1943 = vmatpush1.bf16.msra.mxu0 0
        %1944 = vmatprep.subr.bf16.mxu0 0
        %1945 = vmatpush1.bf16.msra.mxu0 0
        %1946 = vmatprep.mubr.bf16.mxu0 0
        %1947 = vmatmul.mubr.bf16.gmra.mrb[0].mxu0 %v1909
        %v1948 = vpop.f32.mrb[0].mxu0
        %v1949 = vadd.f32 0.0, %v1948
        %v1950 = vpop.f32.mrb[0].mxu0
        %v1951 = vpop.f32.mrb[0].mxu0
        %v1952 = vpop.f32.mrb[0].mxu0
        %1953 = vdwg.mxu0
        %1955 = vrot.lane.b32.xlu0 %v1137, 96
        %v1956 = vpop.permute.xlu0 %1955
        %v1958 = vsel %vm1356, %v1854, 0
        %v1961 = vsel %vm1408, %v1956, 0
        %1963 = vmatprep.subr.bf16.mxu0 0
        %1964 = vmatpush1.bf16.msra.mxu0 %v1961
        %1965 = vmatprep.subr.bf16.mxu0 0
        %1966 = vmatpush1.bf16.msra.mxu0 0
        %1967 = vmatprep.subr.bf16.mxu0 0
        %1968 = vmatpush1.bf16.msra.mxu0 0
        %1969 = vmatprep.subr.bf16.mxu0 0
        %1970 = vmatpush1.bf16.msra.mxu0 0
        %1971 = vmatprep.subr.bf16.mxu0 0
        %1972 = vmatpush1.bf16.msra.mxu0 0
        %1973 = vmatprep.subr.bf16.mxu0 0
        %1974 = vmatpush1.bf16.msra.mxu0 0
        %1975 = vmatprep.subr.bf16.mxu0 0
        %1976 = vmatpush1.bf16.msra.mxu0 0
        %1977 = vmatprep.subr.bf16.mxu0 0
        %1978 = vmatpush1.bf16.msra.mxu0 0
        %1979 = vmatprep.subr.bf16.mxu0 0
        %1980 = vmatpush1.bf16.msra.mxu0 0
        %1981 = vmatprep.subr.bf16.mxu0 0
        %1982 = vmatpush1.bf16.msra.mxu0 0
        %1983 = vmatprep.subr.bf16.mxu0 0
        %1984 = vmatpush1.bf16.msra.mxu0 0
        %1985 = vmatprep.subr.bf16.mxu0 0
        %1986 = vmatpush1.bf16.msra.mxu0 0
        %1987 = vmatprep.subr.bf16.mxu0 0
        %1988 = vmatpush1.bf16.msra.mxu0 0
        %1989 = vmatprep.subr.bf16.mxu0 0
        %1990 = vmatpush1.bf16.msra.mxu0 0
        %1991 = vmatprep.subr.bf16.mxu0 0
        %1992 = vmatpush1.bf16.msra.mxu0 0
        %1993 = vmatprep.subr.bf16.mxu0 0
        %1994 = vmatpush1.bf16.msra.mxu0 0
        %1995 = vmatprep.mubr.bf16.mxu0 0
        %1996 = vmatmul.mubr.bf16.gmra.mrb[0].mxu0 %v1958
        %v1997 = vpop.f32.mrb[0].mxu0
        %v1998 = vadd.f32 0.0, %v1997
        %v1999 = vpop.f32.mrb[0].mxu0
        %v2000 = vpop.f32.mrb[0].mxu0
        %v2001 = vpop.f32.mrb[0].mxu0
        %2002 = vdwg.mxu0
        %2004 = vrot.lane.b32.xlu0 %v1138, 96
        %v2005 = vpop.permute.xlu0 %2004
        %v2007 = vsel %vm1356, %v1855, 0
        %v2010 = vsel %vm1408, %v2005, 0
        %2012 = vmatprep.subr.bf16.mxu0 0
        %2013 = vmatpush1.bf16.msra.mxu0 %v2010
        %2014 = vmatprep.subr.bf16.mxu0 0
        %2015 = vmatpush1.bf16.msra.mxu0 0
        %2016 = vmatprep.subr.bf16.mxu0 0
        %2017 = vmatpush1.bf16.msra.mxu0 0
        %2018 = vmatprep.subr.bf16.mxu0 0
        %2019 = vmatpush1.bf16.msra.mxu0 0
        %2020 = vmatprep.subr.bf16.mxu0 0
        %2021 = vmatpush1.bf16.msra.mxu0 0
        %2022 = vmatprep.subr.bf16.mxu0 0
        %2023 = vmatpush1.bf16.msra.mxu0 0
        %2024 = vmatprep.subr.bf16.mxu0 0
        %2025 = vmatpush1.bf16.msra.mxu0 0
        %2026 = vmatprep.subr.bf16.mxu0 0
        %2027 = vmatpush1.bf16.msra.mxu0 0
        %2028 = vmatprep.subr.bf16.mxu0 0
        %2029 = vmatpush1.bf16.msra.mxu0 0
        %2030 = vmatprep.subr.bf16.mxu0 0
        %2031 = vmatpush1.bf16.msra.mxu0 0
        %2032 = vmatprep.subr.bf16.mxu0 0
        %2033 = vmatpush1.bf16.msra.mxu0 0
        %2034 = vmatprep.subr.bf16.mxu0 0
        %2035 = vmatpush1.bf16.msra.mxu0 0
        %2036 = vmatprep.subr.bf16.mxu0 0
        %2037 = vmatpush1.bf16.msra.mxu0 0
        %2038 = vmatprep.subr.bf16.mxu0 0
        %2039 = vmatpush1.bf16.msra.mxu0 0
        %2040 = vmatprep.subr.bf16.mxu0 0
        %2041 = vmatpush1.bf16.msra.mxu0 0
        %2042 = vmatprep.subr.bf16.mxu0 0
        %2043 = vmatpush1.bf16.msra.mxu0 0
        %2044 = vmatprep.mubr.bf16.mxu0 0
        %2045 = vmatmul.mubr.bf16.gmra.mrb[0].mxu0 %v2007
        %v2046 = vpop.f32.mrb[0].mxu0
        %v2047 = vadd.f32 0.0, %v2046
        %v2048 = vpop.f32.mrb[0].mxu0
        %v2049 = vpop.f32.mrb[0].mxu0
        %v2050 = vpop.f32.mrb[0].mxu0
        %2051 = vdwg.mxu0
        %v2052 = vpack.c.bf16 %v1949, %v1900
        %v2053 = vpack.c.bf16 %v2047, %v1998
        %v2058 = vunpack.c.l.b16 %v1115
        %v2059 = vunpack.c.l.b16 %v1116
        %v2060 = vunpack.c.l.b16 %v1117
        %v2061 = vunpack.c.l.b16 %v1118
        %v2062 = vpack.c.b16 %v2059, %v2058
        %v2063 = vpack.c.b16 %v2061, %v2060
        %v2067 = vsel %vm1139, %v2052, 0
        %v2070 = vsel %vm1139, %v2053, 0
        %2072 = vmatprep.subr.bf16.mxu0 0
        %2073 = vmatpush1.bf16.msra.mxu0 %v2062
        %2074 = vmatprep.subr.bf16.mxu0 0
        %2075 = vmatpush1.bf16.msra.mxu0 %v2063
        %2076 = vmatprep.subr.bf16.mxu0 0
        %2077 = vmatpush1.bf16.msra.mxu0 0
        %2078 = vmatprep.subr.bf16.mxu0 0
        %2079 = vmatpush1.bf16.msra.mxu0 0
        %2080 = vmatprep.subr.bf16.mxu0 0
        %2081 = vmatpush1.bf16.msra.mxu0 0
        %2082 = vmatprep.subr.bf16.mxu0 0
        %2083 = vmatpush1.bf16.msra.mxu0 0
        %2084 = vmatprep.subr.bf16.mxu0 0
        %2085 = vmatpush1.bf16.msra.mxu0 0
        %2086 = vmatprep.subr.bf16.mxu0 0
        %2087 = vmatpush1.bf16.msra.mxu0 0
        %2088 = vmatprep.subr.bf16.mxu0 0
        %2089 = vmatpush1.bf16.msra.mxu0 0
        %2090 = vmatprep.subr.bf16.mxu0 0
        %2091 = vmatpush1.bf16.msra.mxu0 0
        %2092 = vmatprep.subr.bf16.mxu0 0
        %2093 = vmatpush1.bf16.msra.mxu0 0
        %2094 = vmatprep.subr.bf16.mxu0 0
        %2095 = vmatpush1.bf16.msra.mxu0 0
        %2096 = vmatprep.subr.bf16.mxu0 0
        %2097 = vmatpush1.bf16.msra.mxu0 0
        %2098 = vmatprep.subr.bf16.mxu0 0
        %2099 = vmatpush1.bf16.msra.mxu0 0
        %2100 = vmatprep.subr.bf16.mxu0 0
        %2101 = vmatpush1.bf16.msra.mxu0 0
        %2102 = vmatprep.subr.bf16.mxu0 0
        %2103 = vmatpush1.bf16.msra.mxu0 0
        %2104 = vmatprep.mubr.bf16.mxu0 0
        %2105 = vmatmul.mubr.bf16.gmra.mrb[0].mxu0 %v2067
        %v2106 = vpop.f32.mrb[0].mxu0
        %v2107 = vadd.f32 0.0, %v2106
        %v2108 = vpop.f32.mrb[0].mxu0
        %v2109 = vpop.f32.mrb[0].mxu0
        %v2110 = vadd.f32 0.0, %v2109
        %v2111 = vpop.f32.mrb[0].mxu0
        %2112 = vmatprep.mubr.bf16.mxu0 0
        %2113 = vmatmul.mubr.bf16.gmra.mrb[0].mxu0 %v2070
        %v2114 = vpop.f32.mrb[0].mxu0
        %v2115 = vadd.f32 0.0, %v2114
        %v2116 = vpop.f32.mrb[0].mxu0
        %v2117 = vpop.f32.mrb[0].mxu0
        %v2118 = vadd.f32 0.0, %v2117
        %v2119 = vpop.f32.mrb[0].mxu0
        %2120 = vdwg.mxu0
        %v2125 = vunpack.c.l.b16 %v1111
        %v2126 = vunpack.c.l.b16 %v1112
        %v2127 = vunpack.c.l.b16 %v1113
        %v2128 = vunpack.c.l.b16 %v1114
        %v2129 = vpack.c.b16 %v2126, %v2125
        %v2130 = vpack.c.b16 %v2128, %v2127
        %v2134 = vsel %vm1139, %v1590, 0
        %v2137 = vsel %vm1139, %v1591, 0
        %2139 = vmatprep.subr.bf16.mxu0 0
        %2140 = vmatpush1.bf16.msra.mxu0 %v2129
        %2141 = vmatprep.subr.bf16.mxu0 0
        %2142 = vmatpush1.bf16.msra.mxu0 %v2130
        %2143 = vmatprep.subr.bf16.mxu0 0
        %2144 = vmatpush1.bf16.msra.mxu0 0
        %2145 = vmatprep.subr.bf16.mxu0 0
        %2146 = vmatpush1.bf16.msra.mxu0 0
        %2147 = vmatprep.subr.bf16.mxu0 0
        %2148 = vmatpush1.bf16.msra.mxu0 0
        %2149 = vmatprep.subr.bf16.mxu0 0
        %2150 = vmatpush1.bf16.msra.mxu0 0
        %2151 = vmatprep.subr.bf16.mxu0 0
        %2152 = vmatpush1.bf16.msra.mxu0 0
        %2153 = vmatprep.subr.bf16.mxu0 0
        %2154 = vmatpush1.bf16.msra.mxu0 0
        %2155 = vmatprep.subr.bf16.mxu0 0
        %2156 = vmatpush1.bf16.msra.mxu0 0
        %2157 = vmatprep.subr.bf16.mxu0 0
        %2158 = vmatpush1.bf16.msra.mxu0 0
        %2159 = vmatprep.subr.bf16.mxu0 0
        %2160 = vmatpush1.bf16.msra.mxu0 0
        %2161 = vmatprep.subr.bf16.mxu0 0
        %2162 = vmatpush1.bf16.msra.mxu0 0
        %2163 = vmatprep.subr.bf16.mxu0 0
        %2164 = vmatpush1.bf16.msra.mxu0 0
        %2165 = vmatprep.subr.bf16.mxu0 0
        %2166 = vmatpush1.bf16.msra.mxu0 0
        %2167 = vmatprep.subr.bf16.mxu0 0
        %2168 = vmatpush1.bf16.msra.mxu0 0
        %2169 = vmatprep.subr.bf16.mxu0 0
        %2170 = vmatpush1.bf16.msra.mxu0 0
        %2171 = vmatprep.mubr.bf16.mxu0 0
        %2172 = vmatmul.mubr.bf16.gmra.mrb[0].mxu0 %v2134
        %v2173 = vpop.f32.mrb[0].mxu0
        %v2174 = vadd.f32 %v2107, %v2173
        %v2175 = vpop.f32.mrb[0].mxu0
        %v2176 = vpop.f32.mrb[0].mxu0
        %v2177 = vadd.f32 %v2110, %v2176
        %v2178 = vpop.f32.mrb[0].mxu0
        %2179 = vmatprep.mubr.bf16.mxu0 0
        %2180 = vmatmul.mubr.bf16.gmra.mrb[0].mxu0 %v2137
        %v2181 = vpop.f32.mrb[0].mxu0
        %v2182 = vadd.f32 %v2115, %v2181
        %v2183 = vpop.f32.mrb[0].mxu0
        %v2184 = vpop.f32.mrb[0].mxu0
        %v2185 = vadd.f32 %v2118, %v2184
        %v2186 = vpop.f32.mrb[0].mxu0
        %2187 = vdwg.mxu0
        %2188 = vrot.lane.b32.xlu0 %v1127, 64
        %v2189 = vpop.permute.xlu0 %2188
        %2190 = vrot.lane.b32.xlu0 %v1131, 64
        %v2191 = vpop.permute.xlu0 %2190
        %v2193 = vsel %vm1139, %v2189, 0
        %v2196 = vsel %vm1139, %v2191, 0
        %2198 = vmatprep.subr.bf16.mxu0 0
        %2199 = vmatpush1.bf16.xpose.msra.mxu0 %v2196
        %2200 = vmatprep.subr.bf16.mxu0 0
        %2201 = vmatpush1.bf16.xpose.msra.mxu0 0
        %2202 = vmatprep.subr.bf16.mxu0 0
        %2203 = vmatpush1.bf16.xpose.msra.mxu0 0
        %2204 = vmatprep.subr.bf16.mxu0 0
        %2205 = vmatpush1.bf16.xpose.msra.mxu0 0
        %2206 = vmatprep.subr.bf16.mxu0 0
        %2207 = vmatpush1.bf16.xpose.msra.mxu0 0
        %2208 = vmatprep.subr.bf16.mxu0 0
        %2209 = vmatpush1.bf16.xpose.msra.mxu0 0
        %2210 = vmatprep.subr.bf16.mxu0 0
        %2211 = vmatpush1.bf16.xpose.msra.mxu0 0
        %2212 = vmatprep.subr.bf16.mxu0 0
        %2213 = vmatpush1.bf16.xpose.msra.mxu0 0
        %2214 = vmatprep.subr.bf16.mxu0 0
        %2215 = vmatpush1.bf16.xpose.msra.mxu0 0
        %2216 = vmatprep.subr.bf16.mxu0 0
        %2217 = vmatpush1.bf16.xpose.msra.mxu0 0
        %2218 = vmatprep.subr.bf16.mxu0 0
        %2219 = vmatpush1.bf16.xpose.msra.mxu0 0
        %2220 = vmatprep.subr.bf16.mxu0 0
        %2221 = vmatpush1.bf16.xpose.msra.mxu0 0
        %2222 = vmatprep.subr.bf16.mxu0 0
        %2223 = vmatpush1.bf16.xpose.msra.mxu0 0
        %2224 = vmatprep.subr.bf16.mxu0 0
        %2225 = vmatpush1.bf16.xpose.msra.mxu0 0
        %2226 = vmatprep.subr.bf16.mxu0 0
        %2227 = vmatpush1.bf16.xpose.msra.mxu0 0
        %2228 = vmatprep.subr.bf16.mxu0 0
        %2229 = vmatpush1.bf16.xpose.msra.mxu0 0
        %2230 = vmatprep.mubr.bf16.mxu0 0
        %2231 = vmatmul.mubr.bf16.gmra.mrb[0].mxu0 %v2193
        %v2232 = vpop.f32.mrb[0].mxu0
        %v2233 = vadd.f32 0.0, %v2232
        %v2234 = vpop.f32.mrb[0].mxu0
        %v2235 = vpop.f32.mrb[0].mxu0
        %v2236 = vpop.f32.mrb[0].mxu0
        %2237 = vdwg.mxu0
        %2238 = vrot.lane.b32.xlu0 %v1128, 64
        %v2239 = vpop.permute.xlu0 %2238
        %2240 = vrot.lane.b32.xlu0 %v1132, 64
        %v2241 = vpop.permute.xlu0 %2240
        %v2243 = vsel %vm1139, %v2239, 0
        %v2246 = vsel %vm1139, %v2241, 0
        %2248 = vmatprep.subr.bf16.mxu0 0
        %2249 = vmatpush1.bf16.xpose.msra.mxu0 %v2246
        %2250 = vmatprep.subr.bf16.mxu0 0
        %2251 = vmatpush1.bf16.xpose.msra.mxu0 0
        %2252 = vmatprep.subr.bf16.mxu0 0
        %2253 = vmatpush1.bf16.xpose.msra.mxu0 0
        %2254 = vmatprep.subr.bf16.mxu0 0
        %2255 = vmatpush1.bf16.xpose.msra.mxu0 0
        %2256 = vmatprep.subr.bf16.mxu0 0
        %2257 = vmatpush1.bf16.xpose.msra.mxu0 0
        %2258 = vmatprep.subr.bf16.mxu0 0
        %2259 = vmatpush1.bf16.xpose.msra.mxu0 0
        %2260 = vmatprep.subr.bf16.mxu0 0
        %2261 = vmatpush1.bf16.xpose.msra.mxu0 0
        %2262 = vmatprep.subr.bf16.mxu0 0
        %2263 = vmatpush1.bf16.xpose.msra.mxu0 0
        %2264 = vmatprep.subr.bf16.mxu0 0
        %2265 = vmatpush1.bf16.xpose.msra.mxu0 0
        %2266 = vmatprep.subr.bf16.mxu0 0
        %2267 = vmatpush1.bf16.xpose.msra.mxu0 0
        %2268 = vmatprep.subr.bf16.mxu0 0
        %2269 = vmatpush1.bf16.xpose.msra.mxu0 0
        %2270 = vmatprep.subr.bf16.mxu0 0
        %2271 = vmatpush1.bf16.xpose.msra.mxu0 0
        %2272 = vmatprep.subr.bf16.mxu0 0
        %2273 = vmatpush1.bf16.xpose.msra.mxu0 0
        %2274 = vmatprep.subr.bf16.mxu0 0
        %2275 = vmatpush1.bf16.xpose.msra.mxu0 0
        %2276 = vmatprep.subr.bf16.mxu0 0
        %2277 = vmatpush1.bf16.xpose.msra.mxu0 0
        %2278 = vmatprep.subr.bf16.mxu0 0
        %2279 = vmatpush1.bf16.xpose.msra.mxu0 0
        %2280 = vmatprep.mubr.bf16.mxu0 0
        %2281 = vmatmul.mubr.bf16.gmra.mrb[0].mxu0 %v2243
        %v2282 = vpop.f32.mrb[0].mxu0
        %v2283 = vadd.f32 0.0, %v2282
        %v2284 = vpop.f32.mrb[0].mxu0
        %v2285 = vpop.f32.mrb[0].mxu0
        %v2286 = vpop.f32.mrb[0].mxu0
        %2287 = vdwg.mxu0
        %2288 = vrot.lane.b32.xlu0 %v1129, 64
        %v2289 = vpop.permute.xlu0 %2288
        %2290 = vrot.lane.b32.xlu0 %v1133, 64
        %v2291 = vpop.permute.xlu0 %2290
        %v2293 = vsel %vm1139, %v2289, 0
        %v2296 = vsel %vm1139, %v2291, 0
        %2298 = vmatprep.subr.bf16.mxu0 0
        %2299 = vmatpush1.bf16.xpose.msra.mxu0 %v2296
        %2300 = vmatprep.subr.bf16.mxu0 0
        %2301 = vmatpush1.bf16.xpose.msra.mxu0 0
        %2302 = vmatprep.subr.bf16.mxu0 0
        %2303 = vmatpush1.bf16.xpose.msra.mxu0 0
        %2304 = vmatprep.subr.bf16.mxu0 0
        %2305 = vmatpush1.bf16.xpose.msra.mxu0 0
        %2306 = vmatprep.subr.bf16.mxu0 0
        %2307 = vmatpush1.bf16.xpose.msra.mxu0 0
        %2308 = vmatprep.subr.bf16.mxu0 0
        %2309 = vmatpush1.bf16.xpose.msra.mxu0 0
        %2310 = vmatprep.subr.bf16.mxu0 0
        %2311 = vmatpush1.bf16.xpose.msra.mxu0 0
        %2312 = vmatprep.subr.bf16.mxu0 0
        %2313 = vmatpush1.bf16.xpose.msra.mxu0 0
        %2314 = vmatprep.subr.bf16.mxu0 0
        %2315 = vmatpush1.bf16.xpose.msra.mxu0 0
        %2316 = vmatprep.subr.bf16.mxu0 0
        %2317 = vmatpush1.bf16.xpose.msra.mxu0 0
        %2318 = vmatprep.subr.bf16.mxu0 0
        %2319 = vmatpush1.bf16.xpose.msra.mxu0 0
        %2320 = vmatprep.subr.bf16.mxu0 0
        %2321 = vmatpush1.bf16.xpose.msra.mxu0 0
        %2322 = vmatprep.subr.bf16.mxu0 0
        %2323 = vmatpush1.bf16.xpose.msra.mxu0 0
        %2324 = vmatprep.subr.bf16.mxu0 0
        %2325 = vmatpush1.bf16.xpose.msra.mxu0 0
        %2326 = vmatprep.subr.bf16.mxu0 0
        %2327 = vmatpush1.bf16.xpose.msra.mxu0 0
        %2328 = vmatprep.subr.bf16.mxu0 0
        %2329 = vmatpush1.bf16.xpose.msra.mxu0 0
        %2330 = vmatprep.mubr.bf16.mxu0 0
        %2331 = vmatmul.mubr.bf16.gmra.mrb[0].mxu0 %v2293
        %v2332 = vpop.f32.mrb[0].mxu0
        %v2333 = vadd.f32 0.0, %v2332
        %v2334 = vpop.f32.mrb[0].mxu0
        %v2335 = vpop.f32.mrb[0].mxu0
        %v2336 = vpop.f32.mrb[0].mxu0
        %2337 = vdwg.mxu0
        %2338 = vrot.lane.b32.xlu0 %v1130, 64
        %v2339 = vpop.permute.xlu0 %2338
        %2340 = vrot.lane.b32.xlu0 %v1134, 64
        %v2341 = vpop.permute.xlu0 %2340
        %v2343 = vsel %vm1139, %v2339, 0
        %v2346 = vsel %vm1139, %v2341, 0
        %2348 = vmatprep.subr.bf16.mxu0 0
        %2349 = vmatpush1.bf16.xpose.msra.mxu0 %v2346
        %2350 = vmatprep.subr.bf16.mxu0 0
        %2351 = vmatpush1.bf16.xpose.msra.mxu0 0
        %2352 = vmatprep.subr.bf16.mxu0 0
        %2353 = vmatpush1.bf16.xpose.msra.mxu0 0
        %2354 = vmatprep.subr.bf16.mxu0 0
        %2355 = vmatpush1.bf16.xpose.msra.mxu0 0
        %2356 = vmatprep.subr.bf16.mxu0 0
        %2357 = vmatpush1.bf16.xpose.msra.mxu0 0
        %2358 = vmatprep.subr.bf16.mxu0 0
        %2359 = vmatpush1.bf16.xpose.msra.mxu0 0
        %2360 = vmatprep.subr.bf16.mxu0 0
        %2361 = vmatpush1.bf16.xpose.msra.mxu0 0
        %2362 = vmatprep.subr.bf16.mxu0 0
        %2363 = vmatpush1.bf16.xpose.msra.mxu0 0
        %2364 = vmatprep.subr.bf16.mxu0 0
        %2365 = vmatpush1.bf16.xpose.msra.mxu0 0
        %2366 = vmatprep.subr.bf16.mxu0 0
        %2367 = vmatpush1.bf16.xpose.msra.mxu0 0
        %2368 = vmatprep.subr.bf16.mxu0 0
        %2369 = vmatpush1.bf16.xpose.msra.mxu0 0
        %2370 = vmatprep.subr.bf16.mxu0 0
        %2371 = vmatpush1.bf16.xpose.msra.mxu0 0
        %2372 = vmatprep.subr.bf16.mxu0 0
        %2373 = vmatpush1.bf16.xpose.msra.mxu0 0
        %2374 = vmatprep.subr.bf16.mxu0 0
        %2375 = vmatpush1.bf16.xpose.msra.mxu0 0
        %2376 = vmatprep.subr.bf16.mxu0 0
        %2377 = vmatpush1.bf16.xpose.msra.mxu0 0
        %2378 = vmatprep.subr.bf16.mxu0 0
        %2379 = vmatpush1.bf16.xpose.msra.mxu0 0
        %2380 = vmatprep.mubr.bf16.mxu0 0
        %2381 = vmatmul.mubr.bf16.gmra.mrb[0].mxu0 %v2343
        %v2382 = vpop.f32.mrb[0].mxu0
        %v2383 = vadd.f32 0.0, %v2382
        %v2384 = vpop.f32.mrb[0].mxu0
        %v2385 = vpop.f32.mrb[0].mxu0
        %v2386 = vpop.f32.mrb[0].mxu0
        %2387 = vdwg.mxu0
        %v2388 = vmul.f32 %v2233, 0.17677669
        %v2389 = vmul.f32 %v2283, 0.17677669
        %v2390 = vmul.f32 %v2333, 0.17677669
        %v2391 = vmul.f32 %v2383, 0.17677669
        %v2392 = vadd.f32 %v2388, %v1335
        %v2393 = vadd.f32 %v2389, %v1339
        %v2394 = vadd.f32 %v2390, %v1343
        %v2395 = vadd.f32 %v2391, %v1347
        %v2396 = vsel %vm1356, %v2392, -inf
        %2397 = vmax.xlane.f32.xlu0 %v2396
        %v2398 = vpop.xlane.xlu0 %2397
        %v2399 = vsel %vm1356, %v2393, -inf
        %2400 = vmax.xlane.f32.xlu0 %v2399
        %v2401 = vpop.xlane.xlu0 %2400
        %v2402 = vsel %vm1356, %v2394, -inf
        %2403 = vmax.xlane.f32.xlu0 %v2402
        %v2404 = vpop.xlane.xlu0 %2403
        %v2405 = vsel %vm1356, %v2395, -inf
        %2406 = vmax.xlane.f32.xlu0 %v2405
        %v2407 = vpop.xlane.xlu0 %2406
        %v2408 = vsub.f32 %v2392, %v2398
        %v2409 = vsub.f32 %v2393, %v2401
        %v2410 = vsub.f32 %v2394, %v2404
        %v2411 = vsub.f32 %v2395, %v2407
        %v2412 = vmul.f32 %v2408, 1.442695
        %v2413 = vpow.pop %v2412
        %v2414 = vmul.f32 %v2409, 1.442695
        %v2415 = vpow.pop %v2414
        %v2416 = vmul.f32 %v2410, 1.442695
        %v2417 = vpow.pop %v2416
        %v2418 = vmul.f32 %v2411, 1.442695
        %v2419 = vpow.pop %v2418
        %v2420 = vsel %vm1356, %v2413, 0.0
        %2421 = vadd.xlane.f32.xlu0 %v2420
        %v2422 = vpop.xlane.xlu0 %2421
        %v2423 = vsel %vm1356, %v2415, 0.0
        %2424 = vadd.xlane.f32.xlu0 %v2423
        %v2425 = vpop.xlane.xlu0 %2424
        %v2426 = vsel %vm1356, %v2417, 0.0
        %2427 = vadd.xlane.f32.xlu0 %v2426
        %v2428 = vpop.xlane.xlu0 %2427
        %v2429 = vsel %vm1356, %v2419, 0.0
        %2430 = vadd.xlane.f32.xlu0 %v2429
        %v2431 = vpop.xlane.xlu0 %2430
        %v2432 = vrcp.pop %v2422
        %v2433 = vrcp.pop %v2425
        %v2434 = vrcp.pop %v2428
        %v2435 = vrcp.pop %v2431
        %v2436 = vmul.f32 %v2413, %v2432
        %v2437 = vmul.f32 %v2415, %v2433
        %v2438 = vmul.f32 %v2417, %v2434
        %v2439 = vmul.f32 %v2419, %v2435
        %v2440 = vpack.c.bf16 %v2436, %v2436
        %v2441 = vpack.c.bf16 %v2437, %v2437
        %v2442 = vpack.c.bf16 %v2438, %v2438
        %v2443 = vpack.c.bf16 %v2439, %v2439
        %2444 = vrot.lane.b32.xlu0 %v1135, 64
        %v2445 = vpop.permute.xlu0 %2444
        %v2447 = vsel %vm1356, %v2440, 0
        %v2450 = vsel %vm1408, %v2445, 0
        %2452 = vmatprep.subr.bf16.mxu0 0
        %2453 = vmatpush1.bf16.msra.mxu0 %v2450
        %2454 = vmatprep.subr.bf16.mxu0 0
        %2455 = vmatpush1.bf16.msra.mxu0 0
        %2456 = vmatprep.subr.bf16.mxu0 0
        %2457 = vmatpush1.bf16.msra.mxu0 0
        %2458 = vmatprep.subr.bf16.mxu0 0
        %2459 = vmatpush1.bf16.msra.mxu0 0
        %2460 = vmatprep.subr.bf16.mxu0 0
        %2461 = vmatpush1.bf16.msra.mxu0 0
        %2462 = vmatprep.subr.bf16.mxu0 0
        %2463 = vmatpush1.bf16.msra.mxu0 0
        %2464 = vmatprep.subr.bf16.mxu0 0
        %2465 = vmatpush1.bf16.msra.mxu0 0
        %2466 = vmatprep.subr.bf16.mxu0 0
        %2467 = vmatpush1.bf16.msra.mxu0 0
        %2468 = vmatprep.subr.bf16.mxu0 0
        %2469 = vmatpush1.bf16.msra.mxu0 0
        %2470 = vmatprep.subr.bf16.mxu0 0
        %2471 = vmatpush1.bf16.msra.mxu0 0
        %2472 = vmatprep.subr.bf16.mxu0 0
        %2473 = vmatpush1.bf16.msra.mxu0 0
        %2474 = vmatprep.subr.bf16.mxu0 0
        %2475 = vmatpush1.bf16.msra.mxu0 0
        %2476 = vmatprep.subr.bf16.mxu0 0
        %2477 = vmatpush1.bf16.msra.mxu0 0
        %2478 = vmatprep.subr.bf16.mxu0 0
        %2479 = vmatpush1.bf16.msra.mxu0 0
        %2480 = vmatprep.subr.bf16.mxu0 0
        %2481 = vmatpush1.bf16.msra.mxu0 0
        %2482 = vmatprep.subr.bf16.mxu0 0
        %2483 = vmatpush1.bf16.msra.mxu0 0
        %2484 = vmatprep.mubr.bf16.mxu0 0
        %2485 = vmatmul.mubr.bf16.gmra.mrb[0].mxu0 %v2447
        %v2486 = vpop.f32.mrb[0].mxu0
        %v2487 = vadd.f32 0.0, %v2486
        %v2488 = vpop.f32.mrb[0].mxu0
        %v2489 = vpop.f32.mrb[0].mxu0
        %v2490 = vpop.f32.mrb[0].mxu0
        %2491 = vdwg.mxu0
        %2492 = vrot.lane.b32.xlu0 %v1136, 64
        %v2493 = vpop.permute.xlu0 %2492
        %v2495 = vsel %vm1356, %v2441, 0
        %v2498 = vsel %vm1408, %v2493, 0
        %2500 = vmatprep.subr.bf16.mxu0 0
        %2501 = vmatpush1.bf16.msra.mxu0 %v2498
        %2502 = vmatprep.subr.bf16.mxu0 0
        %2503 = vmatpush1.bf16.msra.mxu0 0
        %2504 = vmatprep.subr.bf16.mxu0 0
        %2505 = vmatpush1.bf16.msra.mxu0 0
        %2506 = vmatprep.subr.bf16.mxu0 0
        %2507 = vmatpush1.bf16.msra.mxu0 0
        %2508 = vmatprep.subr.bf16.mxu0 0
        %2509 = vmatpush1.bf16.msra.mxu0 0
        %2510 = vmatprep.subr.bf16.mxu0 0
        %2511 = vmatpush1.bf16.msra.mxu0 0
        %2512 = vmatprep.subr.bf16.mxu0 0
        %2513 = vmatpush1.bf16.msra.mxu0 0
        %2514 = vmatprep.subr.bf16.mxu0 0
        %2515 = vmatpush1.bf16.msra.mxu0 0
        %2516 = vmatprep.subr.bf16.mxu0 0
        %2517 = vmatpush1.bf16.msra.mxu0 0
        %2518 = vmatprep.subr.bf16.mxu0 0
        %2519 = vmatpush1.bf16.msra.mxu0 0
        %2520 = vmatprep.subr.bf16.mxu0 0
        %2521 = vmatpush1.bf16.msra.mxu0 0
        %2522 = vmatprep.subr.bf16.mxu0 0
        %2523 = vmatpush1.bf16.msra.mxu0 0
        %2524 = vmatprep.subr.bf16.mxu0 0
        %2525 = vmatpush1.bf16.msra.mxu0 0
        %2526 = vmatprep.subr.bf16.mxu0 0
        %2527 = vmatpush1.bf16.msra.mxu0 0
        %2528 = vmatprep.subr.bf16.mxu0 0
        %2529 = vmatpush1.bf16.msra.mxu0 0
        %2530 = vmatprep.subr.bf16.mxu0 0
        %2531 = vmatpush1.bf16.msra.mxu0 0
        %2532 = vmatprep.mubr.bf16.mxu0 0
        %2533 = vmatmul.mubr.bf16.gmra.mrb[0].mxu0 %v2495
        %v2534 = vpop.f32.mrb[0].mxu0
        %v2535 = vadd.f32 0.0, %v2534
        %v2536 = vpop.f32.mrb[0].mxu0
        %v2537 = vpop.f32.mrb[0].mxu0
        %v2538 = vpop.f32.mrb[0].mxu0
        %2539 = vdwg.mxu0
        %2540 = vrot.lane.b32.xlu0 %v1137, 64
        %v2541 = vpop.permute.xlu0 %2540
        %v2543 = vsel %vm1356, %v2442, 0
        %v2546 = vsel %vm1408, %v2541, 0
        %2548 = vmatprep.subr.bf16.mxu0 0
        %2549 = vmatpush1.bf16.msra.mxu0 %v2546
        %2550 = vmatprep.subr.bf16.mxu0 0
        %2551 = vmatpush1.bf16.msra.mxu0 0
        %2552 = vmatprep.subr.bf16.mxu0 0
        %2553 = vmatpush1.bf16.msra.mxu0 0
        %2554 = vmatprep.subr.bf16.mxu0 0
        %2555 = vmatpush1.bf16.msra.mxu0 0
        %2556 = vmatprep.subr.bf16.mxu0 0
        %2557 = vmatpush1.bf16.msra.mxu0 0
        %2558 = vmatprep.subr.bf16.mxu0 0
        %2559 = vmatpush1.bf16.msra.mxu0 0
        %2560 = vmatprep.subr.bf16.mxu0 0
        %2561 = vmatpush1.bf16.msra.mxu0 0
        %2562 = vmatprep.subr.bf16.mxu0 0
        %2563 = vmatpush1.bf16.msra.mxu0 0
        %2564 = vmatprep.subr.bf16.mxu0 0
        %2565 = vmatpush1.bf16.msra.mxu0 0
        %2566 = vmatprep.subr.bf16.mxu0 0
        %2567 = vmatpush1.bf16.msra.mxu0 0
        %2568 = vmatprep.subr.bf16.mxu0 0
        %2569 = vmatpush1.bf16.msra.mxu0 0
        %2570 = vmatprep.subr.bf16.mxu0 0
        %2571 = vmatpush1.bf16.msra.mxu0 0
        %2572 = vmatprep.subr.bf16.mxu0 0
        %2573 = vmatpush1.bf16.msra.mxu0 0
        %2574 = vmatprep.subr.bf16.mxu0 0
        %2575 = vmatpush1.bf16.msra.mxu0 0
        %2576 = vmatprep.subr.bf16.mxu0 0
        %2577 = vmatpush1.bf16.msra.mxu0 0
        %2578 = vmatprep.subr.bf16.mxu0 0
        %2579 = vmatpush1.bf16.msra.mxu0 0
        %2580 = vmatprep.mubr.bf16.mxu0 0
        %2581 = vmatmul.mubr.bf16.gmra.mrb[0].mxu0 %v2543
        %v2582 = vpop.f32.mrb[0].mxu0
        %v2583 = vadd.f32 0.0, %v2582
        %v2584 = vpop.f32.mrb[0].mxu0
        %v2585 = vpop.f32.mrb[0].mxu0
        %v2586 = vpop.f32.mrb[0].mxu0
        %2587 = vdwg.mxu0
        %2588 = vrot.lane.b32.xlu0 %v1138, 64
        %v2589 = vpop.permute.xlu0 %2588
        %v2591 = vsel %vm1356, %v2443, 0
        %v2594 = vsel %vm1408, %v2589, 0
        %2596 = vmatprep.subr.bf16.mxu0 0
        %2597 = vmatpush1.bf16.msra.mxu0 %v2594
        %2598 = vmatprep.subr.bf16.mxu0 0
        %2599 = vmatpush1.bf16.msra.mxu0 0
        %2600 = vmatprep.subr.bf16.mxu0 0
        %2601 = vmatpush1.bf16.msra.mxu0 0
        %2602 = vmatprep.subr.bf16.mxu0 0
        %2603 = vmatpush1.bf16.msra.mxu0 0
        %2604 = vmatprep.subr.bf16.mxu0 0
        %2605 = vmatpush1.bf16.msra.mxu0 0
        %2606 = vmatprep.subr.bf16.mxu0 0
        %2607 = vmatpush1.bf16.msra.mxu0 0
        %2608 = vmatprep.subr.bf16.mxu0 0
        %2609 = vmatpush1.bf16.msra.mxu0 0
        %2610 = vmatprep.subr.bf16.mxu0 0
        %2611 = vmatpush1.bf16.msra.mxu0 0
        %2612 = vmatprep.subr.bf16.mxu0 0
        %2613 = vmatpush1.bf16.msra.mxu0 0
        %2614 = vmatprep.subr.bf16.mxu0 0
        %2615 = vmatpush1.bf16.msra.mxu0 0
        %2616 = vmatprep.subr.bf16.mxu0 0
        %2617 = vmatpush1.bf16.msra.mxu0 0
        %2618 = vmatprep.subr.bf16.mxu0 0
        %2619 = vmatpush1.bf16.msra.mxu0 0
        %2620 = vmatprep.subr.bf16.mxu0 0
        %2621 = vmatpush1.bf16.msra.mxu0 0
        %2622 = vmatprep.subr.bf16.mxu0 0
        %2623 = vmatpush1.bf16.msra.mxu0 0
        %2624 = vmatprep.subr.bf16.mxu0 0
        %2625 = vmatpush1.bf16.msra.mxu0 0
        %2626 = vmatprep.subr.bf16.mxu0 0
        %2627 = vmatpush1.bf16.msra.mxu0 0
        %2628 = vmatprep.mubr.bf16.mxu0 0
        %2629 = vmatmul.mubr.bf16.gmra.mrb[0].mxu0 %v2591
        %v2630 = vpop.f32.mrb[0].mxu0
        %v2631 = vadd.f32 0.0, %v2630
        %v2632 = vpop.f32.mrb[0].mxu0
        %v2633 = vpop.f32.mrb[0].mxu0
        %v2634 = vpop.f32.mrb[0].mxu0
        %2635 = vdwg.mxu0
        %v2636 = vpack.c.bf16 %v2535, %v2487
        %v2637 = vpack.c.bf16 %v2631, %v2583
        %v2642 = vunpack.c.l.b16 %v1119
        %v2643 = vunpack.c.l.b16 %v1120
        %v2644 = vunpack.c.l.b16 %v1121
        %v2645 = vunpack.c.l.b16 %v1122
        %v2646 = vpack.c.b16 %v2643, %v2642
        %v2647 = vpack.c.b16 %v2645, %v2644
        %v2651 = vsel %vm1139, %v2636, 0
        %v2654 = vsel %vm1139, %v2637, 0
        %2656 = vmatprep.subr.bf16.mxu0 0
        %2657 = vmatpush1.bf16.msra.mxu0 %v2646
        %2658 = vmatprep.subr.bf16.mxu0 0
        %2659 = vmatpush1.bf16.msra.mxu0 %v2647
        %2660 = vmatprep.subr.bf16.mxu0 0
        %2661 = vmatpush1.bf16.msra.mxu0 0
        %2662 = vmatprep.subr.bf16.mxu0 0
        %2663 = vmatpush1.bf16.msra.mxu0 0
        %2664 = vmatprep.subr.bf16.mxu0 0
        %2665 = vmatpush1.bf16.msra.mxu0 0
        %2666 = vmatprep.subr.bf16.mxu0 0
        %2667 = vmatpush1.bf16.msra.mxu0 0
        %2668 = vmatprep.subr.bf16.mxu0 0
        %2669 = vmatpush1.bf16.msra.mxu0 0
        %2670 = vmatprep.subr.bf16.mxu0 0
        %2671 = vmatpush1.bf16.msra.mxu0 0
        %2672 = vmatprep.subr.bf16.mxu0 0
        %2673 = vmatpush1.bf16.msra.mxu0 0
        %2674 = vmatprep.subr.bf16.mxu0 0
        %2675 = vmatpush1.bf16.msra.mxu0 0
        %2676 = vmatprep.subr.bf16.mxu0 0
        %2677 = vmatpush1.bf16.msra.mxu0 0
        %2678 = vmatprep.subr.bf16.mxu0 0
        %2679 = vmatpush1.bf16.msra.mxu0 0
        %2680 = vmatprep.subr.bf16.mxu0 0
        %2681 = vmatpush1.bf16.msra.mxu0 0
        %2682 = vmatprep.subr.bf16.mxu0 0
        %2683 = vmatpush1.bf16.msra.mxu0 0
        %2684 = vmatprep.subr.bf16.mxu0 0
        %2685 = vmatpush1.bf16.msra.mxu0 0
        %2686 = vmatprep.subr.bf16.mxu0 0
        %2687 = vmatpush1.bf16.msra.mxu0 0
        %2688 = vmatprep.mubr.bf16.mxu0 0
        %2689 = vmatmul.mubr.bf16.gmra.mrb[0].mxu0 %v2651
        %v2690 = vpop.f32.mrb[0].mxu0
        %v2691 = vadd.f32 0.0, %v2690
        %v2692 = vpop.f32.mrb[0].mxu0
        %v2693 = vpop.f32.mrb[0].mxu0
        %v2694 = vadd.f32 0.0, %v2693
        %v2695 = vpop.f32.mrb[0].mxu0
        %2696 = vmatprep.mubr.bf16.mxu0 0
        %2697 = vmatmul.mubr.bf16.gmra.mrb[0].mxu0 %v2654
        %v2698 = vpop.f32.mrb[0].mxu0
        %v2699 = vadd.f32 0.0, %v2698
        %v2700 = vpop.f32.mrb[0].mxu0
        %v2701 = vpop.f32.mrb[0].mxu0
        %v2702 = vadd.f32 0.0, %v2701
        %v2703 = vpop.f32.mrb[0].mxu0
        %2704 = vdwg.mxu0
        %v2705 = vadd.f32 %v2174, %v2691
        %v2706 = vadd.f32 %v2177, %v2694
        %v2707 = vadd.f32 %v2182, %v2699
        %v2708 = vadd.f32 %v2185, %v2702
        %2709 = vrot.lane.b32.xlu0 %v1127, 32
        %v2710 = vpop.permute.xlu0 %2709
        %2711 = vrot.lane.b32.xlu0 %v1131, 32
        %v2712 = vpop.permute.xlu0 %2711
        %v2714 = vsel %vm1139, %v2710, 0
        %v2717 = vsel %vm1139, %v2712, 0
        %2719 = vmatprep.subr.bf16.mxu0 0
        %2720 = vmatpush1.bf16.xpose.msra.mxu0 %v2717
        %2721 = vmatprep.subr.bf16.mxu0 0
        %2722 = vmatpush1.bf16.xpose.msra.mxu0 0
        %2723 = vmatprep.subr.bf16.mxu0 0
        %2724 = vmatpush1.bf16.xpose.msra.mxu0 0
        %2725 = vmatprep.subr.bf16.mxu0 0
        %2726 = vmatpush1.bf16.xpose.msra.mxu0 0
        %2727 = vmatprep.subr.bf16.mxu0 0
        %2728 = vmatpush1.bf16.xpose.msra.mxu0 0
        %2729 = vmatprep.subr.bf16.mxu0 0
        %2730 = vmatpush1.bf16.xpose.msra.mxu0 0
        %2731 = vmatprep.subr.bf16.mxu0 0
        %2732 = vmatpush1.bf16.xpose.msra.mxu0 0
        %2733 = vmatprep.subr.bf16.mxu0 0
        %2734 = vmatpush1.bf16.xpose.msra.mxu0 0
        %2735 = vmatprep.subr.bf16.mxu0 0
        %2736 = vmatpush1.bf16.xpose.msra.mxu0 0
        %2737 = vmatprep.subr.bf16.mxu0 0
        %2738 = vmatpush1.bf16.xpose.msra.mxu0 0
        %2739 = vmatprep.subr.bf16.mxu0 0
        %2740 = vmatpush1.bf16.xpose.msra.mxu0 0
        %2741 = vmatprep.subr.bf16.mxu0 0
        %2742 = vmatpush1.bf16.xpose.msra.mxu0 0
        %2743 = vmatprep.subr.bf16.mxu0 0
        %2744 = vmatpush1.bf16.xpose.msra.mxu0 0
        %2745 = vmatprep.subr.bf16.mxu0 0
        %2746 = vmatpush1.bf16.xpose.msra.mxu0 0
        %2747 = vmatprep.subr.bf16.mxu0 0
        %2748 = vmatpush1.bf16.xpose.msra.mxu0 0
        %2749 = vmatprep.subr.bf16.mxu0 0
        %2750 = vmatpush1.bf16.xpose.msra.mxu0 0
        %2751 = vmatprep.mubr.bf16.mxu0 0
        %2752 = vmatmul.mubr.bf16.gmra.mrb[0].mxu0 %v2714
        %v2753 = vpop.f32.mrb[0].mxu0
        %v2754 = vadd.f32 0.0, %v2753
        %v2755 = vpop.f32.mrb[0].mxu0
        %v2756 = vpop.f32.mrb[0].mxu0
        %v2757 = vpop.f32.mrb[0].mxu0
        %2758 = vdwg.mxu0
        %2759 = vrot.lane.b32.xlu0 %v1128, 32
        %v2760 = vpop.permute.xlu0 %2759
        %2761 = vrot.lane.b32.xlu0 %v1132, 32
        %v2762 = vpop.permute.xlu0 %2761
        %v2764 = vsel %vm1139, %v2760, 0
        %v2767 = vsel %vm1139, %v2762, 0
        %2769 = vmatprep.subr.bf16.mxu0 0
        %2770 = vmatpush1.bf16.xpose.msra.mxu0 %v2767
        %2771 = vmatprep.subr.bf16.mxu0 0
        %2772 = vmatpush1.bf16.xpose.msra.mxu0 0
        %2773 = vmatprep.subr.bf16.mxu0 0
        %2774 = vmatpush1.bf16.xpose.msra.mxu0 0
        %2775 = vmatprep.subr.bf16.mxu0 0
        %2776 = vmatpush1.bf16.xpose.msra.mxu0 0
        %2777 = vmatprep.subr.bf16.mxu0 0
        %2778 = vmatpush1.bf16.xpose.msra.mxu0 0
        %2779 = vmatprep.subr.bf16.mxu0 0
        %2780 = vmatpush1.bf16.xpose.msra.mxu0 0
        %2781 = vmatprep.subr.bf16.mxu0 0
        %2782 = vmatpush1.bf16.xpose.msra.mxu0 0
        %2783 = vmatprep.subr.bf16.mxu0 0
        %2784 = vmatpush1.bf16.xpose.msra.mxu0 0
        %2785 = vmatprep.subr.bf16.mxu0 0
        %2786 = vmatpush1.bf16.xpose.msra.mxu0 0
        %2787 = vmatprep.subr.bf16.mxu0 0
        %2788 = vmatpush1.bf16.xpose.msra.mxu0 0
        %2789 = vmatprep.subr.bf16.mxu0 0
        %2790 = vmatpush1.bf16.xpose.msra.mxu0 0
        %2791 = vmatprep.subr.bf16.mxu0 0
        %2792 = vmatpush1.bf16.xpose.msra.mxu0 0
        %2793 = vmatprep.subr.bf16.mxu0 0
        %2794 = vmatpush1.bf16.xpose.msra.mxu0 0
        %2795 = vmatprep.subr.bf16.mxu0 0
        %2796 = vmatpush1.bf16.xpose.msra.mxu0 0
        %2797 = vmatprep.subr.bf16.mxu0 0
        %2798 = vmatpush1.bf16.xpose.msra.mxu0 0
        %2799 = vmatprep.subr.bf16.mxu0 0
        %2800 = vmatpush1.bf16.xpose.msra.mxu0 0
        %2801 = vmatprep.mubr.bf16.mxu0 0
        %2802 = vmatmul.mubr.bf16.gmra.mrb[0].mxu0 %v2764
        %v2803 = vpop.f32.mrb[0].mxu0
        %v2804 = vadd.f32 0.0, %v2803
        %v2805 = vpop.f32.mrb[0].mxu0
        %v2806 = vpop.f32.mrb[0].mxu0
        %v2807 = vpop.f32.mrb[0].mxu0
        %2808 = vdwg.mxu0
        %2809 = vrot.lane.b32.xlu0 %v1129, 32
        %v2810 = vpop.permute.xlu0 %2809
        %2811 = vrot.lane.b32.xlu0 %v1133, 32
        %v2812 = vpop.permute.xlu0 %2811
        %v2814 = vsel %vm1139, %v2810, 0
        %v2817 = vsel %vm1139, %v2812, 0
        %2819 = vmatprep.subr.bf16.mxu0 0
        %2820 = vmatpush1.bf16.xpose.msra.mxu0 %v2817
        %2821 = vmatprep.subr.bf16.mxu0 0
        %2822 = vmatpush1.bf16.xpose.msra.mxu0 0
        %2823 = vmatprep.subr.bf16.mxu0 0
        %2824 = vmatpush1.bf16.xpose.msra.mxu0 0
        %2825 = vmatprep.subr.bf16.mxu0 0
        %2826 = vmatpush1.bf16.xpose.msra.mxu0 0
        %2827 = vmatprep.subr.bf16.mxu0 0
        %2828 = vmatpush1.bf16.xpose.msra.mxu0 0
        %2829 = vmatprep.subr.bf16.mxu0 0
        %2830 = vmatpush1.bf16.xpose.msra.mxu0 0
        %2831 = vmatprep.subr.bf16.mxu0 0
        %2832 = vmatpush1.bf16.xpose.msra.mxu0 0
        %2833 = vmatprep.subr.bf16.mxu0 0
        %2834 = vmatpush1.bf16.xpose.msra.mxu0 0
        %2835 = vmatprep.subr.bf16.mxu0 0
        %2836 = vmatpush1.bf16.xpose.msra.mxu0 0
        %2837 = vmatprep.subr.bf16.mxu0 0
        %2838 = vmatpush1.bf16.xpose.msra.mxu0 0
        %2839 = vmatprep.subr.bf16.mxu0 0
        %2840 = vmatpush1.bf16.xpose.msra.mxu0 0
        %2841 = vmatprep.subr.bf16.mxu0 0
        %2842 = vmatpush1.bf16.xpose.msra.mxu0 0
        %2843 = vmatprep.subr.bf16.mxu0 0
        %2844 = vmatpush1.bf16.xpose.msra.mxu0 0
        %2845 = vmatprep.subr.bf16.mxu0 0
        %2846 = vmatpush1.bf16.xpose.msra.mxu0 0
        %2847 = vmatprep.subr.bf16.mxu0 0
        %2848 = vmatpush1.bf16.xpose.msra.mxu0 0
        %2849 = vmatprep.subr.bf16.mxu0 0
        %2850 = vmatpush1.bf16.xpose.msra.mxu0 0
        %2851 = vmatprep.mubr.bf16.mxu0 0
        %2852 = vmatmul.mubr.bf16.gmra.mrb[0].mxu0 %v2814
        %v2853 = vpop.f32.mrb[0].mxu0
        %v2854 = vadd.f32 0.0, %v2853
        %v2855 = vpop.f32.mrb[0].mxu0
        %v2856 = vpop.f32.mrb[0].mxu0
        %v2857 = vpop.f32.mrb[0].mxu0
        %2858 = vdwg.mxu0
        %2859 = vrot.lane.b32.xlu0 %v1130, 32
        %v2860 = vpop.permute.xlu0 %2859
        %2861 = vrot.lane.b32.xlu0 %v1134, 32
        %v2862 = vpop.permute.xlu0 %2861
        %v2864 = vsel %vm1139, %v2860, 0
        %v2867 = vsel %vm1139, %v2862, 0
        %2869 = vmatprep.subr.bf16.mxu0 0
        %2870 = vmatpush1.bf16.xpose.msra.mxu0 %v2867
        %2871 = vmatprep.subr.bf16.mxu0 0
        %2872 = vmatpush1.bf16.xpose.msra.mxu0 0
        %2873 = vmatprep.subr.bf16.mxu0 0
        %2874 = vmatpush1.bf16.xpose.msra.mxu0 0
        %2875 = vmatprep.subr.bf16.mxu0 0
        %2876 = vmatpush1.bf16.xpose.msra.mxu0 0
        %2877 = vmatprep.subr.bf16.mxu0 0
        %2878 = vmatpush1.bf16.xpose.msra.mxu0 0
        %2879 = vmatprep.subr.bf16.mxu0 0
        %2880 = vmatpush1.bf16.xpose.msra.mxu0 0
        %2881 = vmatprep.subr.bf16.mxu0 0
        %2882 = vmatpush1.bf16.xpose.msra.mxu0 0
        %2883 = vmatprep.subr.bf16.mxu0 0
        %2884 = vmatpush1.bf16.xpose.msra.mxu0 0
        %2885 = vmatprep.subr.bf16.mxu0 0
        %2886 = vmatpush1.bf16.xpose.msra.mxu0 0
        %2887 = vmatprep.subr.bf16.mxu0 0
        %2888 = vmatpush1.bf16.xpose.msra.mxu0 0
        %2889 = vmatprep.subr.bf16.mxu0 0
        %2890 = vmatpush1.bf16.xpose.msra.mxu0 0
        %2891 = vmatprep.subr.bf16.mxu0 0
        %2892 = vmatpush1.bf16.xpose.msra.mxu0 0
        %2893 = vmatprep.subr.bf16.mxu0 0
        %2894 = vmatpush1.bf16.xpose.msra.mxu0 0
        %2895 = vmatprep.subr.bf16.mxu0 0
        %2896 = vmatpush1.bf16.xpose.msra.mxu0 0
        %2897 = vmatprep.subr.bf16.mxu0 0
        %2898 = vmatpush1.bf16.xpose.msra.mxu0 0
        %2899 = vmatprep.subr.bf16.mxu0 0
        %2900 = vmatpush1.bf16.xpose.msra.mxu0 0
        %2901 = vmatprep.mubr.bf16.mxu0 0
        %2902 = vmatmul.mubr.bf16.gmra.mrb[0].mxu0 %v2864
        %v2903 = vpop.f32.mrb[0].mxu0
        %v2904 = vadd.f32 0.0, %v2903
        %v2905 = vpop.f32.mrb[0].mxu0
        %v2906 = vpop.f32.mrb[0].mxu0
        %v2907 = vpop.f32.mrb[0].mxu0
        %2908 = vdwg.mxu0
        %v2909 = vmul.f32 %v2754, 0.17677669
        %v2910 = vmul.f32 %v2804, 0.17677669
        %v2911 = vmul.f32 %v2854, 0.17677669
        %v2912 = vmul.f32 %v2904, 0.17677669
        %v2913 = vadd.f32 %v2909, %v1335
        %v2914 = vadd.f32 %v2910, %v1339
        %v2915 = vadd.f32 %v2911, %v1343
        %v2916 = vadd.f32 %v2912, %v1347
        %v2917 = vsel %vm1356, %v2913, -inf
        %2918 = vmax.xlane.f32.xlu0 %v2917
        %v2919 = vpop.xlane.xlu0 %2918
        %v2920 = vsel %vm1356, %v2914, -inf
        %2921 = vmax.xlane.f32.xlu0 %v2920
        %v2922 = vpop.xlane.xlu0 %2921
        %v2923 = vsel %vm1356, %v2915, -inf
        %2924 = vmax.xlane.f32.xlu0 %v2923
        %v2925 = vpop.xlane.xlu0 %2924
        %v2926 = vsel %vm1356, %v2916, -inf
        %2927 = vmax.xlane.f32.xlu0 %v2926
        %v2928 = vpop.xlane.xlu0 %2927
        %v2929 = vsub.f32 %v2913, %v2919
        %v2930 = vsub.f32 %v2914, %v2922
        %v2931 = vsub.f32 %v2915, %v2925
        %v2932 = vsub.f32 %v2916, %v2928
        %v2933 = vmul.f32 %v2929, 1.442695
        %v2934 = vpow.pop %v2933
        %v2935 = vmul.f32 %v2930, 1.442695
        %v2936 = vpow.pop %v2935
        %v2937 = vmul.f32 %v2931, 1.442695
        %v2938 = vpow.pop %v2937
        %v2939 = vmul.f32 %v2932, 1.442695
        %v2940 = vpow.pop %v2939
        %v2941 = vsel %vm1356, %v2934, 0.0
        %2942 = vadd.xlane.f32.xlu0 %v2941
        %v2943 = vpop.xlane.xlu0 %2942
        %v2944 = vsel %vm1356, %v2936, 0.0
        %2945 = vadd.xlane.f32.xlu0 %v2944
        %v2946 = vpop.xlane.xlu0 %2945
        %v2947 = vsel %vm1356, %v2938, 0.0
        %2948 = vadd.xlane.f32.xlu0 %v2947
        %v2949 = vpop.xlane.xlu0 %2948
        %v2950 = vsel %vm1356, %v2940, 0.0
        %2951 = vadd.xlane.f32.xlu0 %v2950
        %v2952 = vpop.xlane.xlu0 %2951
        %v2953 = vrcp.pop %v2943
        %v2954 = vrcp.pop %v2946
        %v2955 = vrcp.pop %v2949
        %v2956 = vrcp.pop %v2952
        %v2957 = vmul.f32 %v2934, %v2953
        %v2958 = vmul.f32 %v2936, %v2954
        %v2959 = vmul.f32 %v2938, %v2955
        %v2960 = vmul.f32 %v2940, %v2956
        %v2961 = vpack.c.bf16 %v2957, %v2957
        %v2962 = vpack.c.bf16 %v2958, %v2958
        %v2963 = vpack.c.bf16 %v2959, %v2959
        %v2964 = vpack.c.bf16 %v2960, %v2960
        %2965 = vrot.lane.b32.xlu0 %v1135, 32
        %v2966 = vpop.permute.xlu0 %2965
        %v2968 = vsel %vm1356, %v2961, 0
        %v2971 = vsel %vm1408, %v2966, 0
        %2973 = vmatprep.subr.bf16.mxu0 0
        %2974 = vmatpush1.bf16.msra.mxu0 %v2971
        %2975 = vmatprep.subr.bf16.mxu0 0
        %2976 = vmatpush1.bf16.msra.mxu0 0
        %2977 = vmatprep.subr.bf16.mxu0 0
        %2978 = vmatpush1.bf16.msra.mxu0 0
        %2979 = vmatprep.subr.bf16.mxu0 0
        %2980 = vmatpush1.bf16.msra.mxu0 0
        %2981 = vmatprep.subr.bf16.mxu0 0
        %2982 = vmatpush1.bf16.msra.mxu0 0
        %2983 = vmatprep.subr.bf16.mxu0 0
        %2984 = vmatpush1.bf16.msra.mxu0 0
        %2985 = vmatprep.subr.bf16.mxu0 0
        %2986 = vmatpush1.bf16.msra.mxu0 0
        %2987 = vmatprep.subr.bf16.mxu0 0
        %2988 = vmatpush1.bf16.msra.mxu0 0
        %2989 = vmatprep.subr.bf16.mxu0 0
        %2990 = vmatpush1.bf16.msra.mxu0 0
        %2991 = vmatprep.subr.bf16.mxu0 0
        %2992 = vmatpush1.bf16.msra.mxu0 0
        %2993 = vmatprep.subr.bf16.mxu0 0
        %2994 = vmatpush1.bf16.msra.mxu0 0
        %2995 = vmatprep.subr.bf16.mxu0 0
        %2996 = vmatpush1.bf16.msra.mxu0 0
        %2997 = vmatprep.subr.bf16.mxu0 0
        %2998 = vmatpush1.bf16.msra.mxu0 0
        %2999 = vmatprep.subr.bf16.mxu0 0
        %3000 = vmatpush1.bf16.msra.mxu0 0
        %3001 = vmatprep.subr.bf16.mxu0 0
        %3002 = vmatpush1.bf16.msra.mxu0 0
        %3003 = vmatprep.subr.bf16.mxu0 0
        %3004 = vmatpush1.bf16.msra.mxu0 0
        %3005 = vmatprep.mubr.bf16.mxu0 0
        %3006 = vmatmul.mubr.bf16.gmra.mrb[0].mxu0 %v2968
        %v3007 = vpop.f32.mrb[0].mxu0
        %v3008 = vadd.f32 0.0, %v3007
        %v3009 = vpop.f32.mrb[0].mxu0
        %v3010 = vpop.f32.mrb[0].mxu0
        %v3011 = vpop.f32.mrb[0].mxu0
        %3012 = vdwg.mxu0
        %3013 = vrot.lane.b32.xlu0 %v1136, 32
        %v3014 = vpop.permute.xlu0 %3013
        %v3016 = vsel %vm1356, %v2962, 0
        %v3019 = vsel %vm1408, %v3014, 0
        %3021 = vmatprep.subr.bf16.mxu0 0
        %3022 = vmatpush1.bf16.msra.mxu0 %v3019
        %3023 = vmatprep.subr.bf16.mxu0 0
        %3024 = vmatpush1.bf16.msra.mxu0 0
        %3025 = vmatprep.subr.bf16.mxu0 0
        %3026 = vmatpush1.bf16.msra.mxu0 0
        %3027 = vmatprep.subr.bf16.mxu0 0
        %3028 = vmatpush1.bf16.msra.mxu0 0
        %3029 = vmatprep.subr.bf16.mxu0 0
        %3030 = vmatpush1.bf16.msra.mxu0 0
        %3031 = vmatprep.subr.bf16.mxu0 0
        %3032 = vmatpush1.bf16.msra.mxu0 0
        %3033 = vmatprep.subr.bf16.mxu0 0
        %3034 = vmatpush1.bf16.msra.mxu0 0
        %3035 = vmatprep.subr.bf16.mxu0 0
        %3036 = vmatpush1.bf16.msra.mxu0 0
        %3037 = vmatprep.subr.bf16.mxu0 0
        %3038 = vmatpush1.bf16.msra.mxu0 0
        %3039 = vmatprep.subr.bf16.mxu0 0
        %3040 = vmatpush1.bf16.msra.mxu0 0
        %3041 = vmatprep.subr.bf16.mxu0 0
        %3042 = vmatpush1.bf16.msra.mxu0 0
        %3043 = vmatprep.subr.bf16.mxu0 0
        %3044 = vmatpush1.bf16.msra.mxu0 0
        %3045 = vmatprep.subr.bf16.mxu0 0
        %3046 = vmatpush1.bf16.msra.mxu0 0
        %3047 = vmatprep.subr.bf16.mxu0 0
        %3048 = vmatpush1.bf16.msra.mxu0 0
        %3049 = vmatprep.subr.bf16.mxu0 0
        %3050 = vmatpush1.bf16.msra.mxu0 0
        %3051 = vmatprep.subr.bf16.mxu0 0
        %3052 = vmatpush1.bf16.msra.mxu0 0
        %3053 = vmatprep.mubr.bf16.mxu0 0
        %3054 = vmatmul.mubr.bf16.gmra.mrb[0].mxu0 %v3016
        %v3055 = vpop.f32.mrb[0].mxu0
        %v3056 = vadd.f32 0.0, %v3055
        %v3057 = vpop.f32.mrb[0].mxu0
        %v3058 = vpop.f32.mrb[0].mxu0
        %v3059 = vpop.f32.mrb[0].mxu0
        %3060 = vdwg.mxu0
        %3061 = vrot.lane.b32.xlu0 %v1137, 32
        %v3062 = vpop.permute.xlu0 %3061
        %v3064 = vsel %vm1356, %v2963, 0
        %v3067 = vsel %vm1408, %v3062, 0
        %3069 = vmatprep.subr.bf16.mxu0 0
        %3070 = vmatpush1.bf16.msra.mxu0 %v3067
        %3071 = vmatprep.subr.bf16.mxu0 0
        %3072 = vmatpush1.bf16.msra.mxu0 0
        %3073 = vmatprep.subr.bf16.mxu0 0
        %3074 = vmatpush1.bf16.msra.mxu0 0
        %3075 = vmatprep.subr.bf16.mxu0 0
        %3076 = vmatpush1.bf16.msra.mxu0 0
        %3077 = vmatprep.subr.bf16.mxu0 0
        %3078 = vmatpush1.bf16.msra.mxu0 0
        %3079 = vmatprep.subr.bf16.mxu0 0
        %3080 = vmatpush1.bf16.msra.mxu0 0
        %3081 = vmatprep.subr.bf16.mxu0 0
        %3082 = vmatpush1.bf16.msra.mxu0 0
        %3083 = vmatprep.subr.bf16.mxu0 0
        %3084 = vmatpush1.bf16.msra.mxu0 0
        %3085 = vmatprep.subr.bf16.mxu0 0
        %3086 = vmatpush1.bf16.msra.mxu0 0
        %3087 = vmatprep.subr.bf16.mxu0 0
        %3088 = vmatpush1.bf16.msra.mxu0 0
        %3089 = vmatprep.subr.bf16.mxu0 0
        %3090 = vmatpush1.bf16.msra.mxu0 0
        %3091 = vmatprep.subr.bf16.mxu0 0
        %3092 = vmatpush1.bf16.msra.mxu0 0
        %3093 = vmatprep.subr.bf16.mxu0 0
        %3094 = vmatpush1.bf16.msra.mxu0 0
        %3095 = vmatprep.subr.bf16.mxu0 0
        %3096 = vmatpush1.bf16.msra.mxu0 0
        %3097 = vmatprep.subr.bf16.mxu0 0
        %3098 = vmatpush1.bf16.msra.mxu0 0
        %3099 = vmatprep.subr.bf16.mxu0 0
        %3100 = vmatpush1.bf16.msra.mxu0 0
        %3101 = vmatprep.mubr.bf16.mxu0 0
        %3102 = vmatmul.mubr.bf16.gmra.mrb[0].mxu0 %v3064
        %v3103 = vpop.f32.mrb[0].mxu0
        %v3104 = vadd.f32 0.0, %v3103
        %v3105 = vpop.f32.mrb[0].mxu0
        %v3106 = vpop.f32.mrb[0].mxu0
        %v3107 = vpop.f32.mrb[0].mxu0
        %3108 = vdwg.mxu0
        %3109 = vrot.lane.b32.xlu0 %v1138, 32
        %v3110 = vpop.permute.xlu0 %3109
        %v3112 = vsel %vm1356, %v2964, 0
        %v3115 = vsel %vm1408, %v3110, 0
        %3117 = vmatprep.subr.bf16.mxu0 0
        %3118 = vmatpush1.bf16.msra.mxu0 %v3115
        %3119 = vmatprep.subr.bf16.mxu0 0
        %3120 = vmatpush1.bf16.msra.mxu0 0
        %3121 = vmatprep.subr.bf16.mxu0 0
        %3122 = vmatpush1.bf16.msra.mxu0 0
        %3123 = vmatprep.subr.bf16.mxu0 0
        %3124 = vmatpush1.bf16.msra.mxu0 0
        %3125 = vmatprep.subr.bf16.mxu0 0
        %3126 = vmatpush1.bf16.msra.mxu0 0
        %3127 = vmatprep.subr.bf16.mxu0 0
        %3128 = vmatpush1.bf16.msra.mxu0 0
        %3129 = vmatprep.subr.bf16.mxu0 0
        %3130 = vmatpush1.bf16.msra.mxu0 0
        %3131 = vmatprep.subr.bf16.mxu0 0
        %3132 = vmatpush1.bf16.msra.mxu0 0
        %3133 = vmatprep.subr.bf16.mxu0 0
        %3134 = vmatpush1.bf16.msra.mxu0 0
        %3135 = vmatprep.subr.bf16.mxu0 0
        %3136 = vmatpush1.bf16.msra.mxu0 0
        %3137 = vmatprep.subr.bf16.mxu0 0
        %3138 = vmatpush1.bf16.msra.mxu0 0
        %3139 = vmatprep.subr.bf16.mxu0 0
        %3140 = vmatpush1.bf16.msra.mxu0 0
        %3141 = vmatprep.subr.bf16.mxu0 0
        %3142 = vmatpush1.bf16.msra.mxu0 0
        %3143 = vmatprep.subr.bf16.mxu0 0
        %3144 = vmatpush1.bf16.msra.mxu0 0
        %3145 = vmatprep.subr.bf16.mxu0 0
        %3146 = vmatpush1.bf16.msra.mxu0 0
        %3147 = vmatprep.subr.bf16.mxu0 0
        %3148 = vmatpush1.bf16.msra.mxu0 0
        %3149 = vmatprep.mubr.bf16.mxu0 0
        %3150 = vmatmul.mubr.bf16.gmra.mrb[0].mxu0 %v3112
        %v3151 = vpop.f32.mrb[0].mxu0
        %v3152 = vadd.f32 0.0, %v3151
        %v3153 = vpop.f32.mrb[0].mxu0
        %v3154 = vpop.f32.mrb[0].mxu0
        %v3155 = vpop.f32.mrb[0].mxu0
        %3156 = vdwg.mxu0
        %v3157 = vpack.c.bf16 %v3056, %v3008
        %v3158 = vpack.c.bf16 %v3152, %v3104
        %v3163 = vunpack.c.l.b16 %v1123
        %v3164 = vunpack.c.l.b16 %v1124
        %v3165 = vunpack.c.l.b16 %v1125
        %v3166 = vunpack.c.l.b16 %v1126
        %v3167 = vpack.c.b16 %v3164, %v3163
        %v3168 = vpack.c.b16 %v3166, %v3165
        %v3172 = vsel %vm1139, %v3157, 0
        %v3175 = vsel %vm1139, %v3158, 0
        %3177 = vmatprep.subr.bf16.mxu0 0
        %3178 = vmatpush1.bf16.msra.mxu0 %v3167
        %3179 = vmatprep.subr.bf16.mxu0 0
        %3180 = vmatpush1.bf16.msra.mxu0 %v3168
        %3181 = vmatprep.subr.bf16.mxu0 0
        %3182 = vmatpush1.bf16.msra.mxu0 0
        %3183 = vmatprep.subr.bf16.mxu0 0
        %3184 = vmatpush1.bf16.msra.mxu0 0
        %3185 = vmatprep.subr.bf16.mxu0 0
        %3186 = vmatpush1.bf16.msra.mxu0 0
        %3187 = vmatprep.subr.bf16.mxu0 0
        %3188 = vmatpush1.bf16.msra.mxu0 0
        %3189 = vmatprep.subr.bf16.mxu0 0
        %3190 = vmatpush1.bf16.msra.mxu0 0
        %3191 = vmatprep.subr.bf16.mxu0 0
        %3192 = vmatpush1.bf16.msra.mxu0 0
        %3193 = vmatprep.subr.bf16.mxu0 0
        %3194 = vmatpush1.bf16.msra.mxu0 0
        %3195 = vmatprep.subr.bf16.mxu0 0
        %3196 = vmatpush1.bf16.msra.mxu0 0
        %3197 = vmatprep.subr.bf16.mxu0 0
        %3198 = vmatpush1.bf16.msra.mxu0 0
        %3199 = vmatprep.subr.bf16.mxu0 0
        %3200 = vmatpush1.bf16.msra.mxu0 0
        %3201 = vmatprep.subr.bf16.mxu0 0
        %3202 = vmatpush1.bf16.msra.mxu0 0
        %3203 = vmatprep.subr.bf16.mxu0 0
        %3204 = vmatpush1.bf16.msra.mxu0 0
        %3205 = vmatprep.subr.bf16.mxu0 0
        %3206 = vmatpush1.bf16.msra.mxu0 0
        %3207 = vmatprep.subr.bf16.mxu0 0
        %3208 = vmatpush1.bf16.msra.mxu0 0
        %3209 = vmatprep.mubr.bf16.mxu0 0
        %3210 = vmatmul.mubr.bf16.gmra.mrb[0].mxu0 %v3172
        %v3211 = vpop.f32.mrb[0].mxu0
        %v3212 = vadd.f32 0.0, %v3211
        %v3213 = vpop.f32.mrb[0].mxu0
        %v3214 = vpop.f32.mrb[0].mxu0
        %v3215 = vadd.f32 0.0, %v3214
        %v3216 = vpop.f32.mrb[0].mxu0
        %3217 = vmatprep.mubr.bf16.mxu0 0
        %3218 = vmatmul.mubr.bf16.gmra.mrb[0].mxu0 %v3175
        %v3219 = vpop.f32.mrb[0].mxu0
        %v3220 = vadd.f32 0.0, %v3219
        %v3221 = vpop.f32.mrb[0].mxu0
        %v3222 = vpop.f32.mrb[0].mxu0
        %v3223 = vadd.f32 0.0, %v3222
        %v3224 = vpop.f32.mrb[0].mxu0
        %3225 = vdwg.mxu0
        %v3226 = vadd.f32 %v2705, %v3212
        %v3227 = vadd.f32 %v2706, %v3215
        %v3228 = vadd.f32 %v2707, %v3220
        %v3229 = vadd.f32 %v2708, %v3223
        %v3230 = vld [vmem:[%s722] sm:$0x1]
        %v3232 = vlaneseq
        %v3233 = vshrl.u32 %v3232, 7
        %v3234 = vsub.s32 0, %v3233
        %v3235 = vrot.slane %v3230, %v3234
        %v3237 = vadd.f32 %v3226, %v3235
        %v3238 = vadd.f32 %v3227, %v3235
        %v3239 = vadd.f32 %v3228, %v3235
        %v3240 = vadd.f32 %v3229, %v3235
        %v3241 = vadd.f32 %v3237, %v822
        %v3242 = vadd.f32 %v3238, %v823
        %v3243 = vadd.f32 %v3239, %v824
        %v3244 = vadd.f32 %v3240, %v825
        %v3245 = vld [vmem:[%s725] sm:$0x1]
        %v3246 = vld [vmem:[%s728] sm:$0x1]
        %3247 = vadd.xlane.f32.xlu0 %v3241
        %v3248 = vpop.xlane.xlu0 %3247
        %3249 = vadd.xlane.f32.xlu0 %v3242
        %v3250 = vpop.xlane.xlu0 %3249
        %3251 = vadd.xlane.f32.xlu0 %v3243
        %v3252 = vpop.xlane.xlu0 %3251
        %3253 = vadd.xlane.f32.xlu0 %v3244
        %v3254 = vpop.xlane.xlu0 %3253
        %v3255 = vrcp.pop 128.0
        %v3256 = vmul.f32 %v3248, %v3255
        %v3257 = vmul.f32 %v3250, %v3255
        %v3258 = vmul.f32 %v3252, %v3255
        %v3259 = vmul.f32 %v3254, %v3255
        %v3260 = vsub.f32 %v3241, %v3256
        %v3261 = vsub.f32 %v3242, %v3257
        %v3262 = vsub.f32 %v3243, %v3258
        %v3263 = vsub.f32 %v3244, %v3259
        %v3264 = vmul.f32 %v3260, %v3260
        %v3265 = vmul.f32 %v3261, %v3261
        %v3266 = vmul.f32 %v3262, %v3262
        %v3267 = vmul.f32 %v3263, %v3263
        %3268 = vadd.xlane.f32.xlu0 %v3264
        %v3269 = vpop.xlane.xlu0 %3268
        %3270 = vadd.xlane.f32.xlu0 %v3265
        %v3271 = vpop.xlane.xlu0 %3270
        %3272 = vadd.xlane.f32.xlu0 %v3266
        %v3273 = vpop.xlane.xlu0 %3272
        %3274 = vadd.xlane.f32.xlu0 %v3267
        %v3275 = vpop.xlane.xlu0 %3274
        %v3276 = vmul.f32 %v3269, %v3255
        %v3277 = vmul.f32 %v3271, %v3255
        %v3278 = vmul.f32 %v3273, %v3255
        %v3279 = vmul.f32 %v3275, %v3255
        %v3280 = vadd.f32 %v3276, 1e-12
        %v3281 = vadd.f32 %v3277, 1e-12
        %v3282 = vadd.f32 %v3278, 1e-12
        %v3283 = vadd.f32 %v3279, 1e-12
        %v3284 = vrsqrt.pop %v3280
        %v3285 = vrsqrt.pop %v3281
        %v3286 = vrsqrt.pop %v3282
        %v3287 = vrsqrt.pop %v3283
        %v3288 = vmul.f32 %v3260, %v3284
        %v3289 = vmul.f32 %v3261, %v3285
        %v3290 = vmul.f32 %v3262, %v3286
        %v3291 = vmul.f32 %v3263, %v3287
        %v3293 = vlaneseq
        %v3294 = vshrl.u32 %v3293, 7
        %v3295 = vsub.s32 0, %v3294
        %v3296 = vrot.slane %v3245, %v3295
        %v3298 = vmul.f32 %v3288, %v3296
        %v3299 = vmul.f32 %v3289, %v3296
        %v3300 = vmul.f32 %v3290, %v3296
        %v3301 = vmul.f32 %v3291, %v3296
        %v3303 = vlaneseq
        %v3304 = vshrl.u32 %v3303, 7
        %v3305 = vsub.s32 0, %v3304
        %v3306 = vrot.slane %v3246, %v3305
        %v3308 = vadd.f32 %v3298, %v3306
        %v3309 = vadd.f32 %v3299, %v3306
        %v3310 = vadd.f32 %v3300, %v3306
        %v3311 = vadd.f32 %v3301, %v3306
        %v3312 = vpack.c.bf16 %v3309, %v3308
        %v3313 = vpack.c.bf16 %v3311, %v3310
        %v3314 = vld [vmem:[%s617] sm:$0xff]
        %v3315 = vld [vmem:[%s617 + $0x8] sm:$0xff]
        %v3316 = vld [vmem:[%s617 + $0x10] sm:$0xff]
        %v3317 = vld [vmem:[%s617 + $0x18] sm:$0xff]
        %v3318 = vld [vmem:[%s617 + $0x20] sm:$0xff]
        %v3319 = vld [vmem:[%s617 + $0x28] sm:$0xff]
        %v3320 = vld [vmem:[%s617 + $0x30] sm:$0xff]
        %v3321 = vld [vmem:[%s617 + $0x38] sm:$0xff]
        %v3322 = vld [vmem:[%s617 + $0x40] sm:$0xff]
        %v3323 = vld [vmem:[%s617 + $0x48] sm:$0xff]
        %v3324 = vld [vmem:[%s617 + $0x50] sm:$0xff]
        %v3325 = vld [vmem:[%s617 + $0x58] sm:$0xff]
        %v3326 = vld [vmem:[%s617 + $0x60] sm:$0xff]
        %v3327 = vld [vmem:[%s617 + $0x68] sm:$0xff]
        %v3328 = vld [vmem:[%s617 + $0x70] sm:$0xff]
        %v3329 = vld [vmem:[%s617 + $0x78] sm:$0xff]
        %v3330 = vld [vmem:[%s617 + $0x80] sm:$0xff]
        %v3331 = vld [vmem:[%s617 + $0x88] sm:$0xff]
        %v3332 = vld [vmem:[%s617 + $0x90] sm:$0xff]
        %v3333 = vld [vmem:[%s617 + $0x98] sm:$0xff]
        %v3334 = vld [vmem:[%s617 + $0xa0] sm:$0xff]
        %v3335 = vld [vmem:[%s617 + $0xa8] sm:$0xff]
        %v3336 = vld [vmem:[%s617 + $0xb0] sm:$0xff]
        %v3337 = vld [vmem:[%s617 + $0xb8] sm:$0xff]
        %v3338 = vld [vmem:[%s617 + $0xc0] sm:$0xff]
        %v3339 = vld [vmem:[%s617 + $0xc8] sm:$0xff]
        %v3340 = vld [vmem:[%s617 + $0xd0] sm:$0xff]
        %v3341 = vld [vmem:[%s617 + $0xd8] sm:$0xff]
        %v3342 = vld [vmem:[%s617 + $0xe0] sm:$0xff]
        %v3343 = vld [vmem:[%s617 + $0xe8] sm:$0xff]
        %v3344 = vld [vmem:[%s617 + $0xf0] sm:$0xff]
        %v3345 = vld [vmem:[%s617 + $0xf8] sm:$0xff]
        %v3346 = vld [vmem:[%s732] sm:$0xf]
        %v3348 = vlaneseq
        %v3349 = vshrl.u32 %v3348, 7
        %v3350 = vsub.s32 0, %v3349
        %v3351 = vrot.slane %v3346, %v3350
        %v3352 = vlaneseq
        %v3353 = vshrl.u32 %v3352, 7
        %v3354 = vsub.s32 1, %v3353
        %v3355 = vrot.slane %v3346, %v3354
        %v3356 = vlaneseq
        %v3357 = vshrl.u32 %v3356, 7
        %v3358 = vsub.s32 2, %v3357
        %v3359 = vrot.slane %v3346, %v3358
        %v3360 = vlaneseq
        %v3361 = vshrl.u32 %v3360, 7
        %v3362 = vsub.s32 3, %v3361
        %v3363 = vrot.slane %v3346, %v3362
        %v3400 = vunpack.c.l.b16 %v3314
        %v3401 = vunpack.c.h.b16 %v3314
        %v3402 = vunpack.c.l.b16 %v3315
        %v3403 = vunpack.c.h.b16 %v3315
        %v3404 = vunpack.c.l.b16 %v3316
        %v3405 = vunpack.c.h.b16 %v3316
        %v3406 = vunpack.c.l.b16 %v3317
        %v3407 = vunpack.c.h.b16 %v3317
        %v3408 = vunpack.c.l.b16 %v3318
        %v3409 = vunpack.c.h.b16 %v3318
        %v3410 = vunpack.c.l.b16 %v3319
        %v3411 = vunpack.c.h.b16 %v3319
        %v3412 = vunpack.c.l.b16 %v3320
        %v3413 = vunpack.c.h.b16 %v3320
        %v3414 = vunpack.c.l.b16 %v3321
        %v3415 = vunpack.c.h.b16 %v3321
        %v3416 = vunpack.c.l.b16 %v3322
        %v3417 = vunpack.c.h.b16 %v3322
        %v3418 = vunpack.c.l.b16 %v3323
        %v3419 = vunpack.c.h.b16 %v3323
        %v3420 = vunpack.c.l.b16 %v3324
        %v3421 = vunpack.c.h.b16 %v3324
        %v3422 = vunpack.c.l.b16 %v3325
        %v3423 = vunpack.c.h.b16 %v3325
        %v3424 = vunpack.c.l.b16 %v3326
        %v3425 = vunpack.c.h.b16 %v3326
        %v3426 = vunpack.c.l.b16 %v3327
        %v3427 = vunpack.c.h.b16 %v3327
        %v3428 = vunpack.c.l.b16 %v3328
        %v3429 = vunpack.c.h.b16 %v3328
        %v3430 = vunpack.c.l.b16 %v3329
        %v3431 = vunpack.c.h.b16 %v3329
        %v3432 = vunpack.c.l.b16 %v3330
        %v3433 = vunpack.c.h.b16 %v3330
        %v3434 = vunpack.c.l.b16 %v3331
        %v3435 = vunpack.c.h.b16 %v3331
        %v3436 = vunpack.c.l.b16 %v3332
        %v3437 = vunpack.c.h.b16 %v3332
        %v3438 = vunpack.c.l.b16 %v3333
        %v3439 = vunpack.c.h.b16 %v3333
        %v3440 = vunpack.c.l.b16 %v3334
        %v3441 = vunpack.c.h.b16 %v3334
        %v3442 = vunpack.c.l.b16 %v3335
        %v3443 = vunpack.c.h.b16 %v3335
        %v3444 = vunpack.c.l.b16 %v3336
        %v3445 = vunpack.c.h.b16 %v3336
        %v3446 = vunpack.c.l.b16 %v3337
        %v3447 = vunpack.c.h.b16 %v3337
        %v3448 = vunpack.c.l.b16 %v3338
        %v3449 = vunpack.c.h.b16 %v3338
        %v3450 = vunpack.c.l.b16 %v3339
        %v3451 = vunpack.c.h.b16 %v3339
        %v3452 = vunpack.c.l.b16 %v3340
        %v3453 = vunpack.c.h.b16 %v3340
        %v3454 = vunpack.c.l.b16 %v3341
        %v3455 = vunpack.c.h.b16 %v3341
        %v3456 = vunpack.c.l.b16 %v3342
        %v3457 = vunpack.c.h.b16 %v3342
        %v3458 = vunpack.c.l.b16 %v3343
        %v3459 = vunpack.c.h.b16 %v3343
        %v3460 = vunpack.c.l.b16 %v3344
        %v3461 = vunpack.c.h.b16 %v3344
        %v3462 = vunpack.c.l.b16 %v3345
        %v3463 = vunpack.c.h.b16 %v3345
        %v3464 = vpack.c.b16 %v3404, %v3400
        %v3465 = vpack.c.b16 %v3405, %v3401
        %v3466 = vpack.c.b16 %v3406, %v3402
        %v3467 = vpack.c.b16 %v3407, %v3403
        %v3468 = vpack.c.b16 %v3412, %v3408
        %v3469 = vpack.c.b16 %v3413, %v3409
        %v3470 = vpack.c.b16 %v3414, %v3410
        %v3471 = vpack.c.b16 %v3415, %v3411
        %v3472 = vpack.c.b16 %v3420, %v3416
        %v3473 = vpack.c.b16 %v3421, %v3417
        %v3474 = vpack.c.b16 %v3422, %v3418
        %v3475 = vpack.c.b16 %v3423, %v3419
        %v3476 = vpack.c.b16 %v3428, %v3424
        %v3477 = vpack.c.b16 %v3429, %v3425
        %v3478 = vpack.c.b16 %v3430, %v3426
        %v3479 = vpack.c.b16 %v3431, %v3427
        %v3480 = vpack.c.b16 %v3436, %v3432
        %v3481 = vpack.c.b16 %v3437, %v3433
        %v3482 = vpack.c.b16 %v3438, %v3434
        %v3483 = vpack.c.b16 %v3439, %v3435
        %v3484 = vpack.c.b16 %v3444, %v3440
        %v3485 = vpack.c.b16 %v3445, %v3441
        %v3486 = vpack.c.b16 %v3446, %v3442
        %v3487 = vpack.c.b16 %v3447, %v3443
        %v3488 = vpack.c.b16 %v3452, %v3448
        %v3489 = vpack.c.b16 %v3453, %v3449
        %v3490 = vpack.c.b16 %v3454, %v3450
        %v3491 = vpack.c.b16 %v3455, %v3451
        %v3492 = vpack.c.b16 %v3460, %v3456
        %v3493 = vpack.c.b16 %v3461, %v3457
        %v3494 = vpack.c.b16 %v3462, %v3458
        %v3495 = vpack.c.b16 %v3463, %v3459
        %3528 = vmatprep.subr.bf16.mxu0 %v3465
        %3529 = vmatpush1.bf16.msra.mxu0 %v3464
        %3530 = vmatprep.subr.bf16.mxu0 %v3469
        %3531 = vmatpush1.bf16.msra.mxu0 %v3468
        %3532 = vmatprep.subr.bf16.mxu0 %v3473
        %3533 = vmatpush1.bf16.msra.mxu0 %v3472
        %3534 = vmatprep.subr.bf16.mxu0 %v3477
        %3535 = vmatpush1.bf16.msra.mxu0 %v3476
        %3536 = vmatprep.subr.bf16.mxu0 %v3481
        %3537 = vmatpush1.bf16.msra.mxu0 %v3480
        %3538 = vmatprep.subr.bf16.mxu0 %v3485
        %3539 = vmatpush1.bf16.msra.mxu0 %v3484
        %3540 = vmatprep.subr.bf16.mxu0 %v3489
        %3541 = vmatpush1.bf16.msra.mxu0 %v3488
        %3542 = vmatprep.subr.bf16.mxu0 %v3493
        %3543 = vmatpush1.bf16.msra.mxu0 %v3492
        %3544 = vmatprep.subr.bf16.mxu0 0
        %3545 = vmatpush1.bf16.msra.mxu0 0
        %3546 = vmatprep.subr.bf16.mxu0 0
        %3547 = vmatpush1.bf16.msra.mxu0 0
        %3548 = vmatprep.subr.bf16.mxu0 0
        %3549 = vmatpush1.bf16.msra.mxu0 0
        %3550 = vmatprep.subr.bf16.mxu0 0
        %3551 = vmatpush1.bf16.msra.mxu0 0
        %3552 = vmatprep.subr.bf16.mxu0 0
        %3553 = vmatpush1.bf16.msra.mxu0 0
        %3554 = vmatprep.subr.bf16.mxu0 0
        %3555 = vmatpush1.bf16.msra.mxu0 0
        %3556 = vmatprep.subr.bf16.mxu0 0
        %3557 = vmatpush1.bf16.msra.mxu0 0
        %3558 = vmatprep.subr.bf16.mxu0 0
        %3559 = vmatpush1.bf16.msra.mxu0 0
        %3560 = vmatprep.mubr.bf16.mxu0 0
        %3561 = vmatmul.mubr.bf16.gmra.mrb[0].mxu0 %v3312
        %v3562 = vpop.f32.mrb[0].mxu0
        %v3563 = vadd.f32 %v3351, %v3562
        %v3564 = vpop.f32.mrb[0].mxu0
        %v3565 = vadd.f32 %v3355, %v3564
        %v3566 = vpop.f32.mrb[0].mxu0
        %v3567 = vadd.f32 %v3351, %v3566
        %v3568 = vpop.f32.mrb[0].mxu0
        %v3569 = vadd.f32 %v3355, %v3568
        %3570 = vmatprep.mubr.bf16.mxu0 0
        %3571 = vmatmul.mubr.bf16.gmra.mrb[0].mxu0 %v3313
        %v3572 = vpop.f32.mrb[0].mxu0
        %v3573 = vadd.f32 %v3351, %v3572
        %v3574 = vpop.f32.mrb[0].mxu0
        %v3575 = vadd.f32 %v3355, %v3574
        %v3576 = vpop.f32.mrb[0].mxu0
        %v3577 = vadd.f32 %v3351, %v3576
        %v3578 = vpop.f32.mrb[0].mxu0
        %v3579 = vadd.f32 %v3355, %v3578
        %3580 = vdwg.mxu0
        %3581 = vmatprep.subr.bf16.mxu0 %v3467
        %3582 = vmatpush1.bf16.msra.mxu0 %v3466
        %3583 = vmatprep.subr.bf16.mxu0 %v3471
        %3584 = vmatpush1.bf16.msra.mxu0 %v3470
        %3585 = vmatprep.subr.bf16.mxu0 %v3475
        %3586 = vmatpush1.bf16.msra.mxu0 %v3474
        %3587 = vmatprep.subr.bf16.mxu0 %v3479
        %3588 = vmatpush1.bf16.msra.mxu0 %v3478
        %3589 = vmatprep.subr.bf16.mxu0 %v3483
        %3590 = vmatpush1.bf16.msra.mxu0 %v3482
        %3591 = vmatprep.subr.bf16.mxu0 %v3487
        %3592 = vmatpush1.bf16.msra.mxu0 %v3486
        %3593 = vmatprep.subr.bf16.mxu0 %v3491
        %3594 = vmatpush1.bf16.msra.mxu0 %v3490
        %3595 = vmatprep.subr.bf16.mxu0 %v3495
        %3596 = vmatpush1.bf16.msra.mxu0 %v3494
        %3597 = vmatprep.subr.bf16.mxu0 0
        %3598 = vmatpush1.bf16.msra.mxu0 0
        %3599 = vmatprep.subr.bf16.mxu0 0
        %3600 = vmatpush1.bf16.msra.mxu0 0
        %3601 = vmatprep.subr.bf16.mxu0 0
        %3602 = vmatpush1.bf16.msra.mxu0 0
        %3603 = vmatprep.subr.bf16.mxu0 0
        %3604 = vmatpush1.bf16.msra.mxu0 0
        %3605 = vmatprep.subr.bf16.mxu0 0
        %3606 = vmatpush1.bf16.msra.mxu0 0
        %3607 = vmatprep.subr.bf16.mxu0 0
        %3608 = vmatpush1.bf16.msra.mxu0 0
        %3609 = vmatprep.subr.bf16.mxu0 0
        %3610 = vmatpush1.bf16.msra.mxu0 0
        %3611 = vmatprep.subr.bf16.mxu0 0
        %3612 = vmatpush1.bf16.msra.mxu0 0
        %3613 = vmatprep.mubr.bf16.mxu0 0
        %3614 = vmatmul.mubr.bf16.gmra.mrb[0].mxu0 %v3312
        %v3615 = vpop.f32.mrb[0].mxu0
        %v3616 = vadd.f32 %v3359, %v3615
        %v3617 = vpop.f32.mrb[0].mxu0
        %v3618 = vadd.f32 %v3363, %v3617
        %v3619 = vpop.f32.mrb[0].mxu0
        %v3620 = vadd.f32 %v3359, %v3619
        %v3621 = vpop.f32.mrb[0].mxu0
        %v3622 = vadd.f32 %v3363, %v3621
        %3623 = vmatprep.mubr.bf16.mxu0 0
        %3624 = vmatmul.mubr.bf16.gmra.mrb[0].mxu0 %v3313
        %v3625 = vpop.f32.mrb[0].mxu0
        %v3626 = vadd.f32 %v3359, %v3625
        %v3627 = vpop.f32.mrb[0].mxu0
        %v3628 = vadd.f32 %v3363, %v3627
        %v3629 = vpop.f32.mrb[0].mxu0
        %v3630 = vadd.f32 %v3359, %v3629
        %v3631 = vpop.f32.mrb[0].mxu0
        %v3632 = vadd.f32 %v3363, %v3631
        %3633 = vdwg.mxu0
        %v3634 = vmul.f32 %v3563, %v3563
        %v3635 = vmul.f32 %v3565, %v3565
        %v3636 = vmul.f32 %v3616, %v3616
        %v3637 = vmul.f32 %v3618, %v3618
        %v3638 = vmul.f32 %v3567, %v3567
        %v3639 = vmul.f32 %v3569, %v3569
        %v3640 = vmul.f32 %v3620, %v3620
        %v3641 = vmul.f32 %v3622, %v3622
        %v3642 = vmul.f32 %v3573, %v3573
        %v3643 = vmul.f32 %v3575, %v3575
        %v3644 = vmul.f32 %v3626, %v3626
        %v3645 = vmul.f32 %v3628, %v3628
        %v3646 = vmul.f32 %v3577, %v3577
        %v3647 = vmul.f32 %v3579, %v3579
        %v3648 = vmul.f32 %v3630, %v3630
        %v3649 = vmul.f32 %v3632, %v3632
        %v3650 = vmul.f32 %v3563, %v3634
        %v3651 = vmul.f32 %v3565, %v3635
        %v3652 = vmul.f32 %v3616, %v3636
        %v3653 = vmul.f32 %v3618, %v3637
        %v3654 = vmul.f32 %v3567, %v3638
        %v3655 = vmul.f32 %v3569, %v3639
        %v3656 = vmul.f32 %v3620, %v3640
        %v3657 = vmul.f32 %v3622, %v3641
        %v3658 = vmul.f32 %v3573, %v3642
        %v3659 = vmul.f32 %v3575, %v3643
        %v3660 = vmul.f32 %v3626, %v3644
        %v3661 = vmul.f32 %v3628, %v3645
        %v3662 = vmul.f32 %v3577, %v3646
        %v3663 = vmul.f32 %v3579, %v3647
        %v3664 = vmul.f32 %v3630, %v3648
        %v3665 = vmul.f32 %v3632, %v3649
        %v3666 = vmul.f32 %v3650, 0.044715
        %v3667 = vmul.f32 %v3651, 0.044715
        %v3668 = vmul.f32 %v3652, 0.044715
        %v3669 = vmul.f32 %v3653, 0.044715
        %v3670 = vmul.f32 %v3654, 0.044715
        %v3671 = vmul.f32 %v3655, 0.044715
        %v3672 = vmul.f32 %v3656, 0.044715
        %v3673 = vmul.f32 %v3657, 0.044715
        %v3674 = vmul.f32 %v3658, 0.044715
        %v3675 = vmul.f32 %v3659, 0.044715
        %v3676 = vmul.f32 %v3660, 0.044715
        %v3677 = vmul.f32 %v3661, 0.044715
        %v3678 = vmul.f32 %v3662, 0.044715
        %v3679 = vmul.f32 %v3663, 0.044715
        %v3680 = vmul.f32 %v3664, 0.044715
        %v3681 = vmul.f32 %v3665, 0.044715
        %v3682 = vadd.f32 %v3563, %v3666
        %v3683 = vadd.f32 %v3565, %v3667
        %v3684 = vadd.f32 %v3616, %v3668
        %v3685 = vadd.f32 %v3618, %v3669
        %v3686 = vadd.f32 %v3567, %v3670
        %v3687 = vadd.f32 %v3569, %v3671
        %v3688 = vadd.f32 %v3620, %v3672
        %v3689 = vadd.f32 %v3622, %v3673
        %v3690 = vadd.f32 %v3573, %v3674
        %v3691 = vadd.f32 %v3575, %v3675
        %v3692 = vadd.f32 %v3626, %v3676
        %v3693 = vadd.f32 %v3628, %v3677
        %v3694 = vadd.f32 %v3577, %v3678
        %v3695 = vadd.f32 %v3579, %v3679
        %v3696 = vadd.f32 %v3630, %v3680
        %v3697 = vadd.f32 %v3632, %v3681
        %v3698 = vmul.f32 %v3682, 0.7978846
        %v3699 = vmul.f32 %v3683, 0.7978846
        %v3700 = vmul.f32 %v3684, 0.7978846
        %v3701 = vmul.f32 %v3685, 0.7978846
        %v3702 = vmul.f32 %v3686, 0.7978846
        %v3703 = vmul.f32 %v3687, 0.7978846
        %v3704 = vmul.f32 %v3688, 0.7978846
        %v3705 = vmul.f32 %v3689, 0.7978846
        %v3706 = vmul.f32 %v3690, 0.7978846
        %v3707 = vmul.f32 %v3691, 0.7978846
        %v3708 = vmul.f32 %v3692, 0.7978846
        %v3709 = vmul.f32 %v3693, 0.7978846
        %v3710 = vmul.f32 %v3694, 0.7978846
        %v3711 = vmul.f32 %v3695, 0.7978846
        %v3712 = vmul.f32 %v3696, 0.7978846
        %v3713 = vmul.f32 %v3697, 0.7978846
        %v3714 = vtanh.pop %v3698
        %v3715 = vtanh.pop %v3699
        %v3716 = vtanh.pop %v3700
        %v3717 = vtanh.pop %v3701
        %v3718 = vtanh.pop %v3702
        %v3719 = vtanh.pop %v3703
        %v3720 = vtanh.pop %v3704
        %v3721 = vtanh.pop %v3705
        %v3722 = vtanh.pop %v3706
        %v3723 = vtanh.pop %v3707
        %v3724 = vtanh.pop %v3708
        %v3725 = vtanh.pop %v3709
        %v3726 = vtanh.pop %v3710
        %v3727 = vtanh.pop %v3711
        %v3728 = vtanh.pop %v3712
        %v3729 = vtanh.pop %v3713
        %v3730 = vadd.f32 %v3714, 1.0
        %v3731 = vadd.f32 %v3715, 1.0
        %v3732 = vadd.f32 %v3716, 1.0
        %v3733 = vadd.f32 %v3717, 1.0
        %v3734 = vadd.f32 %v3718, 1.0
        %v3735 = vadd.f32 %v3719, 1.0
        %v3736 = vadd.f32 %v3720, 1.0
        %v3737 = vadd.f32 %v3721, 1.0
        %v3738 = vadd.f32 %v3722, 1.0
        %v3739 = vadd.f32 %v3723, 1.0
        %v3740 = vadd.f32 %v3724, 1.0
        %v3741 = vadd.f32 %v3725, 1.0
        %v3742 = vadd.f32 %v3726, 1.0
        %v3743 = vadd.f32 %v3727, 1.0
        %v3744 = vadd.f32 %v3728, 1.0
        %v3745 = vadd.f32 %v3729, 1.0
        %v3746 = vmul.f32 %v3730, 0.5
        %v3747 = vmul.f32 %v3731, 0.5
        %v3748 = vmul.f32 %v3732, 0.5
        %v3749 = vmul.f32 %v3733, 0.5
        %v3750 = vmul.f32 %v3734, 0.5
        %v3751 = vmul.f32 %v3735, 0.5
        %v3752 = vmul.f32 %v3736, 0.5
        %v3753 = vmul.f32 %v3737, 0.5
        %v3754 = vmul.f32 %v3738, 0.5
        %v3755 = vmul.f32 %v3739, 0.5
        %v3756 = vmul.f32 %v3740, 0.5
        %v3757 = vmul.f32 %v3741, 0.5
        %v3758 = vmul.f32 %v3742, 0.5
        %v3759 = vmul.f32 %v3743, 0.5
        %v3760 = vmul.f32 %v3744, 0.5
        %v3761 = vmul.f32 %v3745, 0.5
        %v3762 = vmul.f32 %v3563, %v3746
        %v3763 = vmul.f32 %v3565, %v3747
        %v3764 = vmul.f32 %v3616, %v3748
        %v3765 = vmul.f32 %v3618, %v3749
        %v3766 = vmul.f32 %v3567, %v3750
        %v3767 = vmul.f32 %v3569, %v3751
        %v3768 = vmul.f32 %v3620, %v3752
        %v3769 = vmul.f32 %v3622, %v3753
        %v3770 = vmul.f32 %v3573, %v3754
        %v3771 = vmul.f32 %v3575, %v3755
        %v3772 = vmul.f32 %v3626, %v3756
        %v3773 = vmul.f32 %v3628, %v3757
        %v3774 = vmul.f32 %v3577, %v3758
        %v3775 = vmul.f32 %v3579, %v3759
        %v3776 = vmul.f32 %v3630, %v3760
        %v3777 = vmul.f32 %v3632, %v3761
        %v3778 = vpack.c.bf16 %v3766, %v3762
        %v3779 = vpack.c.bf16 %v3767, %v3763
        %v3780 = vpack.c.bf16 %v3768, %v3764
        %v3781 = vpack.c.bf16 %v3769, %v3765
        %v3782 = vpack.c.bf16 %v3774, %v3770
        %v3783 = vpack.c.bf16 %v3775, %v3771
        %v3784 = vpack.c.bf16 %v3776, %v3772
        %v3785 = vpack.c.bf16 %v3777, %v3773
        %v3786 = vld [vmem:[%s626] sm:$0xf]
        %v3787 = vld [vmem:[%s626 + $0x4] sm:$0xf]
        %v3788 = vld [vmem:[%s626 + $0x8] sm:$0xf]
        %v3789 = vld [vmem:[%s626 + $0xc] sm:$0xf]
        %v3790 = vld [vmem:[%s626 + $0x10] sm:$0xf]
        %v3791 = vld [vmem:[%s626 + $0x14] sm:$0xf]
        %v3792 = vld [vmem:[%s626 + $0x18] sm:$0xf]
        %v3793 = vld [vmem:[%s626 + $0x1c] sm:$0xf]
        %v3794 = vld [vmem:[%s626 + $0x20] sm:$0xf]
        %v3795 = vld [vmem:[%s626 + $0x24] sm:$0xf]
        %v3796 = vld [vmem:[%s626 + $0x28] sm:$0xf]
        %v3797 = vld [vmem:[%s626 + $0x2c] sm:$0xf]
        %v3798 = vld [vmem:[%s626 + $0x30] sm:$0xf]
        %v3799 = vld [vmem:[%s626 + $0x34] sm:$0xf]
        %v3800 = vld [vmem:[%s626 + $0x38] sm:$0xf]
        %v3801 = vld [vmem:[%s626 + $0x3c] sm:$0xf]
        %v3802 = vld [vmem:[%s626 + $0x40] sm:$0xf]
        %v3803 = vld [vmem:[%s626 + $0x44] sm:$0xf]
        %v3804 = vld [vmem:[%s626 + $0x48] sm:$0xf]
        %v3805 = vld [vmem:[%s626 + $0x4c] sm:$0xf]
        %v3806 = vld [vmem:[%s626 + $0x50] sm:$0xf]
        %v3807 = vld [vmem:[%s626 + $0x54] sm:$0xf]
        %v3808 = vld [vmem:[%s626 + $0x58] sm:$0xf]
        %v3809 = vld [vmem:[%s626 + $0x5c] sm:$0xf]
        %v3810 = vld [vmem:[%s626 + $0x60] sm:$0xf]
        %v3811 = vld [vmem:[%s626 + $0x64] sm:$0xf]
        %v3812 = vld [vmem:[%s626 + $0x68] sm:$0xf]
        %v3813 = vld [vmem:[%s626 + $0x6c] sm:$0xf]
        %v3814 = vld [vmem:[%s626 + $0x70] sm:$0xf]
        %v3815 = vld [vmem:[%s626 + $0x74] sm:$0xf]
        %v3816 = vld [vmem:[%s626 + $0x78] sm:$0xf]
        %v3817 = vld [vmem:[%s626 + $0x7c] sm:$0xf]
        %v3818 = vld [vmem:[%s626 + $0x80] sm:$0xf]
        %v3819 = vld [vmem:[%s626 + $0x84] sm:$0xf]
        %v3820 = vld [vmem:[%s626 + $0x88] sm:$0xf]
        %v3821 = vld [vmem:[%s626 + $0x8c] sm:$0xf]
        %v3822 = vld [vmem:[%s626 + $0x90] sm:$0xf]
        %v3823 = vld [vmem:[%s626 + $0x94] sm:$0xf]
        %v3824 = vld [vmem:[%s626 + $0x98] sm:$0xf]
        %v3825 = vld [vmem:[%s626 + $0x9c] sm:$0xf]
        %v3826 = vld [vmem:[%s626 + $0xa0] sm:$0xf]
        %v3827 = vld [vmem:[%s626 + $0xa4] sm:$0xf]
        %v3828 = vld [vmem:[%s626 + $0xa8] sm:$0xf]
        %v3829 = vld [vmem:[%s626 + $0xac] sm:$0xf]
        %v3830 = vld [vmem:[%s626 + $0xb0] sm:$0xf]
        %v3831 = vld [vmem:[%s626 + $0xb4] sm:$0xf]
        %v3832 = vld [vmem:[%s626 + $0xb8] sm:$0xf]
        %v3833 = vld [vmem:[%s626 + $0xbc] sm:$0xf]
        %v3834 = vld [vmem:[%s626 + $0xc0] sm:$0xf]
        %v3835 = vld [vmem:[%s626 + $0xc4] sm:$0xf]
        %v3836 = vld [vmem:[%s626 + $0xc8] sm:$0xf]
        %v3837 = vld [vmem:[%s626 + $0xcc] sm:$0xf]
        %v3838 = vld [vmem:[%s626 + $0xd0] sm:$0xf]
        %v3839 = vld [vmem:[%s626 + $0xd4] sm:$0xf]
        %v3840 = vld [vmem:[%s626 + $0xd8] sm:$0xf]
        %v3841 = vld [vmem:[%s626 + $0xdc] sm:$0xf]
        %v3842 = vld [vmem:[%s626 + $0xe0] sm:$0xf]
        %v3843 = vld [vmem:[%s626 + $0xe4] sm:$0xf]
        %v3844 = vld [vmem:[%s626 + $0xe8] sm:$0xf]
        %v3845 = vld [vmem:[%s626 + $0xec] sm:$0xf]
        %v3846 = vld [vmem:[%s626 + $0xf0] sm:$0xf]
        %v3847 = vld [vmem:[%s626 + $0xf4] sm:$0xf]
        %v3848 = vld [vmem:[%s626 + $0xf8] sm:$0xf]
        %v3849 = vld [vmem:[%s626 + $0xfc] sm:$0xf]
        %v3850 = vld [vmem:[%s735] sm:$0x1]
        %v3852 = vlaneseq
        %v3853 = vshrl.u32 %v3852, 7
        %v3854 = vsub.s32 0, %v3853
        %v3855 = vrot.slane %v3850, %v3854
        %v3921 = vunpack.c.l.b16 %v3786
        %v3922 = vunpack.c.l.b16 %v3787
        %v3923 = vunpack.c.l.b16 %v3788
        %v3924 = vunpack.c.l.b16 %v3789
        %v3925 = vunpack.c.l.b16 %v3790
        %v3926 = vunpack.c.l.b16 %v3791
        %v3927 = vunpack.c.l.b16 %v3792
        %v3928 = vunpack.c.l.b16 %v3793
        %v3929 = vunpack.c.l.b16 %v3794
        %v3930 = vunpack.c.l.b16 %v3795
        %v3931 = vunpack.c.l.b16 %v3796
        %v3932 = vunpack.c.l.b16 %v3797
        %v3933 = vunpack.c.l.b16 %v3798
        %v3934 = vunpack.c.l.b16 %v3799
        %v3935 = vunpack.c.l.b16 %v3800
        %v3936 = vunpack.c.l.b16 %v3801
        %v3937 = vunpack.c.l.b16 %v3802
        %v3938 = vunpack.c.l.b16 %v3803
        %v3939 = vunpack.c.l.b16 %v3804
        %v3940 = vunpack.c.l.b16 %v3805
        %v3941 = vunpack.c.l.b16 %v3806
        %v3942 = vunpack.c.l.b16 %v3807
        %v3943 = vunpack.c.l.b16 %v3808
        %v3944 = vunpack.c.l.b16 %v3809
        %v3945 = vunpack.c.l.b16 %v3810
        %v3946 = vunpack.c.l.b16 %v3811
        %v3947 = vunpack.c.l.b16 %v3812
        %v3948 = vunpack.c.l.b16 %v3813
        %v3949 = vunpack.c.l.b16 %v3814
        %v3950 = vunpack.c.l.b16 %v3815
        %v3951 = vunpack.c.l.b16 %v3816
        %v3952 = vunpack.c.l.b16 %v3817
        %v3953 = vunpack.c.l.b16 %v3818
        %v3954 = vunpack.c.l.b16 %v3819
        %v3955 = vunpack.c.l.b16 %v3820
        %v3956 = vunpack.c.l.b16 %v3821
        %v3957 = vunpack.c.l.b16 %v3822
        %v3958 = vunpack.c.l.b16 %v3823
        %v3959 = vunpack.c.l.b16 %v3824
        %v3960 = vunpack.c.l.b16 %v3825
        %v3961 = vunpack.c.l.b16 %v3826
        %v3962 = vunpack.c.l.b16 %v3827
        %v3963 = vunpack.c.l.b16 %v3828
        %v3964 = vunpack.c.l.b16 %v3829
        %v3965 = vunpack.c.l.b16 %v3830
        %v3966 = vunpack.c.l.b16 %v3831
        %v3967 = vunpack.c.l.b16 %v3832
        %v3968 = vunpack.c.l.b16 %v3833
        %v3969 = vunpack.c.l.b16 %v3834
        %v3970 = vunpack.c.l.b16 %v3835
        %v3971 = vunpack.c.l.b16 %v3836
        %v3972 = vunpack.c.l.b16 %v3837
        %v3973 = vunpack.c.l.b16 %v3838
        %v3974 = vunpack.c.l.b16 %v3839
        %v3975 = vunpack.c.l.b16 %v3840
        %v3976 = vunpack.c.l.b16 %v3841
        %v3977 = vunpack.c.l.b16 %v3842
        %v3978 = vunpack.c.l.b16 %v3843
        %v3979 = vunpack.c.l.b16 %v3844
        %v3980 = vunpack.c.l.b16 %v3845
        %v3981 = vunpack.c.l.b16 %v3846
        %v3982 = vunpack.c.l.b16 %v3847
        %v3983 = vunpack.c.l.b16 %v3848
        %v3984 = vunpack.c.l.b16 %v3849
        %v3985 = vpack.c.b16 %v3922, %v3921
        %v3986 = vpack.c.b16 %v3924, %v3923
        %v3987 = vpack.c.b16 %v3926, %v3925
        %v3988 = vpack.c.b16 %v3928, %v3927
        %v3989 = vpack.c.b16 %v3930, %v3929
        %v3990 = vpack.c.b16 %v3932, %v3931
        %v3991 = vpack.c.b16 %v3934, %v3933
        %v3992 = vpack.c.b16 %v3936, %v3935
        %v3993 = vpack.c.b16 %v3938, %v3937
        %v3994 = vpack.c.b16 %v3940, %v3939
        %v3995 = vpack.c.b16 %v3942, %v3941
        %v3996 = vpack.c.b16 %v3944, %v3943
        %v3997 = vpack.c.b16 %v3946, %v3945
        %v3998 = vpack.c.b16 %v3948, %v3947
        %v3999 = vpack.c.b16 %v3950, %v3949
        %v4000 = vpack.c.b16 %v3952, %v3951
        %v4001 = vpack.c.b16 %v3954, %v3953
        %v4002 = vpack.c.b16 %v3956, %v3955
        %v4003 = vpack.c.b16 %v3958, %v3957
        %v4004 = vpack.c.b16 %v3960, %v3959
        %v4005 = vpack.c.b16 %v3962, %v3961
        %v4006 = vpack.c.b16 %v3964, %v3963
        %v4007 = vpack.c.b16 %v3966, %v3965
        %v4008 = vpack.c.b16 %v3968, %v3967
        %v4009 = vpack.c.b16 %v3970, %v3969
        %v4010 = vpack.c.b16 %v3972, %v3971
        %v4011 = vpack.c.b16 %v3974, %v3973
        %v4012 = vpack.c.b16 %v3976, %v3975
        %v4013 = vpack.c.b16 %v3978, %v3977
        %v4014 = vpack.c.b16 %v3980, %v3979
        %v4015 = vpack.c.b16 %v3982, %v3981
        %v4016 = vpack.c.b16 %v3984, %v3983
        %4049 = vmatprep.subr.bf16.mxu0 0
        %4050 = vmatpush1.bf16.msra.mxu0 %v3985
        %4051 = vmatprep.subr.bf16.mxu0 0
        %4052 = vmatpush1.bf16.msra.mxu0 %v3986
        %4053 = vmatprep.subr.bf16.mxu0 0
        %4054 = vmatpush1.bf16.msra.mxu0 %v3987
        %4055 = vmatprep.subr.bf16.mxu0 0
        %4056 = vmatpush1.bf16.msra.mxu0 %v3988
        %4057 = vmatprep.subr.bf16.mxu0 0
        %4058 = vmatpush1.bf16.msra.mxu0 %v3989
        %4059 = vmatprep.subr.bf16.mxu0 0
        %4060 = vmatpush1.bf16.msra.mxu0 %v3990
        %4061 = vmatprep.subr.bf16.mxu0 0
        %4062 = vmatpush1.bf16.msra.mxu0 %v3991
        %4063 = vmatprep.subr.bf16.mxu0 0
        %4064 = vmatpush1.bf16.msra.mxu0 %v3992
        %4065 = vmatprep.subr.bf16.mxu0 0
        %4066 = vmatpush1.bf16.msra.mxu0 %v3993
        %4067 = vmatprep.subr.bf16.mxu0 0
        %4068 = vmatpush1.bf16.msra.mxu0 %v3994
        %4069 = vmatprep.subr.bf16.mxu0 0
        %4070 = vmatpush1.bf16.msra.mxu0 %v3995
        %4071 = vmatprep.subr.bf16.mxu0 0
        %4072 = vmatpush1.bf16.msra.mxu0 %v3996
        %4073 = vmatprep.subr.bf16.mxu0 0
        %4074 = vmatpush1.bf16.msra.mxu0 %v3997
        %4075 = vmatprep.subr.bf16.mxu0 0
        %4076 = vmatpush1.bf16.msra.mxu0 %v3998
        %4077 = vmatprep.subr.bf16.mxu0 0
        %4078 = vmatpush1.bf16.msra.mxu0 %v3999
        %4079 = vmatprep.subr.bf16.mxu0 0
        %4080 = vmatpush1.bf16.msra.mxu0 %v4000
        %4081 = vmatprep.mubr.bf16.mxu0 %v3779
        %4082 = vmatmul.mubr.bf16.gmra.mrb[0].mxu0 %v3778
        %v4083 = vpop.f32.mrb[0].mxu0
        %v4084 = vadd.f32 %v3855, %v4083
        %v4085 = vpop.f32.mrb[0].mxu0
        %v4086 = vpop.f32.mrb[0].mxu0
        %v4087 = vadd.f32 %v3855, %v4086
        %v4088 = vpop.f32.mrb[0].mxu0
        %4089 = vmatprep.mubr.bf16.mxu0 %v3783
        %4090 = vmatmul.mubr.bf16.gmra.mrb[0].mxu0 %v3782
        %v4091 = vpop.f32.mrb[0].mxu0
        %v4092 = vadd.f32 %v3855, %v4091
        %v4093 = vpop.f32.mrb[0].mxu0
        %v4094 = vpop.f32.mrb[0].mxu0
        %v4095 = vadd.f32 %v3855, %v4094
        %v4096 = vpop.f32.mrb[0].mxu0
        %4097 = vdwg.mxu0
        %4098 = vmatprep.subr.bf16.mxu0 0
        %4099 = vmatpush1.bf16.msra.mxu0 %v4001
        %4100 = vmatprep.subr.bf16.mxu0 0
        %4101 = vmatpush1.bf16.msra.mxu0 %v4002
        %4102 = vmatprep.subr.bf16.mxu0 0
        %4103 = vmatpush1.bf16.msra.mxu0 %v4003
        %4104 = vmatprep.subr.bf16.mxu0 0
        %4105 = vmatpush1.bf16.msra.mxu0 %v4004
        %4106 = vmatprep.subr.bf16.mxu0 0
        %4107 = vmatpush1.bf16.msra.mxu0 %v4005
        %4108 = vmatprep.subr.bf16.mxu0 0
        %4109 = vmatpush1.bf16.msra.mxu0 %v4006
        %4110 = vmatprep.subr.bf16.mxu0 0
        %4111 = vmatpush1.bf16.msra.mxu0 %v4007
        %4112 = vmatprep.subr.bf16.mxu0 0
        %4113 = vmatpush1.bf16.msra.mxu0 %v4008
        %4114 = vmatprep.subr.bf16.mxu0 0
        %4115 = vmatpush1.bf16.msra.mxu0 %v4009
        %4116 = vmatprep.subr.bf16.mxu0 0
        %4117 = vmatpush1.bf16.msra.mxu0 %v4010
        %4118 = vmatprep.subr.bf16.mxu0 0
        %4119 = vmatpush1.bf16.msra.mxu0 %v4011
        %4120 = vmatprep.subr.bf16.mxu0 0
        %4121 = vmatpush1.bf16.msra.mxu0 %v4012
        %4122 = vmatprep.subr.bf16.mxu0 0
        %4123 = vmatpush1.bf16.msra.mxu0 %v4013
        %4124 = vmatprep.subr.bf16.mxu0 0
        %4125 = vmatpush1.bf16.msra.mxu0 %v4014
        %4126 = vmatprep.subr.bf16.mxu0 0
        %4127 = vmatpush1.bf16.msra.mxu0 %v4015
        %4128 = vmatprep.subr.bf16.mxu0 0
        %4129 = vmatpush1.bf16.msra.mxu0 %v4016
        %4130 = vmatprep.mubr.bf16.mxu0 %v3781
        %4131 = vmatmul.mubr.bf16.gmra.mrb[0].mxu0 %v3780
        %v4132 = vpop.f32.mrb[0].mxu0
        %v4133 = vadd.f32 %v4084, %v4132
        %v4134 = vpop.f32.mrb[0].mxu0
        %v4135 = vpop.f32.mrb[0].mxu0
        %v4136 = vadd.f32 %v4087, %v4135
        %v4137 = vpop.f32.mrb[0].mxu0
        %4138 = vmatprep.mubr.bf16.mxu0 %v3785
        %4139 = vmatmul.mubr.bf16.gmra.mrb[0].mxu0 %v3784
        %v4140 = vpop.f32.mrb[0].mxu0
        %v4141 = vadd.f32 %v4092, %v4140
        %v4142 = vpop.f32.mrb[0].mxu0
        %v4143 = vpop.f32.mrb[0].mxu0
        %v4144 = vadd.f32 %v4095, %v4143
        %v4145 = vpop.f32.mrb[0].mxu0
        %4146 = vdwg.mxu0
        %v4147 = vadd.f32 %v4133, %v3308
        %v4148 = vadd.f32 %v4136, %v3309
        %v4149 = vadd.f32 %v4141, %v3310
        %v4150 = vadd.f32 %v4144, %v3311
        %v4151 = vld [vmem:[%s738] sm:$0x1]
        %v4152 = vld [vmem:[%s741] sm:$0x1]
        %4153 = vadd.xlane.f32.xlu0 %v4147
        %v4154 = vpop.xlane.xlu0 %4153
        %4155 = vadd.xlane.f32.xlu0 %v4148
        %v4156 = vpop.xlane.xlu0 %4155
        %4157 = vadd.xlane.f32.xlu0 %v4149
        %v4158 = vpop.xlane.xlu0 %4157
        %4159 = vadd.xlane.f32.xlu0 %v4150
        %v4160 = vpop.xlane.xlu0 %4159
        %v4161 = vmul.f32 %v4154, %v3255
        %v4162 = vmul.f32 %v4156, %v3255
        %v4163 = vmul.f32 %v4158, %v3255
        %v4164 = vmul.f32 %v4160, %v3255
        %v4165 = vsub.f32 %v4147, %v4161
        %v4166 = vsub.f32 %v4148, %v4162
        %v4167 = vsub.f32 %v4149, %v4163
        %v4168 = vsub.f32 %v4150, %v4164
        %v4169 = vmul.f32 %v4165, %v4165
        %v4170 = vmul.f32 %v4166, %v4166
        %v4171 = vmul.f32 %v4167, %v4167
        %v4172 = vmul.f32 %v4168, %v4168
        %4173 = vadd.xlane.f32.xlu0 %v4169
        %v4174 = vpop.xlane.xlu0 %4173
        %4175 = vadd.xlane.f32.xlu0 %v4170
        %v4176 = vpop.xlane.xlu0 %4175
        %4177 = vadd.xlane.f32.xlu0 %v4171
        %v4178 = vpop.xlane.xlu0 %4177
        %4179 = vadd.xlane.f32.xlu0 %v4172
        %v4180 = vpop.xlane.xlu0 %4179
        %v4181 = vmul.f32 %v4174, %v3255
        %v4182 = vmul.f32 %v4176, %v3255
        %v4183 = vmul.f32 %v4178, %v3255
        %v4184 = vmul.f32 %v4180, %v3255
        %v4185 = vadd.f32 %v4181, 1e-12
        %v4186 = vadd.f32 %v4182, 1e-12
        %v4187 = vadd.f32 %v4183, 1e-12
        %v4188 = vadd.f32 %v4184, 1e-12
        %v4189 = vrsqrt.pop %v4185
        %v4190 = vrsqrt.pop %v4186
        %v4191 = vrsqrt.pop %v4187
        %v4192 = vrsqrt.pop %v4188
        %v4193 = vmul.f32 %v4165, %v4189
        %v4194 = vmul.f32 %v4166, %v4190
        %v4195 = vmul.f32 %v4167, %v4191
        %v4196 = vmul.f32 %v4168, %v4192
        %v4198 = vlaneseq
        %v4199 = vshrl.u32 %v4198, 7
        %v4200 = vsub.s32 0, %v4199
        %v4201 = vrot.slane %v4151, %v4200
        %v4203 = vmul.f32 %v4193, %v4201
        %v4204 = vmul.f32 %v4194, %v4201
        %v4205 = vmul.f32 %v4195, %v4201
        %v4206 = vmul.f32 %v4196, %v4201
        %v4208 = vlaneseq
        %v4209 = vshrl.u32 %v4208, 7
        %v4210 = vsub.s32 0, %v4209
        %v4211 = vrot.slane %v4152, %v4210
        %v4213 = vadd.f32 %v4203, %v4211
        %v4214 = vadd.f32 %v4204, %v4211
        %v4215 = vadd.f32 %v4205, %v4211
        %v4216 = vadd.f32 %v4206, %v4211
        %4217 = vst [vmem:[%s16] sm:$0xff] %v4213
        %4218 = vst [vmem:[%s16 + $0x8] sm:$0xff] %v4214
        %4219 = vst [vmem:[%s16 + $0x10] sm:$0xff] %v4215
        %4220 = vst [vmem:[%s16 + $0x18] sm:$0xff] %v4216
        // Predicated region
        $region101: #{predict_sentiment.2} parent=83 // pred_check
          %p4221 = pneg %p442
        $region102: #{predict_sentiment.2} parent=83 // pred_check_branch
          %4223 = sbr.rel (%p4221) target = $region104
        $region103: #{predict_sentiment.2} parent=83 // pred_region
          _
        $region104: #{predict_sentiment.2} parent=83 // pred_fallthru
          _
        // Predicated region
        $region105: #{predict_sentiment.2} parent=83 // pred_check
          %p4224 = pneg %p442
        $region106: #{predict_sentiment.2} parent=83 // pred_check_branch
          %4226 = sbr.rel (%p4224) target = $region108
        $region107: #{predict_sentiment.2} parent=83 // pred_region
          _
        $region108: #{predict_sentiment.2} parent=83 // pred_fallthru
          _
      $region84: #{predict_sentiment.2} parent=5 // pred_fallthru
        _
      %p4227 = scmp.le.s32.totalorder 2, %s28
      // Predicated region
      $region109: #{predict_sentiment.2} parent=5 // pred_check
        %p4228 = pneg %p4227
      $region110: #{predict_sentiment.2} parent=5 // pred_check_branch
        %4230 = sbr.rel (%p4228) target = $region112
      $region111: #{predict_sentiment.2} parent=5 // pred_region
        %s4231 = ssub.s32 %s28, 2
      $region112: #{predict_sentiment.2} parent=5 // pred_fallthru
        _
    $region6: #{predict_sentiment.2} parent=1 // loop_footer
      %s32 = sadd.s32 1, %s28
    $region7: #{predict_sentiment.2} parent=1 // loop_footer_branch
      %27 = sbr.rel target = $region3
    $region8: #{predict_sentiment.2} parent=1 // loop_exit
      _
    %4232 = vsyncpa [#allocation3], 1
    %s4233 = scalar_lea.sflag [#allocation3], 1
    %4234 = vsyncpa %s4233, 1
    %4235 = vsyncpa [#allocation5], 1
    %s4236 = scalar_lea.sflag [#allocation5], 1
    %4237 = vsyncpa %s4236, 1

</llo_original>
